<compile_context>
chip_gen: v6e
topology: v6e:2x2x1
jax: 0.10.0
libtpu: 0.0.40
codegen_flags: <defaults>
</compile_context>

<pallas_src>
import functools

import numpy as np
import jax
import jax.numpy as jnp
from jax.experimental import pallas as pl
from jax.experimental.pallas import tpu as pltpu


# ---------------------------------------------------------------------------
# The fused XBlock kernel (one batch sample per grid step)
# ---------------------------------------------------------------------------
def _xblock_kernel(x_ref, w1_ref, s1_ref, b1_ref,
                   w2_ref, s2_ref, b2_ref,
                   wse1_ref, bse1_ref, wse2_ref, bse2_ref,
                   w3_ref, s3_ref, b3_ref,
                   wsc_ref, ssc_ref, bsc_ref,
                   o_ref, ypad_ref, *,
                   H, W, Ho, Wo, stride, groups, gw, has_se, has_proj):
    s = stride
    hs, ws = H // s, W // s
    P = Ho * Wo
    cmid = w1_ref.shape[1]
    f32 = jnp.float32
    bf16 = jnp.bfloat16

    # x block is (1, H*W, Cin) bf16 in *phase-major* row order:
    # row ((pr*s + pc) * hs + a) * ws + b  <->  original pixel (a*s + pr, b*s + pc).
    x = x_ref[0]                                              # (H*W, Cin)

    # ---- conv1 (1x1) + folded BN + ReLU: bf16 MXU operands, f32 epilogue -----
    y = jnp.dot(x, w1_ref[...], preferred_element_type=f32)   # (H*W, Cmid) f32
    y = jnp.maximum(y * s1_ref[...] + b1_ref[...], 0.0)

    # ---- scatter conv1 output into a zero-padded, phase-split VMEM scratch ---
    # ypad_ref[rh*s + rw, q_h, q_w, :] holds padded pixel (s*q_h + rh, s*q_w + rw),
    # so every 3x3 tap at stride s becomes a *contiguous static* slice (no strided
    # loads, no host im2col).
    ypad_ref[...] = jnp.zeros(ypad_ref.shape, ypad_ref.dtype)
    for pr in range(s):
        for pc in range(s):
            blk = y[(pr * s + pc) * hs * ws:(pr * s + pc + 1) * hs * ws, :]
            blk = blk.reshape(hs, ws, cmid)
            ph = ((pr + 1) % s) * s + (pc + 1) % s
            qh0, qw0 = (pr + 1) // s, (pc + 1) // s
            ypad_ref[ph, qh0:qh0 + hs, qw0:qw0 + ws, :] = blk

    # ---- conv2: grouped 3x3 / stride as per-group 9-tap MXU accumulations ----
    taps = []
    for kh in range(3):
        for kw in range(3):
            tv = ypad_ref[(kh % s) * s + (kw % s),
                          kh // s:kh // s + Ho,
                          kw // s:kw // s + Wo, :]            # (Ho, Wo, Cmid) f32
            taps.append(tv.reshape(P, cmid).astype(bf16))

    x1_groups = []
    for g in range(groups):
        lo, hi = g * gw, (g + 1) * gw
        acc = None
        for t in range(9):
            d = jnp.dot(taps[t][:, lo:hi], w2_ref[g, t],
                        preferred_element_type=f32)           # (P, gw)
            acc = d if acc is None else acc + d
        x1g = jnp.maximum(acc * s2_ref[:, lo:hi] + b2_ref[:, lo:hi], 0.0)
        x1_groups.append(x1g)                                 # (P, gw) f32

    # ---- SE gate: fused global-avg-pool + 2 FCs + sigmoid (no extra HBM pass) -
    gate = None
    if has_se:
        h = bse1_ref[...]                                     # (1, Cse) f32
        for g in range(groups):
            pooled_g = jnp.mean(x1_groups[g], axis=0, keepdims=True)
            h = h + jnp.dot(pooled_g.astype(bf16), wse1_ref[g],
                            preferred_element_type=f32)
        h = jnp.maximum(h, 0.0)
        z = jnp.dot(h.astype(bf16), wse2_ref[...], preferred_element_type=f32)
        z = z + bse2_ref[...]
        gate = 1.0 / (1.0 + jnp.exp(-z))                      # (1, Cmid) f32

    # ---- conv3 (1x1) + BN + ReLU, consuming SE-scaled per-group pieces -------
    y3 = None
    for g in range(groups):
        lo, hi = g * gw, (g + 1) * gw
        xg = x1_groups[g]
        if has_se:
            xg = xg * gate[:, lo:hi]
        d = jnp.dot(xg.astype(bf16), w3_ref[g], preferred_element_type=f32)
        y3 = d if y3 is None else y3 + d
    # NOTE: this ReLU-before-residual matches the provided PyTorch module
    # (nn.ReLU inside the conv3 Sequential), then another ReLU after the add.
    y3 = jnp.maximum(y3 * s3_ref[...] + b3_ref[...], 0.0)     # (P, Cout) f32

    # ---- shortcut (strided 1x1 + BN or identity), residual add, final ReLU ---
    # The strided rows x[::s, ::s] are exactly phase (0, 0) = the first P rows
    # of the phase-major x block, so no separate strided copy of x is needed.
    if has_proj:
        r = jnp.dot(x[0:P, :], wsc_ref[...], preferred_element_type=f32)
        r = r * ssc_ref[...] + bsc_ref[...]
    else:
        r = x[0:P, :].astype(f32)
    o_ref[0] = jnp.maximum(y3 + r, 0.0).astype(o_ref.dtype)


# ---------------------------------------------------------------------------
# Wrapper: layout prep + pallas_call
# ---------------------------------------------------------------------------
def xblock_forward(x_nhwc, p, *, stride, in_ch, out_ch, bottleneck_ratio,
                   group_width, se_ratio):
    n, h, w, cin = x_nhwc.shape
    inner = out_ch // bottleneck_ratio
    groups = inner // group_width
    gw = group_width
    assert groups * gw == inner
    assert h % stride == 0 and w % stride == 0
    hs, ws = h // stride, w // stride
    ho, wo = (h - 1) // stride + 1, (w - 1) // stride + 1     # == hs, ws here
    P = ho * wo
    has_se = se_ratio is not None
    has_proj = (stride != 1) or (in_ch != out_ch)
    bf16 = jnp.bfloat16
    f32 = jnp.float32

    # Single host-side transpose of the (smallest) input tensor into phase-major
    # order; replaces both the 9x im2col blow-up and the strided shortcut copy.
    x_ph = x_nhwc.reshape(n, hs, stride, ws, stride, cin)
    x_ph = x_ph.transpose(0, 2, 4, 1, 3, 5).reshape(n, h * w, cin).astype(bf16)

    w1 = p["w1"].astype(bf16)                                  # (Cin, Cmid)
    w2 = p["w2_gt"].astype(bf16)                               # (G, 9, gw, gw)
    w3 = p["w3"].reshape(groups, gw, out_ch).astype(bf16)      # (G, gw, Cout)
    s1, b1 = p["s1"].reshape(1, inner), p["b1"].reshape(1, inner)
    s2, b2 = p["s2"].reshape(1, inner), p["b2"].reshape(1, inner)
    s3, b3 = p["s3"].reshape(1, out_ch), p["b3"].reshape(1, out_ch)

    if has_se:
        cse = p["w_se1"].shape[1]
        wse1 = p["w_se1"].reshape(groups, gw, cse).astype(bf16)
        bse1 = p["b_se1"].reshape(1, cse).astype(f32)
        wse2 = p["w_se2"].astype(bf16)
        bse2 = p["b_se2"].reshape(1, inner).astype(f32)
    else:
        cse = 8
        wse1 = jnp.zeros((groups, gw, cse), bf16)
        bse1 = jnp.zeros((1, cse), f32)
        wse2 = jnp.zeros((cse, inner), bf16)
        bse2 = jnp.zeros((1, inner), f32)

    if has_proj:
        wsc = p["wsc"].astype(bf16)
        ssc, bsc = p["ssc"].reshape(1, out_ch), p["bsc"].reshape(1, out_ch)
    else:
        wsc = jnp.zeros((cin, out_ch), bf16)
        ssc = jnp.ones((1, out_ch), f32)
        bsc = jnp.zeros((1, out_ch), f32)

    # padded, phase-split scratch extents
    qh = max(ho - 1 + 2 // stride, hs) + 1
    qw = max(wo - 1 + 2 // stride, ws) + 1

    kernel = functools.partial(
        _xblock_kernel, H=h, W=w, Ho=ho, Wo=wo, stride=stride,
        groups=groups, gw=gw, has_se=has_se, has_proj=has_proj)

    def _const(arr):
        nd = arr.ndim
        return pl.BlockSpec(arr.shape, lambda i, _nd=nd: (0,) * _nd)

    operands = (x_ph, w1, s1, b1, w2, s2, b2,
                wse1, bse1, wse2, bse2, w3, s3, b3, wsc, ssc, bsc)
    in_specs = [pl.BlockSpec((1, h * w, cin), lambda i: (i, 0, 0))]
    in_specs += [_const(a) for a in operands[1:]]

    flops = 2 * n * (h * w * cin * inner + P * 9 * gw * inner
                     + P * inner * out_ch + P * cin * out_ch
                     + 2 * inner * cse)
    bytes_accessed = int(sum(a.size * a.dtype.itemsize for a in operands)
                         + n * P * out_ch * 4)

    out = pl.pallas_call(
        kernel,
        out_shape=jax.ShapeDtypeStruct((n, P, out_ch), jnp.float32),
        grid=(n,),
        in_specs=in_specs,
        out_specs=pl.BlockSpec((1, P, out_ch), lambda i: (i, 0, 0)),
        scratch_shapes=[pltpu.VMEM((stride * stride, qh, qw, inner), jnp.float32)],
        compiler_params=pltpu.CompilerParams(
            dimension_semantics=("parallel",),
            vmem_limit_bytes=32 * 1024 * 1024),
        cost_estimate=pl.CostEstimate(
            flops=int(flops), transcendentals=int(n * inner),
            bytes_accessed=bytes_accessed),
    )(*operands)
    return out.reshape(n, ho, wo, out_ch)


# ---------------------------------------------------------------------------
# Parameter construction (random, BN folded for eval mode)
# ---------------------------------------------------------------------------
def make_xblock_params(key, in_ch, out_ch, stride, bottleneck_ratio, group_width, se_ratio):
    inner = out_ch // bottleneck_ratio
    groups = inner // group_width
    gw = group_width
    keys = iter(jax.random.split(key, 32))

    def bn_fold(c):
        gamma = 1.0 + 0.1 * jax.random.normal(next(keys), (c,), jnp.float32)
        beta = 0.1 * jax.random.normal(next(keys), (c,), jnp.float32)
        mean = 0.1 * jax.random.normal(next(keys), (c,), jnp.float32)
        var = 0.5 + jax.random.uniform(next(keys), (c,), jnp.float32)
        scale = gamma / jnp.sqrt(var + 1e-5)
        return scale, beta - mean * scale

    p = {}
    p["w1"] = 0.1 * jax.random.normal(next(keys), (in_ch, inner), jnp.float32)
    p["s1"], p["b1"] = bn_fold(inner)

    w2 = 0.1 * jax.random.normal(next(keys), (inner, gw, 3, 3), jnp.float32)
    p["w2_torch"] = w2                                           # (O, I/g, 3, 3)
    # (g*gw+j, i, kh, kw) -> (g, kh, kw, i, j) -> (g, 9, gw_in, gw_out)
    p["w2_gt"] = jnp.transpose(w2.reshape(groups, gw, gw, 3, 3),
                               (0, 3, 4, 2, 1)).reshape(groups, 9, gw, gw)
    p["s2"], p["b2"] = bn_fold(inner)

    if se_ratio is not None:
        cse = int(inner * se_ratio)
        p["w_se1"] = 0.1 * jax.random.normal(next(keys), (inner, cse), jnp.float32)
        p["b_se1"] = 0.1 * jax.random.normal(next(keys), (cse,), jnp.float32)
        p["w_se2"] = 0.1 * jax.random.normal(next(keys), (cse, inner), jnp.float32)
        p["b_se2"] = 0.1 * jax.random.normal(next(keys), (inner,), jnp.float32)

    p["w3"] = 0.1 * jax.random.normal(next(keys), (inner, out_ch), jnp.float32)
    p["s3"], p["b3"] = bn_fold(out_ch)

    if stride != 1 or in_ch != out_ch:
        p["wsc"] = 0.1 * jax.random.normal(next(keys), (in_ch, out_ch), jnp.float32)
        p["ssc"], p["bsc"] = bn_fold(out_ch)
    return p, inner, groups


# ---------------------------------------------------------------------------
# Pure-JAX reference (same bf16-operand / f32-accumulate numerics as the kernel)
# ---------------------------------------------------------------------------
def ref_xblock(x, p, *, stride, in_ch, out_ch, bottleneck_ratio, group_width, se_ratio):
    inner = out_ch // bottleneck_ratio
    groups = inner // group_width
    bf16 = jnp.bfloat16

    def conv(x, w_hwio, stride=1, pad=0, groups=1):
        return jax.lax.conv_general_dilated(
            x.astype(bf16), w_hwio.astype(bf16), (stride, stride),
            [(pad, pad), (pad, pad)],
            dimension_numbers=("NHWC", "HWIO", "NHWC"),
            feature_group_count=groups,
            preferred_element_type=jnp.float32)

    y = conv(x, p["w1"][None, None])
    y = jnp.maximum(y * p["s1"] + p["b1"], 0.0)
    y = conv(y, jnp.transpose(p["w2_torch"], (2, 3, 1, 0)),
             stride=stride, pad=1, groups=groups)
    y = jnp.maximum(y * p["s2"] + p["b2"], 0.0)
    if se_ratio is not None:
        pooled = jnp.mean(y, axis=(1, 2))
        h = jnp.dot(pooled.astype(bf16), p["w_se1"].astype(bf16),
                    preferred_element_type=jnp.float32) + p["b_se1"]
        h = jnp.maximum(h, 0.0)
        z = jnp.dot(h.astype(bf16), p["w_se2"].astype(bf16),
                    preferred_element_type=jnp.float32) + p["b_se2"]
        gate = 1.0 / (1.0 + jnp.exp(-z))
        y = y * gate[:, None, None, :]
    y = conv(y, p["w3"][None, None])
    y = jnp.maximum(y * p["s3"] + p["b3"], 0.0)
    if stride != 1 or in_ch != out_ch:
        r = conv(x, p["wsc"][None, None], stride=stride)
        r = r * p["ssc"] + p["bsc"]
    else:
        r = x.astype(bf16).astype(jnp.float32)
    return jnp.maximum(y + r, 0.0)


if __name__ == "__main__":
    in_ch, out_ch = 16, 32
    stride = 2
    bottleneck_ratio = 2
    group_width = 8            # inner=16 -> 2 groups
    se_ratio = 0.25            # se_channels=4
    N, H, W = 2, 16, 16

    key = jax.random.PRNGKey(0)
    kx, kp = jax.random.split(key)
    x = jax.random.normal(kx, (N, H, W, in_ch), jnp.float32)   # NHWC
    p, inner, groups = make_xblock_params(kp, in_ch, out_ch, stride,
                                          bottleneck_ratio, group_width, se_ratio)

    out = xblock_forward(x, p, stride=stride, in_ch=in_ch, out_ch=out_ch,
                         bottleneck_ratio=bottleneck_ratio,
                         group_width=group_width, se_ratio=se_ratio)
    out = jax.block_until_ready(out)

    ref = ref_xblock(x, p, stride=stride, in_ch=in_ch, out_ch=out_ch,
                     bottleneck_ratio=bottleneck_ratio,
                     group_width=group_width, se_ratio=se_ratio)
    np.testing.assert_allclose(np.asarray(out), np.asarray(ref), rtol=2e-3, atol=2e-3)
    print("KERNEL_OK")
</pallas_src>

<mosaic_0001>
module attributes {stable_mosaic.version = 11 : i64} {
  func.func @_xblock_kernel(%arg0: i32, %arg1: memref<1x256x16xbf16, #tpu.memory_space<vmem>>, %arg2: memref<16x16xbf16, #tpu.memory_space<vmem>>, %arg3: memref<1x16xf32, #tpu.memory_space<vmem>>, %arg4: memref<1x16xf32, #tpu.memory_space<vmem>>, %arg5: memref<2x9x8x8xbf16, #tpu.memory_space<vmem>>, %arg6: memref<1x16xf32, #tpu.memory_space<vmem>>, %arg7: memref<1x16xf32, #tpu.memory_space<vmem>>, %arg8: memref<2x8x4xbf16, #tpu.memory_space<vmem>>, %arg9: memref<1x4xf32, #tpu.memory_space<vmem>>, %arg10: memref<4x16xbf16, #tpu.memory_space<vmem>>, %arg11: memref<1x16xf32, #tpu.memory_space<vmem>>, %arg12: memref<2x8x32xbf16, #tpu.memory_space<vmem>>, %arg13: memref<1x32xf32, #tpu.memory_space<vmem>>, %arg14: memref<1x32xf32, #tpu.memory_space<vmem>>, %arg15: memref<16x32xbf16, #tpu.memory_space<vmem>>, %arg16: memref<1x32xf32, #tpu.memory_space<vmem>>, %arg17: memref<1x32xf32, #tpu.memory_space<vmem>>, %arg18: memref<1x64x32xf32, #tpu.memory_space<vmem>>, %arg19: memref<4x9x9x16xf32, #tpu.memory_space<vmem>>) attributes {dimension_semantics = [#tpu.dimension_semantics<parallel>], iteration_bounds = array<i64: 2>, scalar_prefetch = 0 : i64, scratch_operands = 1 : i64, tpu.core_type = #tpu.core_type<tc>, window_params = [{transform_indices = @transform_0, window_bounds = array<i64: 1, 256, 16>}, {pipeline_mode = #tpu.pipeline_mode<synchronous>, transform_indices = @transform_1, window_bounds = array<i64: 16, 16>}, {pipeline_mode = #tpu.pipeline_mode<synchronous>, transform_indices = @transform_2, window_bounds = array<i64: 1, 16>}, {pipeline_mode = #tpu.pipeline_mode<synchronous>, transform_indices = @transform_3, window_bounds = array<i64: 1, 16>}, {pipeline_mode = #tpu.pipeline_mode<synchronous>, transform_indices = @transform_4, window_bounds = array<i64: 2, 9, 8, 8>}, {pipeline_mode = #tpu.pipeline_mode<synchronous>, transform_indices = @transform_5, window_bounds = array<i64: 1, 16>}, {pipeline_mode = #tpu.pipeline_mode<synchronous>, transform_indices = @transform_6, window_bounds = array<i64: 1, 16>}, {pipeline_mode = #tpu.pipeline_mode<synchronous>, transform_indices = @transform_7, window_bounds = array<i64: 2, 8, 4>}, {pipeline_mode = #tpu.pipeline_mode<synchronous>, transform_indices = @transform_8, window_bounds = array<i64: 1, 4>}, {pipeline_mode = #tpu.pipeline_mode<synchronous>, transform_indices = @transform_9, window_bounds = array<i64: 4, 16>}, {pipeline_mode = #tpu.pipeline_mode<synchronous>, transform_indices = @transform_10, window_bounds = array<i64: 1, 16>}, {pipeline_mode = #tpu.pipeline_mode<synchronous>, transform_indices = @transform_11, window_bounds = array<i64: 2, 8, 32>}, {pipeline_mode = #tpu.pipeline_mode<synchronous>, transform_indices = @transform_12, window_bounds = array<i64: 1, 32>}, {pipeline_mode = #tpu.pipeline_mode<synchronous>, transform_indices = @transform_13, window_bounds = array<i64: 1, 32>}, {pipeline_mode = #tpu.pipeline_mode<synchronous>, transform_indices = @transform_14, window_bounds = array<i64: 16, 32>}, {pipeline_mode = #tpu.pipeline_mode<synchronous>, transform_indices = @transform_15, window_bounds = array<i64: 1, 32>}, {pipeline_mode = #tpu.pipeline_mode<synchronous>, transform_indices = @transform_16, window_bounds = array<i64: 1, 32>}, {transform_indices = @transform_17, window_bounds = array<i64: 1, 64, 32>}]} {
    %c0 = arith.constant 0 : index
    %c0_0 = arith.constant 0 : index
    %c0_1 = arith.constant 0 : index
    %0 = vector.load %arg1[%c0, %c0_0, %c0_1] : memref<1x256x16xbf16, #tpu.memory_space<vmem>>, vector<1x256x16xbf16>
    %1 = vector.shape_cast %0 : vector<1x256x16xbf16> to vector<256x16xbf16>
    %c0_2 = arith.constant 0 : index
    %c0_3 = arith.constant 0 : index
    %2 = vector.load %arg2[%c0_2, %c0_3] : memref<16x16xbf16, #tpu.memory_space<vmem>>, vector<16x16xbf16>
    %cst = arith.constant dense<0.000000e+00> : vector<256x16xf32>
    %3 = tpu.matmul %1, %2, %cst {dimension_numbers = #tpu.dot_dimension_numbers<[1], [0], [0], [1], [0, 0, 1, 1], [], []>} : vector<256x16xbf16>, vector<16x16xbf16>, vector<256x16xf32> -> vector<256x16xf32>
    %c0_4 = arith.constant 0 : index
    %c0_5 = arith.constant 0 : index
    %4 = vector.load %arg3[%c0_4, %c0_5] : memref<1x16xf32, #tpu.memory_space<vmem>>, vector<1x16xf32>
    %5 = vector.broadcast %4 : vector<1x16xf32> to vector<256x16xf32>
    %6 = arith.mulf %3, %5 : vector<256x16xf32>
    %c0_6 = arith.constant 0 : index
    %c0_7 = arith.constant 0 : index
    %7 = vector.load %arg4[%c0_6, %c0_7] : memref<1x16xf32, #tpu.memory_space<vmem>>, vector<1x16xf32>
    %8 = vector.broadcast %7 : vector<1x16xf32> to vector<256x16xf32>
    %9 = arith.addf %6, %8 : vector<256x16xf32>
    %cst_8 = arith.constant 0.000000e+00 : f32
    %10 = vector.broadcast %cst_8 : f32 to vector<256x16xf32>
    %11 = arith.maximumf %9, %10 : vector<256x16xf32>
    %cst_9 = arith.constant 0.000000e+00 : f32
    %12 = vector.broadcast %cst_9 : f32 to vector<4x9x9x16xf32>
    %c0_10 = arith.constant 0 : index
    %c0_11 = arith.constant 0 : index
    %c0_12 = arith.constant 0 : index
    %c0_13 = arith.constant 0 : index
    %13 = vector.load %arg19[%c0_10, %c0_11, %c0_12, %c0_13] : memref<4x9x9x16xf32, #tpu.memory_space<vmem>>, vector<4x9x9x16xf32>
    tpu.vector_store %arg19[%c0_10, %c0_11, %c0_12, %c0_13], %12 {strides = array<i32>} : memref<4x9x9x16xf32, #tpu.memory_space<vmem>>, vector<4x9x9x16xf32>,
    %14 = vector.extract_strided_slice %11 {offsets = [0, 0], sizes = [64, 16], strides = [1, 1]} : vector<256x16xf32> to vector<64x16xf32>
    %15 = vector.shape_cast %14 : vector<64x16xf32> to vector<8x8x16xf32>
    %c3 = arith.constant 3 : index
    %c0_14 = arith.constant 0 : index
    %c0_15 = arith.constant 0 : index
    %c0_16 = arith.constant 0 : index
    %16 = vector.load %arg19[%c3, %c0_14, %c0_15, %c0_16] : memref<4x9x9x16xf32, #tpu.memory_space<vmem>>, vector<1x8x8x16xf32>
    %17 = vector.shape_cast %16 : vector<1x8x8x16xf32> to vector<8x8x16xf32>
    %18 = vector.shape_cast %15 : vector<8x8x16xf32> to vector<1x8x8x16xf32>
    tpu.vector_store %arg19[%c3, %c0_14, %c0_15, %c0_16], %18 {strides = array<i32>} : memref<4x9x9x16xf32, #tpu.memory_space<vmem>>, vector<1x8x8x16xf32>,
    %19 = vector.extract_strided_slice %11 {offsets = [64, 0], sizes = [64, 16], strides = [1, 1]} : vector<256x16xf32> to vector<64x16xf32>
    %20 = vector.shape_cast %19 : vector<64x16xf32> to vector<8x8x16xf32>
    %c2 = arith.constant 2 : index
    %c0_17 = arith.constant 0 : index
    %c1 = arith.constant 1 : index
    %c0_18 = arith.constant 0 : index
    %21 = vector.load %arg19[%c2, %c0_17, %c1, %c0_18] : memref<4x9x9x16xf32, #tpu.memory_space<vmem>>, vector<1x8x8x16xf32>
    %22 = vector.shape_cast %21 : vector<1x8x8x16xf32> to vector<8x8x16xf32>
    %23 = vector.shape_cast %20 : vector<8x8x16xf32> to vector<1x8x8x16xf32>
    tpu.vector_store %arg19[%c2, %c0_17, %c1, %c0_18], %23 {strides = array<i32>} : memref<4x9x9x16xf32, #tpu.memory_space<vmem>>, vector<1x8x8x16xf32>,
    %24 = vector.extract_strided_slice %11 {offsets = [128, 0], sizes = [64, 16], strides = [1, 1]} : vector<256x16xf32> to vector<64x16xf32>
    %25 = vector.shape_cast %24 : vector<64x16xf32> to vector<8x8x16xf32>
    %c1_19 = arith.constant 1 : index
    %c1_20 = arith.constant 1 : index
    %c0_21 = arith.constant 0 : index
    %c0_22 = arith.constant 0 : index
    %26 = vector.load %arg19[%c1_19, %c1_20, %c0_21, %c0_22] : memref<4x9x9x16xf32, #tpu.memory_space<vmem>>, vector<1x8x8x16xf32>
    %27 = vector.shape_cast %26 : vector<1x8x8x16xf32> to vector<8x8x16xf32>
    %28 = vector.shape_cast %25 : vector<8x8x16xf32> to vector<1x8x8x16xf32>
    tpu.vector_store %arg19[%c1_19, %c1_20, %c0_21, %c0_22], %28 {strides = array<i32>} : memref<4x9x9x16xf32, #tpu.memory_space<vmem>>, vector<1x8x8x16xf32>,
    %29 = vector.extract_strided_slice %11 {offsets = [192, 0], sizes = [64, 16], strides = [1, 1]} : vector<256x16xf32> to vector<64x16xf32>
    %30 = vector.shape_cast %29 : vector<64x16xf32> to vector<8x8x16xf32>
    %c0_23 = arith.constant 0 : index
    %c1_24 = arith.constant 1 : index
    %c1_25 = arith.constant 1 : index
    %c0_26 = arith.constant 0 : index
    %31 = vector.load %arg19[%c0_23, %c1_24, %c1_25, %c0_26] : memref<4x9x9x16xf32, #tpu.memory_space<vmem>>, vector<1x8x8x16xf32>
    %32 = vector.shape_cast %31 : vector<1x8x8x16xf32> to vector<8x8x16xf32>
    %33 = vector.shape_cast %30 : vector<8x8x16xf32> to vector<1x8x8x16xf32>
    tpu.vector_store %arg19[%c0_23, %c1_24, %c1_25, %c0_26], %33 {strides = array<i32>} : memref<4x9x9x16xf32, #tpu.memory_space<vmem>>, vector<1x8x8x16xf32>,
    %c0_27 = arith.constant 0 : index
    %c0_28 = arith.constant 0 : index
    %c0_29 = arith.constant 0 : index
    %c0_30 = arith.constant 0 : index
    %34 = vector.load %arg19[%c0_27, %c0_28, %c0_29, %c0_30] : memref<4x9x9x16xf32, #tpu.memory_space<vmem>>, vector<1x8x8x16xf32>
    %35 = vector.shape_cast %34 : vector<1x8x8x16xf32> to vector<8x8x16xf32>
    %36 = vector.shape_cast %35 : vector<8x8x16xf32> to vector<64x16xf32>
    %37 = arith.truncf %36 : vector<64x16xf32> to vector<64x16xbf16>
    %c1_31 = arith.constant 1 : index
    %c0_32 = arith.constant 0 : index
    %c0_33 = arith.constant 0 : index
    %c0_34 = arith.constant 0 : index
    %38 = vector.load %arg19[%c1_31, %c0_32, %c0_33, %c0_34] : memref<4x9x9x16xf32, #tpu.memory_space<vmem>>, vector<1x8x8x16xf32>
    %39 = vector.shape_cast %38 : vector<1x8x8x16xf32> to vector<8x8x16xf32>
    %40 = vector.shape_cast %39 : vector<8x8x16xf32> to vector<64x16xf32>
    %41 = arith.truncf %40 : vector<64x16xf32> to vector<64x16xbf16>
    %c0_35 = arith.constant 0 : index
    %c0_36 = arith.constant 0 : index
    %c1_37 = arith.constant 1 : index
    %c0_38 = arith.constant 0 : index
    %42 = vector.load %arg19[%c0_35, %c0_36, %c1_37, %c0_38] : memref<4x9x9x16xf32, #tpu.memory_space<vmem>>, vector<1x8x8x16xf32>
    %43 = vector.shape_cast %42 : vector<1x8x8x16xf32> to vector<8x8x16xf32>
    %44 = vector.shape_cast %43 : vector<8x8x16xf32> to vector<64x16xf32>
    %45 = arith.truncf %44 : vector<64x16xf32> to vector<64x16xbf16>
    %c2_39 = arith.constant 2 : index
    %c0_40 = arith.constant 0 : index
    %c0_41 = arith.constant 0 : index
    %c0_42 = arith.constant 0 : index
    %46 = vector.load %arg19[%c2_39, %c0_40, %c0_41, %c0_42] : memref<4x9x9x16xf32, #tpu.memory_space<vmem>>, vector<1x8x8x16xf32>
    %47 = vector.shape_cast %46 : vector<1x8x8x16xf32> to vector<8x8x16xf32>
    %48 = vector.shape_cast %47 : vector<8x8x16xf32> to vector<64x16xf32>
    %49 = arith.truncf %48 : vector<64x16xf32> to vector<64x16xbf16>
    %c3_43 = arith.constant 3 : index
    %c0_44 = arith.constant 0 : index
    %c0_45 = arith.constant 0 : index
    %c0_46 = arith.constant 0 : index
    %50 = vector.load %arg19[%c3_43, %c0_44, %c0_45, %c0_46] : memref<4x9x9x16xf32, #tpu.memory_space<vmem>>, vector<1x8x8x16xf32>
    %51 = vector.shape_cast %50 : vector<1x8x8x16xf32> to vector<8x8x16xf32>
    %52 = vector.shape_cast %51 : vector<8x8x16xf32> to vector<64x16xf32>
    %53 = arith.truncf %52 : vector<64x16xf32> to vector<64x16xbf16>
    %c2_47 = arith.constant 2 : index
    %c0_48 = arith.constant 0 : index
    %c1_49 = arith.constant 1 : index
    %c0_50 = arith.constant 0 : index
    %54 = vector.load %arg19[%c2_47, %c0_48, %c1_49, %c0_50] : memref<4x9x9x16xf32, #tpu.memory_space<vmem>>, vector<1x8x8x16xf32>
    %55 = vector.shape_cast %54 : vector<1x8x8x16xf32> to vector<8x8x16xf32>
    %56 = vector.shape_cast %55 : vector<8x8x16xf32> to vector<64x16xf32>
    %57 = arith.truncf %56 : vector<64x16xf32> to vector<64x16xbf16>
    %c0_51 = arith.constant 0 : index
    %c1_52 = arith.constant 1 : index
    %c0_53 = arith.constant 0 : index
    %c0_54 = arith.constant 0 : index
    %58 = vector.load %arg19[%c0_51, %c1_52, %c0_53, %c0_54] : memref<4x9x9x16xf32, #tpu.memory_space<vmem>>, vector<1x8x8x16xf32>
    %59 = vector.shape_cast %58 : vector<1x8x8x16xf32> to vector<8x8x16xf32>
    %60 = vector.shape_cast %59 : vector<8x8x16xf32> to vector<64x16xf32>
    %61 = arith.truncf %60 : vector<64x16xf32> to vector<64x16xbf16>
    %c1_55 = arith.constant 1 : index
    %c1_56 = arith.constant 1 : index
    %c0_57 = arith.constant 0 : index
    %c0_58 = arith.constant 0 : index
    %62 = vector.load %arg19[%c1_55, %c1_56, %c0_57, %c0_58] : memref<4x9x9x16xf32, #tpu.memory_space<vmem>>, vector<1x8x8x16xf32>
    %63 = vector.shape_cast %62 : vector<1x8x8x16xf32> to vector<8x8x16xf32>
    %64 = vector.shape_cast %63 : vector<8x8x16xf32> to vector<64x16xf32>
    %65 = arith.truncf %64 : vector<64x16xf32> to vector<64x16xbf16>
    %c0_59 = arith.constant 0 : index
    %c1_60 = arith.constant 1 : index
    %c1_61 = arith.constant 1 : index
    %c0_62 = arith.constant 0 : index
    %66 = vector.load %arg19[%c0_59, %c1_60, %c1_61, %c0_62] : memref<4x9x9x16xf32, #tpu.memory_space<vmem>>, vector<1x8x8x16xf32>
    %67 = vector.shape_cast %66 : vector<1x8x8x16xf32> to vector<8x8x16xf32>
    %68 = vector.shape_cast %67 : vector<8x8x16xf32> to vector<64x16xf32>
    %69 = arith.truncf %68 : vector<64x16xf32> to vector<64x16xbf16>
    %70 = vector.extract_strided_slice %37 {offsets = [0, 0], sizes = [64, 8], strides = [1, 1]} : vector<64x16xbf16> to vector<64x8xbf16>
    %c0_63 = arith.constant 0 : index
    %c0_64 = arith.constant 0 : index
    %c0_65 = arith.constant 0 : index
    %c0_66 = arith.constant 0 : index
    %71 = vector.load %arg5[%c0_63, %c0_64, %c0_65, %c0_66] : memref<2x9x8x8xbf16, #tpu.memory_space<vmem>>, vector<1x1x8x8xbf16>
    %72 = vector.shape_cast %71 : vector<1x1x8x8xbf16> to vector<8x8xbf16>
    %cst_67 = arith.constant dense<0.000000e+00> : vector<64x8xf32>
    %73 = tpu.matmul %70, %72, %cst_67 {dimension_numbers = #tpu.dot_dimension_numbers<[1], [0], [0], [1], [0, 0, 1, 1], [], []>} : vector<64x8xbf16>, vector<8x8xbf16>, vector<64x8xf32> -> vector<64x8xf32>
    %74 = vector.extract_strided_slice %41 {offsets = [0, 0], sizes = [64, 8], strides = [1, 1]} : vector<64x16xbf16> to vector<64x8xbf16>
    %c0_68 = arith.constant 0 : index
    %c1_69 = arith.constant 1 : index
    %c0_70 = arith.constant 0 : index
    %c0_71 = arith.constant 0 : index
    %75 = vector.load %arg5[%c0_68, %c1_69, %c0_70, %c0_71] : memref<2x9x8x8xbf16, #tpu.memory_space<vmem>>, vector<1x1x8x8xbf16>
    %76 = vector.shape_cast %75 : vector<1x1x8x8xbf16> to vector<8x8xbf16>
    %cst_72 = arith.constant dense<0.000000e+00> : vector<64x8xf32>
    %77 = tpu.matmul %74, %76, %cst_72 {dimension_numbers = #tpu.dot_dimension_numbers<[1], [0], [0], [1], [0, 0, 1, 1], [], []>} : vector<64x8xbf16>, vector<8x8xbf16>, vector<64x8xf32> -> vector<64x8xf32>
    %78 = arith.addf %73, %77 : vector<64x8xf32>
    %79 = vector.extract_strided_slice %45 {offsets = [0, 0], sizes = [64, 8], strides = [1, 1]} : vector<64x16xbf16> to vector<64x8xbf16>
    %c0_73 = arith.constant 0 : index
    %c2_74 = arith.constant 2 : index
    %c0_75 = arith.constant 0 : index
    %c0_76 = arith.constant 0 : index
    %80 = vector.load %arg5[%c0_73, %c2_74, %c0_75, %c0_76] : memref<2x9x8x8xbf16, #tpu.memory_space<vmem>>, vector<1x1x8x8xbf16>
    %81 = vector.shape_cast %80 : vector<1x1x8x8xbf16> to vector<8x8xbf16>
    %cst_77 = arith.constant dense<0.000000e+00> : vector<64x8xf32>
    %82 = tpu.matmul %79, %81, %cst_77 {dimension_numbers = #tpu.dot_dimension_numbers<[1], [0], [0], [1], [0, 0, 1, 1], [], []>} : vector<64x8xbf16>, vector<8x8xbf16>, vector<64x8xf32> -> vector<64x8xf32>
    %83 = arith.addf %78, %82 : vector<64x8xf32>
    %84 = vector.extract_strided_slice %49 {offsets = [0, 0], sizes = [64, 8], strides = [1, 1]} : vector<64x16xbf16> to vector<64x8xbf16>
    %c0_78 = arith.constant 0 : index
    %c3_79 = arith.constant 3 : index
    %c0_80 = arith.constant 0 : index
    %c0_81 = arith.constant 0 : index
    %85 = vector.load %arg5[%c0_78, %c3_79, %c0_80, %c0_81] : memref<2x9x8x8xbf16, #tpu.memory_space<vmem>>, vector<1x1x8x8xbf16>
    %86 = vector.shape_cast %85 : vector<1x1x8x8xbf16> to vector<8x8xbf16>
    %cst_82 = arith.constant dense<0.000000e+00> : vector<64x8xf32>
    %87 = tpu.matmul %84, %86, %cst_82 {dimension_numbers = #tpu.dot_dimension_numbers<[1], [0], [0], [1], [0, 0, 1, 1], [], []>} : vector<64x8xbf16>, vector<8x8xbf16>, vector<64x8xf32> -> vector<64x8xf32>
    %88 = arith.addf %83, %87 : vector<64x8xf32>
    %89 = vector.extract_strided_slice %53 {offsets = [0, 0], sizes = [64, 8], strides = [1, 1]} : vector<64x16xbf16> to vector<64x8xbf16>
    %c0_83 = arith.constant 0 : index
    %c4 = arith.constant 4 : index
    %c0_84 = arith.constant 0 : index
    %c0_85 = arith.constant 0 : index
    %90 = vector.load %arg5[%c0_83, %c4, %c0_84, %c0_85] : memref<2x9x8x8xbf16, #tpu.memory_space<vmem>>, vector<1x1x8x8xbf16>
    %91 = vector.shape_cast %90 : vector<1x1x8x8xbf16> to vector<8x8xbf16>
    %cst_86 = arith.constant dense<0.000000e+00> : vector<64x8xf32>
    %92 = tpu.matmul %89, %91, %cst_86 {dimension_numbers = #tpu.dot_dimension_numbers<[1], [0], [0], [1], [0, 0, 1, 1], [], []>} : vector<64x8xbf16>, vector<8x8xbf16>, vector<64x8xf32> -> vector<64x8xf32>
    %93 = arith.addf %88, %92 : vector<64x8xf32>
    %94 = vector.extract_strided_slice %57 {offsets = [0, 0], sizes = [64, 8], strides = [1, 1]} : vector<64x16xbf16> to vector<64x8xbf16>
    %c0_87 = arith.constant 0 : index
    %c5 = arith.constant 5 : index
    %c0_88 = arith.constant 0 : index
    %c0_89 = arith.constant 0 : index
    %95 = vector.load %arg5[%c0_87, %c5, %c0_88, %c0_89] : memref<2x9x8x8xbf16, #tpu.memory_space<vmem>>, vector<1x1x8x8xbf16>
    %96 = vector.shape_cast %95 : vector<1x1x8x8xbf16> to vector<8x8xbf16>
    %cst_90 = arith.constant dense<0.000000e+00> : vector<64x8xf32>
    %97 = tpu.matmul %94, %96, %cst_90 {dimension_numbers = #tpu.dot_dimension_numbers<[1], [0], [0], [1], [0, 0, 1, 1], [], []>} : vector<64x8xbf16>, vector<8x8xbf16>, vector<64x8xf32> -> vector<64x8xf32>
    %98 = arith.addf %93, %97 : vector<64x8xf32>
    %99 = vector.extract_strided_slice %61 {offsets = [0, 0], sizes = [64, 8], strides = [1, 1]} : vector<64x16xbf16> to vector<64x8xbf16>
    %c0_91 = arith.constant 0 : index
    %c6 = arith.constant 6 : index
    %c0_92 = arith.constant 0 : index
    %c0_93 = arith.constant 0 : index
    %100 = vector.load %arg5[%c0_91, %c6, %c0_92, %c0_93] : memref<2x9x8x8xbf16, #tpu.memory_space<vmem>>, vector<1x1x8x8xbf16>
    %101 = vector.shape_cast %100 : vector<1x1x8x8xbf16> to vector<8x8xbf16>
    %cst_94 = arith.constant dense<0.000000e+00> : vector<64x8xf32>
    %102 = tpu.matmul %99, %101, %cst_94 {dimension_numbers = #tpu.dot_dimension_numbers<[1], [0], [0], [1], [0, 0, 1, 1], [], []>} : vector<64x8xbf16>, vector<8x8xbf16>, vector<64x8xf32> -> vector<64x8xf32>
    %103 = arith.addf %98, %102 : vector<64x8xf32>
    %104 = vector.extract_strided_slice %65 {offsets = [0, 0], sizes = [64, 8], strides = [1, 1]} : vector<64x16xbf16> to vector<64x8xbf16>
    %c0_95 = arith.constant 0 : index
    %c7 = arith.constant 7 : index
    %c0_96 = arith.constant 0 : index
    %c0_97 = arith.constant 0 : index
    %105 = vector.load %arg5[%c0_95, %c7, %c0_96, %c0_97] : memref<2x9x8x8xbf16, #tpu.memory_space<vmem>>, vector<1x1x8x8xbf16>
    %106 = vector.shape_cast %105 : vector<1x1x8x8xbf16> to vector<8x8xbf16>
    %cst_98 = arith.constant dense<0.000000e+00> : vector<64x8xf32>
    %107 = tpu.matmul %104, %106, %cst_98 {dimension_numbers = #tpu.dot_dimension_numbers<[1], [0], [0], [1], [0, 0, 1, 1], [], []>} : vector<64x8xbf16>, vector<8x8xbf16>, vector<64x8xf32> -> vector<64x8xf32>
    %108 = arith.addf %103, %107 : vector<64x8xf32>
    %109 = vector.extract_strided_slice %69 {offsets = [0, 0], sizes = [64, 8], strides = [1, 1]} : vector<64x16xbf16> to vector<64x8xbf16>
    %c0_99 = arith.constant 0 : index
    %c8 = arith.constant 8 : index
    %c0_100 = arith.constant 0 : index
    %c0_101 = arith.constant 0 : index
    %110 = vector.load %arg5[%c0_99, %c8, %c0_100, %c0_101] : memref<2x9x8x8xbf16, #tpu.memory_space<vmem>>, vector<1x1x8x8xbf16>
    %111 = vector.shape_cast %110 : vector<1x1x8x8xbf16> to vector<8x8xbf16>
    %cst_102 = arith.constant dense<0.000000e+00> : vector<64x8xf32>
    %112 = tpu.matmul %109, %111, %cst_102 {dimension_numbers = #tpu.dot_dimension_numbers<[1], [0], [0], [1], [0, 0, 1, 1], [], []>} : vector<64x8xbf16>, vector<8x8xbf16>, vector<64x8xf32> -> vector<64x8xf32>
    %113 = arith.addf %108, %112 : vector<64x8xf32>
    %c0_103 = arith.constant 0 : index
    %c0_104 = arith.constant 0 : index
    %114 = vector.load %arg6[%c0_103, %c0_104] : memref<1x16xf32, #tpu.memory_space<vmem>>, vector<1x8xf32>
    %115 = vector.broadcast %114 : vector<1x8xf32> to vector<64x8xf32>
    %116 = arith.mulf %113, %115 : vector<64x8xf32>
    %c0_105 = arith.constant 0 : index
    %c0_106 = arith.constant 0 : index
    %117 = vector.load %arg7[%c0_105, %c0_106] : memref<1x16xf32, #tpu.memory_space<vmem>>, vector<1x8xf32>
    %118 = vector.broadcast %117 : vector<1x8xf32> to vector<64x8xf32>
    %119 = arith.addf %116, %118 : vector<64x8xf32>
    %cst_107 = arith.constant 0.000000e+00 : f32
    %120 = vector.broadcast %cst_107 : f32 to vector<64x8xf32>
    %121 = arith.maximumf %119, %120 : vector<64x8xf32>
    %122 = vector.extract_strided_slice %37 {offsets = [0, 8], sizes = [64, 8], strides = [1, 1]} : vector<64x16xbf16> to vector<64x8xbf16>
    %c1_108 = arith.constant 1 : index
    %c0_109 = arith.constant 0 : index
    %c0_110 = arith.constant 0 : index
    %c0_111 = arith.constant 0 : index
    %123 = vector.load %arg5[%c1_108, %c0_109, %c0_110, %c0_111] : memref<2x9x8x8xbf16, #tpu.memory_space<vmem>>, vector<1x1x8x8xbf16>
    %124 = vector.shape_cast %123 : vector<1x1x8x8xbf16> to vector<8x8xbf16>
    %cst_112 = arith.constant dense<0.000000e+00> : vector<64x8xf32>
    %125 = tpu.matmul %122, %124, %cst_112 {dimension_numbers = #tpu.dot_dimension_numbers<[1], [0], [0], [1], [0, 0, 1, 1], [], []>} : vector<64x8xbf16>, vector<8x8xbf16>, vector<64x8xf32> -> vector<64x8xf32>
    %126 = vector.extract_strided_slice %41 {offsets = [0, 8], sizes = [64, 8], strides = [1, 1]} : vector<64x16xbf16> to vector<64x8xbf16>
    %c1_113 = arith.constant 1 : index
    %c1_114 = arith.constant 1 : index
    %c0_115 = arith.constant 0 : index
    %c0_116 = arith.constant 0 : index
    %127 = vector.load %arg5[%c1_113, %c1_114, %c0_115, %c0_116] : memref<2x9x8x8xbf16, #tpu.memory_space<vmem>>, vector<1x1x8x8xbf16>
    %128 = vector.shape_cast %127 : vector<1x1x8x8xbf16> to vector<8x8xbf16>
    %cst_117 = arith.constant dense<0.000000e+00> : vector<64x8xf32>
    %129 = tpu.matmul %126, %128, %cst_117 {dimension_numbers = #tpu.dot_dimension_numbers<[1], [0], [0], [1], [0, 0, 1, 1], [], []>} : vector<64x8xbf16>, vector<8x8xbf16>, vector<64x8xf32> -> vector<64x8xf32>
    %130 = arith.addf %125, %129 : vector<64x8xf32>
    %131 = vector.extract_strided_slice %45 {offsets = [0, 8], sizes = [64, 8], strides = [1, 1]} : vector<64x16xbf16> to vector<64x8xbf16>
    %c1_118 = arith.constant 1 : index
    %c2_119 = arith.constant 2 : index
    %c0_120 = arith.constant 0 : index
    %c0_121 = arith.constant 0 : index
    %132 = vector.load %arg5[%c1_118, %c2_119, %c0_120, %c0_121] : memref<2x9x8x8xbf16, #tpu.memory_space<vmem>>, vector<1x1x8x8xbf16>
    %133 = vector.shape_cast %132 : vector<1x1x8x8xbf16> to vector<8x8xbf16>
    %cst_122 = arith.constant dense<0.000000e+00> : vector<64x8xf32>
    %134 = tpu.matmul %131, %133, %cst_122 {dimension_numbers = #tpu.dot_dimension_numbers<[1], [0], [0], [1], [0, 0, 1, 1], [], []>} : vector<64x8xbf16>, vector<8x8xbf16>, vector<64x8xf32> -> vector<64x8xf32>
    %135 = arith.addf %130, %134 : vector<64x8xf32>
    %136 = vector.extract_strided_slice %49 {offsets = [0, 8], sizes = [64, 8], strides = [1, 1]} : vector<64x16xbf16> to vector<64x8xbf16>
    %c1_123 = arith.constant 1 : index
    %c3_124 = arith.constant 3 : index
    %c0_125 = arith.constant 0 : index
    %c0_126 = arith.constant 0 : index
    %137 = vector.load %arg5[%c1_123, %c3_124, %c0_125, %c0_126] : memref<2x9x8x8xbf16, #tpu.memory_space<vmem>>, vector<1x1x8x8xbf16>
    %138 = vector.shape_cast %137 : vector<1x1x8x8xbf16> to vector<8x8xbf16>
    %cst_127 = arith.constant dense<0.000000e+00> : vector<64x8xf32>
    %139 = tpu.matmul %136, %138, %cst_127 {dimension_numbers = #tpu.dot_dimension_numbers<[1], [0], [0], [1], [0, 0, 1, 1], [], []>} : vector<64x8xbf16>, vector<8x8xbf16>, vector<64x8xf32> -> vector<64x8xf32>
    %140 = arith.addf %135, %139 : vector<64x8xf32>
    %141 = vector.extract_strided_slice %53 {offsets = [0, 8], sizes = [64, 8], strides = [1, 1]} : vector<64x16xbf16> to vector<64x8xbf16>
    %c1_128 = arith.constant 1 : index
    %c4_129 = arith.constant 4 : index
    %c0_130 = arith.constant 0 : index
    %c0_131 = arith.constant 0 : index
    %142 = vector.load %arg5[%c1_128, %c4_129, %c0_130, %c0_131] : memref<2x9x8x8xbf16, #tpu.memory_space<vmem>>, vector<1x1x8x8xbf16>
    %143 = vector.shape_cast %142 : vector<1x1x8x8xbf16> to vector<8x8xbf16>
    %cst_132 = arith.constant dense<0.000000e+00> : vector<64x8xf32>
    %144 = tpu.matmul %141, %143, %cst_132 {dimension_numbers = #tpu.dot_dimension_numbers<[1], [0], [0], [1], [0, 0, 1, 1], [], []>} : vector<64x8xbf16>, vector<8x8xbf16>, vector<64x8xf32> -> vector<64x8xf32>
    %145 = arith.addf %140, %144 : vector<64x8xf32>
    %146 = vector.extract_strided_slice %57 {offsets = [0, 8], sizes = [64, 8], strides = [1, 1]} : vector<64x16xbf16> to vector<64x8xbf16>
    %c1_133 = arith.constant 1 : index
    %c5_134 = arith.constant 5 : index
    %c0_135 = arith.constant 0 : index
    %c0_136 = arith.constant 0 : index
    %147 = vector.load %arg5[%c1_133, %c5_134, %c0_135, %c0_136] : memref<2x9x8x8xbf16, #tpu.memory_space<vmem>>, vector<1x1x8x8xbf16>
    %148 = vector.shape_cast %147 : vector<1x1x8x8xbf16> to vector<8x8xbf16>
    %cst_137 = arith.constant dense<0.000000e+00> : vector<64x8xf32>
    %149 = tpu.matmul %146, %148, %cst_137 {dimension_numbers = #tpu.dot_dimension_numbers<[1], [0], [0], [1], [0, 0, 1, 1], [], []>} : vector<64x8xbf16>, vector<8x8xbf16>, vector<64x8xf32> -> vector<64x8xf32>
    %150 = arith.addf %145, %149 : vector<64x8xf32>
    %151 = vector.extract_strided_slice %61 {offsets = [0, 8], sizes = [64, 8], strides = [1, 1]} : vector<64x16xbf16> to vector<64x8xbf16>
    %c1_138 = arith.constant 1 : index
    %c6_139 = arith.constant 6 : index
    %c0_140 = arith.constant 0 : index
    %c0_141 = arith.constant 0 : index
    %152 = vector.load %arg5[%c1_138, %c6_139, %c0_140, %c0_141] : memref<2x9x8x8xbf16, #tpu.memory_space<vmem>>, vector<1x1x8x8xbf16>
    %153 = vector.shape_cast %152 : vector<1x1x8x8xbf16> to vector<8x8xbf16>
    %cst_142 = arith.constant dense<0.000000e+00> : vector<64x8xf32>
    %154 = tpu.matmul %151, %153, %cst_142 {dimension_numbers = #tpu.dot_dimension_numbers<[1], [0], [0], [1], [0, 0, 1, 1], [], []>} : vector<64x8xbf16>, vector<8x8xbf16>, vector<64x8xf32> -> vector<64x8xf32>
    %155 = arith.addf %150, %154 : vector<64x8xf32>
    %156 = vector.extract_strided_slice %65 {offsets = [0, 8], sizes = [64, 8], strides = [1, 1]} : vector<64x16xbf16> to vector<64x8xbf16>
    %c1_143 = arith.constant 1 : index
    %c7_144 = arith.constant 7 : index
    %c0_145 = arith.constant 0 : index
    %c0_146 = arith.constant 0 : index
    %157 = vector.load %arg5[%c1_143, %c7_144, %c0_145, %c0_146] : memref<2x9x8x8xbf16, #tpu.memory_space<vmem>>, vector<1x1x8x8xbf16>
    %158 = vector.shape_cast %157 : vector<1x1x8x8xbf16> to vector<8x8xbf16>
    %cst_147 = arith.constant dense<0.000000e+00> : vector<64x8xf32>
    %159 = tpu.matmul %156, %158, %cst_147 {dimension_numbers = #tpu.dot_dimension_numbers<[1], [0], [0], [1], [0, 0, 1, 1], [], []>} : vector<64x8xbf16>, vector<8x8xbf16>, vector<64x8xf32> -> vector<64x8xf32>
    %160 = arith.addf %155, %159 : vector<64x8xf32>
    %161 = vector.extract_strided_slice %69 {offsets = [0, 8], sizes = [64, 8], strides = [1, 1]} : vector<64x16xbf16> to vector<64x8xbf16>
    %c1_148 = arith.constant 1 : index
    %c8_149 = arith.constant 8 : index
    %c0_150 = arith.constant 0 : index
    %c0_151 = arith.constant 0 : index
    %162 = vector.load %arg5[%c1_148, %c8_149, %c0_150, %c0_151] : memref<2x9x8x8xbf16, #tpu.memory_space<vmem>>, vector<1x1x8x8xbf16>
    %163 = vector.shape_cast %162 : vector<1x1x8x8xbf16> to vector<8x8xbf16>
    %cst_152 = arith.constant dense<0.000000e+00> : vector<64x8xf32>
    %164 = tpu.matmul %161, %163, %cst_152 {dimension_numbers = #tpu.dot_dimension_numbers<[1], [0], [0], [1], [0, 0, 1, 1], [], []>} : vector<64x8xbf16>, vector<8x8xbf16>, vector<64x8xf32> -> vector<64x8xf32>
    %165 = arith.addf %160, %164 : vector<64x8xf32>
    %c0_153 = arith.constant 0 : index
    %c8_154 = arith.constant 8 : index
    %166 = vector.load %arg6[%c0_153, %c8_154] : memref<1x16xf32, #tpu.memory_space<vmem>>, vector<1x8xf32>
    %167 = vector.broadcast %166 : vector<1x8xf32> to vector<64x8xf32>
    %168 = arith.mulf %165, %167 : vector<64x8xf32>
    %c0_155 = arith.constant 0 : index
    %c8_156 = arith.constant 8 : index
    %169 = vector.load %arg7[%c0_155, %c8_156] : memref<1x16xf32, #tpu.memory_space<vmem>>, vector<1x8xf32>
    %170 = vector.broadcast %169 : vector<1x8xf32> to vector<64x8xf32>
    %171 = arith.addf %168, %170 : vector<64x8xf32>
    %cst_157 = arith.constant 0.000000e+00 : f32
    %172 = vector.broadcast %cst_157 : f32 to vector<64x8xf32>
    %173 = arith.maximumf %171, %172 : vector<64x8xf32>
    %c0_158 = arith.constant 0 : index
    %c0_159 = arith.constant 0 : index
    %174 = vector.load %arg9[%c0_158, %c0_159] : memref<1x4xf32, #tpu.memory_space<vmem>>, vector<1x4xf32>
    %cst_160 = arith.constant dense<0.000000e+00> : vector<8xf32>
    %175 = vector.multi_reduction <add>, %121, %cst_160 [0] : vector<64x8xf32> to vector<8xf32>
    %176 = vector.shape_cast %175 : vector<8xf32> to vector<1x8xf32>
    %cst_161 = arith.constant 6.400000e+01 : f32
    %177 = vector.broadcast %cst_161 : f32 to vector<1x8xf32>
    %178 = arith.divf %176, %177 : vector<1x8xf32>
    %179 = arith.truncf %178 : vector<1x8xf32> to vector<1x8xbf16>
    %c0_162 = arith.constant 0 : index
    %c0_163 = arith.constant 0 : index
    %c0_164 = arith.constant 0 : index
    %180 = vector.load %arg8[%c0_162, %c0_163, %c0_164] : memref<2x8x4xbf16, #tpu.memory_space<vmem>>, vector<1x8x4xbf16>
    %181 = vector.shape_cast %180 : vector<1x8x4xbf16> to vector<8x4xbf16>
    %cst_165 = arith.constant dense<0.000000e+00> : vector<1x4xf32>
    %182 = tpu.matmul %179, %181, %cst_165 {dimension_numbers = #tpu.dot_dimension_numbers<[1], [0], [0], [1], [0, 0, 1, 1], [], []>} : vector<1x8xbf16>, vector<8x4xbf16>, vector<1x4xf32> -> vector<1x4xf32>
    %183 = arith.addf %174, %182 : vector<1x4xf32>
    %cst_166 = arith.constant dense<0.000000e+00> : vector<8xf32>
    %184 = vector.multi_reduction <add>, %173, %cst_166 [0] : vector<64x8xf32> to vector<8xf32>
    %185 = vector.shape_cast %184 : vector<8xf32> to vector<1x8xf32>
    %cst_167 = arith.constant 6.400000e+01 : f32
    %186 = vector.broadcast %cst_167 : f32 to vector<1x8xf32>
    %187 = arith.divf %185, %186 : vector<1x8xf32>
    %188 = arith.truncf %187 : vector<1x8xf32> to vector<1x8xbf16>
    %c1_168 = arith.constant 1 : index
    %c0_169 = arith.constant 0 : index
    %c0_170 = arith.constant 0 : index
    %189 = vector.load %arg8[%c1_168, %c0_169, %c0_170] : memref<2x8x4xbf16, #tpu.memory_space<vmem>>, vector<1x8x4xbf16>
    %190 = vector.shape_cast %189 : vector<1x8x4xbf16> to vector<8x4xbf16>
    %cst_171 = arith.constant dense<0.000000e+00> : vector<1x4xf32>
    %191 = tpu.matmul %188, %190, %cst_171 {dimension_numbers = #tpu.dot_dimension_numbers<[1], [0], [0], [1], [0, 0, 1, 1], [], []>} : vector<1x8xbf16>, vector<8x4xbf16>, vector<1x4xf32> -> vector<1x4xf32>
    %192 = arith.addf %183, %191 : vector<1x4xf32>
    %cst_172 = arith.constant 0.000000e+00 : f32
    %193 = vector.broadcast %cst_172 : f32 to vector<1x4xf32>
    %194 = arith.maximumf %192, %193 : vector<1x4xf32>
    %195 = arith.truncf %194 : vector<1x4xf32> to vector<1x4xbf16>
    %c0_173 = arith.constant 0 : index
    %c0_174 = arith.constant 0 : index
    %196 = vector.load %arg10[%c0_173, %c0_174] : memref<4x16xbf16, #tpu.memory_space<vmem>>, vector<4x16xbf16>
    %cst_175 = arith.constant dense<0.000000e+00> : vector<1x16xf32>
    %197 = tpu.matmul %195, %196, %cst_175 {dimension_numbers = #tpu.dot_dimension_numbers<[1], [0], [0], [1], [0, 0, 1, 1], [], []>} : vector<1x4xbf16>, vector<4x16xbf16>, vector<1x16xf32> -> vector<1x16xf32>
    %c0_176 = arith.constant 0 : index
    %c0_177 = arith.constant 0 : index
    %198 = vector.load %arg11[%c0_176, %c0_177] : memref<1x16xf32, #tpu.memory_space<vmem>>, vector<1x16xf32>
    %199 = arith.addf %197, %198 : vector<1x16xf32>
    %cst_178 = arith.constant 0.000000e+00 : f32
    %200 = vector.broadcast %cst_178 : f32 to vector<1x16xf32>
    %201 = arith.subf %200, %199 : vector<1x16xf32>
    %202 = math.exp %201 : vector<1x16xf32>
    %cst_179 = arith.constant 1.000000e+00 : f32
    %203 = vector.broadcast %cst_179 : f32 to vector<1x16xf32>
    %204 = arith.addf %203, %202 : vector<1x16xf32>
    %cst_180 = arith.constant 1.000000e+00 : f32
    %205 = vector.broadcast %cst_180 : f32 to vector<1x16xf32>
    %206 = arith.divf %205, %204 : vector<1x16xf32>
    %207 = vector.extract_strided_slice %206 {offsets = [0, 0], sizes = [1, 8], strides = [1, 1]} : vector<1x16xf32> to vector<1x8xf32>
    %208 = vector.broadcast %207 : vector<1x8xf32> to vector<64x8xf32>
    %209 = arith.mulf %121, %208 : vector<64x8xf32>
    %210 = arith.truncf %209 : vector<64x8xf32> to vector<64x8xbf16>
    %c0_181 = arith.constant 0 : index
    %c0_182 = arith.constant 0 : index
    %c0_183 = arith.constant 0 : index
    %211 = vector.load %arg12[%c0_181, %c0_182, %c0_183] : memref<2x8x32xbf16, #tpu.memory_space<vmem>>, vector<1x8x32xbf16>
    %212 = vector.shape_cast %211 : vector<1x8x32xbf16> to vector<8x32xbf16>
    %cst_184 = arith.constant dense<0.000000e+00> : vector<64x32xf32>
    %213 = tpu.matmul %210, %212, %cst_184 {dimension_numbers = #tpu.dot_dimension_numbers<[1], [0], [0], [1], [0, 0, 1, 1], [], []>} : vector<64x8xbf16>, vector<8x32xbf16>, vector<64x32xf32> -> vector<64x32xf32>
    %214 = vector.extract_strided_slice %206 {offsets = [0, 8], sizes = [1, 8], strides = [1, 1]} : vector<1x16xf32> to vector<1x8xf32>
    %215 = vector.broadcast %214 : vector<1x8xf32> to vector<64x8xf32>
    %216 = arith.mulf %173, %215 : vector<64x8xf32>
    %217 = arith.truncf %216 : vector<64x8xf32> to vector<64x8xbf16>
    %c1_185 = arith.constant 1 : index
    %c0_186 = arith.constant 0 : index
    %c0_187 = arith.constant 0 : index
    %218 = vector.load %arg12[%c1_185, %c0_186, %c0_187] : memref<2x8x32xbf16, #tpu.memory_space<vmem>>, vector<1x8x32xbf16>
    %219 = vector.shape_cast %218 : vector<1x8x32xbf16> to vector<8x32xbf16>
    %cst_188 = arith.constant dense<0.000000e+00> : vector<64x32xf32>
    %220 = tpu.matmul %217, %219, %cst_188 {dimension_numbers = #tpu.dot_dimension_numbers<[1], [0], [0], [1], [0, 0, 1, 1], [], []>} : vector<64x8xbf16>, vector<8x32xbf16>, vector<64x32xf32> -> vector<64x32xf32>
    %221 = arith.addf %213, %220 : vector<64x32xf32>
    %c0_189 = arith.constant 0 : index
    %c0_190 = arith.constant 0 : index
    %222 = vector.load %arg13[%c0_189, %c0_190] : memref<1x32xf32, #tpu.memory_space<vmem>>, vector<1x32xf32>
    %223 = vector.broadcast %222 : vector<1x32xf32> to vector<64x32xf32>
    %224 = arith.mulf %221, %223 : vector<64x32xf32>
    %c0_191 = arith.constant 0 : index
    %c0_192 = arith.constant 0 : index
    %225 = vector.load %arg14[%c0_191, %c0_192] : memref<1x32xf32, #tpu.memory_space<vmem>>, vector<1x32xf32>
    %226 = vector.broadcast %225 : vector<1x32xf32> to vector<64x32xf32>
    %227 = arith.addf %224, %226 : vector<64x32xf32>
    %cst_193 = arith.constant 0.000000e+00 : f32
    %228 = vector.broadcast %cst_193 : f32 to vector<64x32xf32>
    %229 = arith.maximumf %227, %228 : vector<64x32xf32>
    %230 = vector.extract_strided_slice %1 {offsets = [0, 0], sizes = [64, 16], strides = [1, 1]} : vector<256x16xbf16> to vector<64x16xbf16>
    %c0_194 = arith.constant 0 : index
    %c0_195 = arith.constant 0 : index
    %231 = vector.load %arg15[%c0_194, %c0_195] : memref<16x32xbf16, #tpu.memory_space<vmem>>, vector<16x32xbf16>
    %cst_196 = arith.constant dense<0.000000e+00> : vector<64x32xf32>
    %232 = tpu.matmul %230, %231, %cst_196 {dimension_numbers = #tpu.dot_dimension_numbers<[1], [0], [0], [1], [0, 0, 1, 1], [], []>} : vector<64x16xbf16>, vector<16x32xbf16>, vector<64x32xf32> -> vector<64x32xf32>
    %c0_197 = arith.constant 0 : index
    %c0_198 = arith.constant 0 : index
    %233 = vector.load %arg16[%c0_197, %c0_198] : memref<1x32xf32, #tpu.memory_space<vmem>>, vector<1x32xf32>
    %234 = vector.broadcast %233 : vector<1x32xf32> to vector<64x32xf32>
    %235 = arith.mulf %232, %234 : vector<64x32xf32>
    %c0_199 = arith.constant 0 : index
    %c0_200 = arith.constant 0 : index
    %236 = vector.load %arg17[%c0_199, %c0_200] : memref<1x32xf32, #tpu.memory_space<vmem>>, vector<1x32xf32>
    %237 = vector.broadcast %236 : vector<1x32xf32> to vector<64x32xf32>
    %238 = arith.addf %235, %237 : vector<64x32xf32>
    %239 = arith.addf %229, %238 : vector<64x32xf32>
    %cst_201 = arith.constant 0.000000e+00 : f32
    %240 = vector.broadcast %cst_201 : f32 to vector<64x32xf32>
    %241 = arith.maximumf %239, %240 : vector<64x32xf32>
    %c0_202 = arith.constant 0 : index
    %c0_203 = arith.constant 0 : index
    %c0_204 = arith.constant 0 : index
    %242 = vector.load %arg18[%c0_202, %c0_203, %c0_204] : memref<1x64x32xf32, #tpu.memory_space<vmem>>, vector<1x64x32xf32>
    %243 = vector.shape_cast %242 : vector<1x64x32xf32> to vector<64x32xf32>
    %244 = vector.shape_cast %241 : vector<64x32xf32> to vector<1x64x32xf32>
    tpu.vector_store %arg18[%c0_202, %c0_203, %c0_204], %244 {strides = array<i32>} : memref<1x64x32xf32, #tpu.memory_space<vmem>>, vector<1x64x32xf32>,
    return
  }
  func.func @transform_0(%arg0: i32) -> (i32, i32, i32) {
    %c0_i32 = arith.constant 0 : i32
    %c0_i32_0 = arith.constant 0 : i32
    %c0_i32_1 = arith.constant 0 : i32
    return %arg0, %c0_i32, %c0_i32_0 : i32, i32, i32
  }
  func.func @transform_1(%arg0: i32) -> (i32, i32) {
    %c0_i32 = arith.constant 0 : i32
    %c0_i32_0 = arith.constant 0 : i32
    %c0_i32_1 = arith.constant 0 : i32
    return %c0_i32, %c0_i32_0 : i32, i32
  }
  func.func @transform_2(%arg0: i32) -> (i32, i32) {
    %c0_i32 = arith.constant 0 : i32
    %c0_i32_0 = arith.constant 0 : i32
    %c0_i32_1 = arith.constant 0 : i32
    return %c0_i32, %c0_i32_0 : i32, i32
  }
  func.func @transform_3(%arg0: i32) -> (i32, i32) {
    %c0_i32 = arith.constant 0 : i32
    %c0_i32_0 = arith.constant 0 : i32
    %c0_i32_1 = arith.constant 0 : i32
    return %c0_i32, %c0_i32_0 : i32, i32
  }
  func.func @transform_4(%arg0: i32) -> (i32, i32, i32, i32) {
    %c0_i32 = arith.constant 0 : i32
    %c0_i32_0 = arith.constant 0 : i32
    %c0_i32_1 = arith.constant 0 : i32
    %c0_i32_2 = arith.constant 0 : i32
    %c0_i32_3 = arith.constant 0 : i32
    return %c0_i32, %c0_i32_0, %c0_i32_1, %c0_i32_2 : i32, i32, i32, i32
  }
  func.func @transform_5(%arg0: i32) -> (i32, i32) {
    %c0_i32 = arith.constant 0 : i32
    %c0_i32_0 = arith.constant 0 : i32
    %c0_i32_1 = arith.constant 0 : i32
    return %c0_i32, %c0_i32_0 : i32, i32
  }
  func.func @transform_6(%arg0: i32) -> (i32, i32) {
    %c0_i32 = arith.constant 0 : i32
    %c0_i32_0 = arith.constant 0 : i32
    %c0_i32_1 = arith.constant 0 : i32
    return %c0_i32, %c0_i32_0 : i32, i32
  }
  func.func @transform_7(%arg0: i32) -> (i32, i32, i32) {
    %c0_i32 = arith.constant 0 : i32
    %c0_i32_0 = arith.constant 0 : i32
    %c0_i32_1 = arith.constant 0 : i32
    %c0_i32_2 = arith.constant 0 : i32
    return %c0_i32, %c0_i32_0, %c0_i32_1 : i32, i32, i32
  }
  func.func @transform_8(%arg0: i32) -> (i32, i32) {
    %c0_i32 = arith.constant 0 : i32
    %c0_i32_0 = arith.constant 0 : i32
    %c0_i32_1 = arith.constant 0 : i32
    return %c0_i32, %c0_i32_0 : i32, i32
  }
  func.func @transform_9(%arg0: i32) -> (i32, i32) {
    %c0_i32 = arith.constant 0 : i32
    %c0_i32_0 = arith.constant 0 : i32
    %c0_i32_1 = arith.constant 0 : i32
    return %c0_i32, %c0_i32_0 : i32, i32
  }
  func.func @transform_10(%arg0: i32) -> (i32, i32) {
    %c0_i32 = arith.constant 0 : i32
    %c0_i32_0 = arith.constant 0 : i32
    %c0_i32_1 = arith.constant 0 : i32
    return %c0_i32, %c0_i32_0 : i32, i32
  }
  func.func @transform_11(%arg0: i32) -> (i32, i32, i32) {
    %c0_i32 = arith.constant 0 : i32
    %c0_i32_0 = arith.constant 0 : i32
    %c0_i32_1 = arith.constant 0 : i32
    %c0_i32_2 = arith.constant 0 : i32
    return %c0_i32, %c0_i32_0, %c0_i32_1 : i32, i32, i32
  }
  func.func @transform_12(%arg0: i32) -> (i32, i32) {
    %c0_i32 = arith.constant 0 : i32
    %c0_i32_0 = arith.constant 0 : i32
    %c0_i32_1 = arith.constant 0 : i32
    return %c0_i32, %c0_i32_0 : i32, i32
  }
  func.func @transform_13(%arg0: i32) -> (i32, i32) {
    %c0_i32 = arith.constant 0 : i32
    %c0_i32_0 = arith.constant 0 : i32
    %c0_i32_1 = arith.constant 0 : i32
    return %c0_i32, %c0_i32_0 : i32, i32
  }
  func.func @transform_14(%arg0: i32) -> (i32, i32) {
    %c0_i32 = arith.constant 0 : i32
    %c0_i32_0 = arith.constant 0 : i32
    %c0_i32_1 = arith.constant 0 : i32
    return %c0_i32, %c0_i32_0 : i32, i32
  }
  func.func @transform_15(%arg0: i32) -> (i32, i32) {
    %c0_i32 = arith.constant 0 : i32
    %c0_i32_0 = arith.constant 0 : i32
    %c0_i32_1 = arith.constant 0 : i32
    return %c0_i32, %c0_i32_0 : i32, i32
  }
  func.func @transform_16(%arg0: i32) -> (i32, i32) {
    %c0_i32 = arith.constant 0 : i32
    %c0_i32_0 = arith.constant 0 : i32
    %c0_i32_1 = arith.constant 0 : i32
    return %c0_i32, %c0_i32_0 : i32, i32
  }
  func.func @transform_17(%arg0: i32) -> (i32, i32, i32) {
    %c0_i32 = arith.constant 0 : i32
    %c0_i32_0 = arith.constant 0 : i32
    %c0_i32_1 = arith.constant 0 : i32
    return %arg0, %c0_i32, %c0_i32_0 : i32, i32, i32
  }
}

</mosaic_0001>

<llo_original>
// kernel: tpu_custom_call.1
$region0: #{tpu_custom_call.1}
  #allocation0 [shape = 'u32[]', space=smem, size = 0x4, offset = 0x4, fixed_abs, tag = 'smem constant byte address 0x4 - core index']
  #allocation1 [shape = 'u32[144,128]{1,0:T(1,128)}', space=vmem, size = 0x12000, scoped, tag = 'internal scratch']
  #allocation2 [shape = 'f32[4,9,9,16]{3,2,1,0:T(8,128)}', space=vmem, size = 0x48000, scoped, tag = 'scratch operand']
  %s0 = inlined_call_operand.vmem [shape: bf16[2,256,16], index: 0, kind: input, shape index: {}]
  %s1 = inlined_call_operand.vmem [shape: bf16[16,16], index: 1, kind: input, shape index: {}]
  %s2 = inlined_call_operand.vmem [shape: f32[1,16], index: 2, kind: input, shape index: {}]
  %s3 = inlined_call_operand.vmem [shape: f32[1,16], index: 3, kind: input, shape index: {}]
  %s4 = inlined_call_operand.vmem [shape: bf16[2,9,8,8], index: 4, kind: input, shape index: {}]
  %s5 = inlined_call_operand.vmem [shape: f32[1,16], index: 5, kind: input, shape index: {}]
  %s6 = inlined_call_operand.vmem [shape: f32[1,16], index: 6, kind: input, shape index: {}]
  %s7 = inlined_call_operand.vmem [shape: bf16[2,8,4], index: 7, kind: input, shape index: {}]
  %s8 = inlined_call_operand.vmem [shape: f32[1,4], index: 8, kind: input, shape index: {}]
  %s9 = inlined_call_operand.vmem [shape: bf16[4,16], index: 9, kind: input, shape index: {}]
  %s10 = inlined_call_operand.vmem [shape: f32[1,16], index: 10, kind: input, shape index: {}]
  %s11 = inlined_call_operand.vmem [shape: bf16[2,8,32], index: 11, kind: input, shape index: {}]
  %s12 = inlined_call_operand.vmem [shape: f32[1,32], index: 12, kind: input, shape index: {}]
  %s13 = inlined_call_operand.vmem [shape: f32[1,32], index: 13, kind: input, shape index: {}]
  %s14 = inlined_call_operand.vmem [shape: bf16[16,32], index: 14, kind: input, shape index: {}]
  %s15 = inlined_call_operand.vmem [shape: f32[1,32], index: 15, kind: input, shape index: {}]
  %s16 = inlined_call_operand.vmem [shape: f32[1,32], index: 16, kind: input, shape index: {}]
  %s17 = inlined_call_operand.vmem [shape: f32[2,64,32], index: 17, kind: output, shape index: {}]
  %s18 = sld [smem:[#allocation0]]
  $region101: #{tpu_custom_call.1} parent=0
    _
  %s20 = ssub.s32 1, %s18
  %s21 = scalar_select 0, %s20, %s18
  loop: start=0, step=1, limit=4
  $region2: #{tpu_custom_call.1} parent=0 // loop_pre_header
    _
  $region3: #{tpu_custom_call.1} parent=0 // loop_header
    %s23 = sphi 0, %s27
    %p24 = scmp.ge.s32.totalorder %s23, 4
    %s33 = sphi 0, %s35
    %s36 = sphi 0, %s33
    %s37 = sphi 0, %s36
    %s53 = sphi 0, %s37
    %s57 = sphi 0, %s57
    %s59 = sphi 0, %s57
    %s60 = sphi 0, %s59
    %s74 = sphi 0, %s60
    %s78 = sphi 0, %s78
    %s80 = sphi 0, %s78
    %s81 = sphi 0, %s80
    %s95 = sphi 0, %s81
    %s99 = sphi 0, %s99
    %s101 = sphi 0, %s99
    %s102 = sphi 0, %s101
    %s116 = sphi 0, %s102
    %s120 = sphi 0, %s120
    %s122 = sphi 0, %s120
    %s123 = sphi 0, %s122
    %s137 = sphi 0, %s123
    %s141 = sphi 0, %s141
    %s143 = sphi 0, %s141
    %s144 = sphi 0, %s143
    %s158 = sphi 0, %s144
    %s162 = sphi 0, %s162
    %s164 = sphi 0, %s162
    %s165 = sphi 0, %s164
    %s179 = sphi 0, %s165
    %s183 = sphi 0, %s183
    %s185 = sphi 0, %s183
    %s186 = sphi 0, %s185
    %s200 = sphi 0, %s186
    %s204 = sphi 0, %s204
    %s206 = sphi 0, %s204
    %s207 = sphi 0, %s206
    %s221 = sphi 0, %s207
    %s225 = sphi 0, %s225
    %s227 = sphi 0, %s225
    %s228 = sphi 0, %s227
    %s242 = sphi 0, %s228
    %s246 = sphi 0, %s246
    %s248 = sphi 0, %s246
    %s249 = sphi 0, %s248
    %s263 = sphi 0, %s249
    %s267 = sphi 0, %s267
    %s269 = sphi 0, %s267
    %s270 = sphi 0, %s269
    %s284 = sphi 0, %s270
    %s288 = sphi 0, %s288
    %s290 = sphi 0, %s288
    %s291 = sphi 0, %s290
    %s305 = sphi 0, %s291
    %s309 = sphi 0, %s309
    %s311 = sphi 0, %s309
    %s312 = sphi 0, %s311
    %s326 = sphi 0, %s312
    %s330 = sphi 0, %s330
    %s332 = sphi 0, %s330
    %s333 = sphi 0, %s332
    %s347 = sphi 0, %s333
    %s351 = sphi 0, %s351
    %s353 = sphi 0, %s351
    %s354 = sphi 0, %s353
    %s368 = sphi 0, %s354
    %s372 = sphi 0, %s372
    %s374 = sphi 0, %s372
    %s375 = sphi 0, %s374
    %s389 = sphi 0, %s375
    %s395 = sphi 0, %s397
    %s398 = sphi 0, %s395
    %s399 = sphi 0, %s398
    %s415 = sphi 0, %s399
  $region4: #{tpu_custom_call.1} parent=0 // loop_header_branch
    %26 = sbr.rel (%p24) target = $region8
  $region5: #{tpu_custom_call.1} parent=0 // loop_body
    %s28 = ssub.s32 %s23, 1
    %s29 = ssub.s32 %s23, 2
    %s30 = sadd.s32 %s23, 1
    %s31 = ssub.s32 %s23, %s30
    %p32 = scmp.eq.s32.totalorder %s31, 0
    %s34 = sadd.s32 %s33, 1
    %s35 = scalar_select %p32, %s33, %s34
    %p38 = pneg %p32
    %p39 = scmp.eq.s32.totalorder %s23, 1
    %p40 = por %p38, %p39
    %p41 = scmp.ne.s32.totalorder %s33, %s36
    %p42 = scmp.eq.s32.totalorder %s23, 0
    %p43 = por %p41, %p42
    %p44 = scmp.ne.s32.totalorder %s33, %s36
    %p45 = scmp.eq.s32.totalorder %s28, 1
    %p46 = por %p44, %p45
    %p47 = scmp.ne.s32.totalorder %s36, %s37
    %p48 = scmp.eq.s32.totalorder %s28, 0
    %p49 = por %p47, %p48
    %p50 = scmp.ne.s32.totalorder %s36, %s37
    %p51 = scmp.eq.s32.totalorder %s29, 1
    %p52 = por %p50, %p51
    %p54 = scmp.ne.s32.totalorder %s37, %s53
    %p55 = scmp.eq.s32.totalorder %s29, 0
    %p56 = por %p54, %p55
    %s58 = sadd.s32 %s57, 1
    %p61 = scmp.eq.s32.totalorder %s23, 1
    %p62 = scmp.ne.s32.totalorder %s57, %s59
    %p63 = scmp.eq.s32.totalorder %s23, 0
    %p64 = por %p62, %p63
    %p65 = scmp.ne.s32.totalorder %s57, %s59
    %p66 = scmp.eq.s32.totalorder %s28, 1
    %p67 = por %p65, %p66
    %p68 = scmp.ne.s32.totalorder %s59, %s60
    %p69 = scmp.eq.s32.totalorder %s28, 0
    %p70 = por %p68, %p69
    %p71 = scmp.ne.s32.totalorder %s59, %s60
    %p72 = scmp.eq.s32.totalorder %s29, 1
    %p73 = por %p71, %p72
    %p75 = scmp.ne.s32.totalorder %s60, %s74
    %p76 = scmp.eq.s32.totalorder %s29, 0
    %p77 = por %p75, %p76
    %s79 = sadd.s32 %s78, 1
    %p82 = scmp.eq.s32.totalorder %s23, 1
    %p83 = scmp.ne.s32.totalorder %s78, %s80
    %p84 = scmp.eq.s32.totalorder %s23, 0
    %p85 = por %p83, %p84
    %p86 = scmp.ne.s32.totalorder %s78, %s80
    %p87 = scmp.eq.s32.totalorder %s28, 1
    %p88 = por %p86, %p87
    %p89 = scmp.ne.s32.totalorder %s80, %s81
    %p90 = scmp.eq.s32.totalorder %s28, 0
    %p91 = por %p89, %p90
    %p92 = scmp.ne.s32.totalorder %s80, %s81
    %p93 = scmp.eq.s32.totalorder %s29, 1
    %p94 = por %p92, %p93
    %p96 = scmp.ne.s32.totalorder %s81, %s95
    %p97 = scmp.eq.s32.totalorder %s29, 0
    %p98 = por %p96, %p97
    %s100 = sadd.s32 %s99, 1
    %p103 = scmp.eq.s32.totalorder %s23, 1
    %p104 = scmp.ne.s32.totalorder %s99, %s101
    %p105 = scmp.eq.s32.totalorder %s23, 0
    %p106 = por %p104, %p105
    %p107 = scmp.ne.s32.totalorder %s99, %s101
    %p108 = scmp.eq.s32.totalorder %s28, 1
    %p109 = por %p107, %p108
    %p110 = scmp.ne.s32.totalorder %s101, %s102
    %p111 = scmp.eq.s32.totalorder %s28, 0
    %p112 = por %p110, %p111
    %p113 = scmp.ne.s32.totalorder %s101, %s102
    %p114 = scmp.eq.s32.totalorder %s29, 1
    %p115 = por %p113, %p114
    %p117 = scmp.ne.s32.totalorder %s102, %s116
    %p118 = scmp.eq.s32.totalorder %s29, 0
    %p119 = por %p117, %p118
    %s121 = sadd.s32 %s120, 1
    %p124 = scmp.eq.s32.totalorder %s23, 1
    %p125 = scmp.ne.s32.totalorder %s120, %s122
    %p126 = scmp.eq.s32.totalorder %s23, 0
    %p127 = por %p125, %p126
    %p128 = scmp.ne.s32.totalorder %s120, %s122
    %p129 = scmp.eq.s32.totalorder %s28, 1
    %p130 = por %p128, %p129
    %p131 = scmp.ne.s32.totalorder %s122, %s123
    %p132 = scmp.eq.s32.totalorder %s28, 0
    %p133 = por %p131, %p132
    %p134 = scmp.ne.s32.totalorder %s122, %s123
    %p135 = scmp.eq.s32.totalorder %s29, 1
    %p136 = por %p134, %p135
    %p138 = scmp.ne.s32.totalorder %s123, %s137
    %p139 = scmp.eq.s32.totalorder %s29, 0
    %p140 = por %p138, %p139
    %s142 = sadd.s32 %s141, 1
    %p145 = scmp.eq.s32.totalorder %s23, 1
    %p146 = scmp.ne.s32.totalorder %s141, %s143
    %p147 = scmp.eq.s32.totalorder %s23, 0
    %p148 = por %p146, %p147
    %p149 = scmp.ne.s32.totalorder %s141, %s143
    %p150 = scmp.eq.s32.totalorder %s28, 1
    %p151 = por %p149, %p150
    %p152 = scmp.ne.s32.totalorder %s143, %s144
    %p153 = scmp.eq.s32.totalorder %s28, 0
    %p154 = por %p152, %p153
    %p155 = scmp.ne.s32.totalorder %s143, %s144
    %p156 = scmp.eq.s32.totalorder %s29, 1
    %p157 = por %p155, %p156
    %p159 = scmp.ne.s32.totalorder %s144, %s158
    %p160 = scmp.eq.s32.totalorder %s29, 0
    %p161 = por %p159, %p160
    %s163 = sadd.s32 %s162, 1
    %p166 = scmp.eq.s32.totalorder %s23, 1
    %p167 = scmp.ne.s32.totalorder %s162, %s164
    %p168 = scmp.eq.s32.totalorder %s23, 0
    %p169 = por %p167, %p168
    %p170 = scmp.ne.s32.totalorder %s162, %s164
    %p171 = scmp.eq.s32.totalorder %s28, 1
    %p172 = por %p170, %p171
    %p173 = scmp.ne.s32.totalorder %s164, %s165
    %p174 = scmp.eq.s32.totalorder %s28, 0
    %p175 = por %p173, %p174
    %p176 = scmp.ne.s32.totalorder %s164, %s165
    %p177 = scmp.eq.s32.totalorder %s29, 1
    %p178 = por %p176, %p177
    %p180 = scmp.ne.s32.totalorder %s165, %s179
    %p181 = scmp.eq.s32.totalorder %s29, 0
    %p182 = por %p180, %p181
    %s184 = sadd.s32 %s183, 1
    %p187 = scmp.eq.s32.totalorder %s23, 1
    %p188 = scmp.ne.s32.totalorder %s183, %s185
    %p189 = scmp.eq.s32.totalorder %s23, 0
    %p190 = por %p188, %p189
    %p191 = scmp.ne.s32.totalorder %s183, %s185
    %p192 = scmp.eq.s32.totalorder %s28, 1
    %p193 = por %p191, %p192
    %p194 = scmp.ne.s32.totalorder %s185, %s186
    %p195 = scmp.eq.s32.totalorder %s28, 0
    %p196 = por %p194, %p195
    %p197 = scmp.ne.s32.totalorder %s185, %s186
    %p198 = scmp.eq.s32.totalorder %s29, 1
    %p199 = por %p197, %p198
    %p201 = scmp.ne.s32.totalorder %s186, %s200
    %p202 = scmp.eq.s32.totalorder %s29, 0
    %p203 = por %p201, %p202
    %s205 = sadd.s32 %s204, 1
    %p208 = scmp.eq.s32.totalorder %s23, 1
    %p209 = scmp.ne.s32.totalorder %s204, %s206
    %p210 = scmp.eq.s32.totalorder %s23, 0
    %p211 = por %p209, %p210
    %p212 = scmp.ne.s32.totalorder %s204, %s206
    %p213 = scmp.eq.s32.totalorder %s28, 1
    %p214 = por %p212, %p213
    %p215 = scmp.ne.s32.totalorder %s206, %s207
    %p216 = scmp.eq.s32.totalorder %s28, 0
    %p217 = por %p215, %p216
    %p218 = scmp.ne.s32.totalorder %s206, %s207
    %p219 = scmp.eq.s32.totalorder %s29, 1
    %p220 = por %p218, %p219
    %p222 = scmp.ne.s32.totalorder %s207, %s221
    %p223 = scmp.eq.s32.totalorder %s29, 0
    %p224 = por %p222, %p223
    %s226 = sadd.s32 %s225, 1
    %p229 = scmp.eq.s32.totalorder %s23, 1
    %p230 = scmp.ne.s32.totalorder %s225, %s227
    %p231 = scmp.eq.s32.totalorder %s23, 0
    %p232 = por %p230, %p231
    %p233 = scmp.ne.s32.totalorder %s225, %s227
    %p234 = scmp.eq.s32.totalorder %s28, 1
    %p235 = por %p233, %p234
    %p236 = scmp.ne.s32.totalorder %s227, %s228
    %p237 = scmp.eq.s32.totalorder %s28, 0
    %p238 = por %p236, %p237
    %p239 = scmp.ne.s32.totalorder %s227, %s228
    %p240 = scmp.eq.s32.totalorder %s29, 1
    %p241 = por %p239, %p240
    %p243 = scmp.ne.s32.totalorder %s228, %s242
    %p244 = scmp.eq.s32.totalorder %s29, 0
    %p245 = por %p243, %p244
    %s247 = sadd.s32 %s246, 1
    %p250 = scmp.eq.s32.totalorder %s23, 1
    %p251 = scmp.ne.s32.totalorder %s246, %s248
    %p252 = scmp.eq.s32.totalorder %s23, 0
    %p253 = por %p251, %p252
    %p254 = scmp.ne.s32.totalorder %s246, %s248
    %p255 = scmp.eq.s32.totalorder %s28, 1
    %p256 = por %p254, %p255
    %p257 = scmp.ne.s32.totalorder %s248, %s249
    %p258 = scmp.eq.s32.totalorder %s28, 0
    %p259 = por %p257, %p258
    %p260 = scmp.ne.s32.totalorder %s248, %s249
    %p261 = scmp.eq.s32.totalorder %s29, 1
    %p262 = por %p260, %p261
    %p264 = scmp.ne.s32.totalorder %s249, %s263
    %p265 = scmp.eq.s32.totalorder %s29, 0
    %p266 = por %p264, %p265
    %s268 = sadd.s32 %s267, 1
    %p271 = scmp.eq.s32.totalorder %s23, 1
    %p272 = scmp.ne.s32.totalorder %s267, %s269
    %p273 = scmp.eq.s32.totalorder %s23, 0
    %p274 = por %p272, %p273
    %p275 = scmp.ne.s32.totalorder %s267, %s269
    %p276 = scmp.eq.s32.totalorder %s28, 1
    %p277 = por %p275, %p276
    %p278 = scmp.ne.s32.totalorder %s269, %s270
    %p279 = scmp.eq.s32.totalorder %s28, 0
    %p280 = por %p278, %p279
    %p281 = scmp.ne.s32.totalorder %s269, %s270
    %p282 = scmp.eq.s32.totalorder %s29, 1
    %p283 = por %p281, %p282
    %p285 = scmp.ne.s32.totalorder %s270, %s284
    %p286 = scmp.eq.s32.totalorder %s29, 0
    %p287 = por %p285, %p286
    %s289 = sadd.s32 %s288, 1
    %p292 = scmp.eq.s32.totalorder %s23, 1
    %p293 = scmp.ne.s32.totalorder %s288, %s290
    %p294 = scmp.eq.s32.totalorder %s23, 0
    %p295 = por %p293, %p294
    %p296 = scmp.ne.s32.totalorder %s288, %s290
    %p297 = scmp.eq.s32.totalorder %s28, 1
    %p298 = por %p296, %p297
    %p299 = scmp.ne.s32.totalorder %s290, %s291
    %p300 = scmp.eq.s32.totalorder %s28, 0
    %p301 = por %p299, %p300
    %p302 = scmp.ne.s32.totalorder %s290, %s291
    %p303 = scmp.eq.s32.totalorder %s29, 1
    %p304 = por %p302, %p303
    %p306 = scmp.ne.s32.totalorder %s291, %s305
    %p307 = scmp.eq.s32.totalorder %s29, 0
    %p308 = por %p306, %p307
    %s310 = sadd.s32 %s309, 1
    %p313 = scmp.eq.s32.totalorder %s23, 1
    %p314 = scmp.ne.s32.totalorder %s309, %s311
    %p315 = scmp.eq.s32.totalorder %s23, 0
    %p316 = por %p314, %p315
    %p317 = scmp.ne.s32.totalorder %s309, %s311
    %p318 = scmp.eq.s32.totalorder %s28, 1
    %p319 = por %p317, %p318
    %p320 = scmp.ne.s32.totalorder %s311, %s312
    %p321 = scmp.eq.s32.totalorder %s28, 0
    %p322 = por %p320, %p321
    %p323 = scmp.ne.s32.totalorder %s311, %s312
    %p324 = scmp.eq.s32.totalorder %s29, 1
    %p325 = por %p323, %p324
    %p327 = scmp.ne.s32.totalorder %s312, %s326
    %p328 = scmp.eq.s32.totalorder %s29, 0
    %p329 = por %p327, %p328
    %s331 = sadd.s32 %s330, 1
    %p334 = scmp.eq.s32.totalorder %s23, 1
    %p335 = scmp.ne.s32.totalorder %s330, %s332
    %p336 = scmp.eq.s32.totalorder %s23, 0
    %p337 = por %p335, %p336
    %p338 = scmp.ne.s32.totalorder %s330, %s332
    %p339 = scmp.eq.s32.totalorder %s28, 1
    %p340 = por %p338, %p339
    %p341 = scmp.ne.s32.totalorder %s332, %s333
    %p342 = scmp.eq.s32.totalorder %s28, 0
    %p343 = por %p341, %p342
    %p344 = scmp.ne.s32.totalorder %s332, %s333
    %p345 = scmp.eq.s32.totalorder %s29, 1
    %p346 = por %p344, %p345
    %p348 = scmp.ne.s32.totalorder %s333, %s347
    %p349 = scmp.eq.s32.totalorder %s29, 0
    %p350 = por %p348, %p349
    %s352 = sadd.s32 %s351, 1
    %p355 = scmp.eq.s32.totalorder %s23, 1
    %p356 = scmp.ne.s32.totalorder %s351, %s353
    %p357 = scmp.eq.s32.totalorder %s23, 0
    %p358 = por %p356, %p357
    %p359 = scmp.ne.s32.totalorder %s351, %s353
    %p360 = scmp.eq.s32.totalorder %s28, 1
    %p361 = por %p359, %p360
    %p362 = scmp.ne.s32.totalorder %s353, %s354
    %p363 = scmp.eq.s32.totalorder %s28, 0
    %p364 = por %p362, %p363
    %p365 = scmp.ne.s32.totalorder %s353, %s354
    %p366 = scmp.eq.s32.totalorder %s29, 1
    %p367 = por %p365, %p366
    %p369 = scmp.ne.s32.totalorder %s354, %s368
    %p370 = scmp.eq.s32.totalorder %s29, 0
    %p371 = por %p369, %p370
    %s373 = sadd.s32 %s372, 1
    %p376 = scmp.eq.s32.totalorder %s23, 1
    %p377 = scmp.ne.s32.totalorder %s372, %s374
    %p378 = scmp.eq.s32.totalorder %s23, 0
    %p379 = por %p377, %p378
    %p380 = scmp.ne.s32.totalorder %s372, %s374
    %p381 = scmp.eq.s32.totalorder %s28, 1
    %p382 = por %p380, %p381
    %p383 = scmp.ne.s32.totalorder %s374, %s375
    %p384 = scmp.eq.s32.totalorder %s28, 0
    %p385 = por %p383, %p384
    %p386 = scmp.ne.s32.totalorder %s374, %s375
    %p387 = scmp.eq.s32.totalorder %s29, 1
    %p388 = por %p386, %p387
    %p390 = scmp.ne.s32.totalorder %s375, %s389
    %p391 = scmp.eq.s32.totalorder %s29, 0
    %p392 = por %p390, %p391
    %s393 = ssub.s32 %s23, %s30
    %p394 = scmp.eq.s32.totalorder %s393, 0
    %s396 = sadd.s32 %s395, 1
    %s397 = scalar_select %p394, %s395, %s396
    %p400 = pneg %p394
    %p401 = scmp.eq.s32.totalorder %s23, 1
    %p402 = por %p400, %p401
    %p403 = scmp.ne.s32.totalorder %s395, %s398
    %p404 = scmp.eq.s32.totalorder %s23, 0
    %p405 = por %p403, %p404
    %p406 = scmp.ne.s32.totalorder %s395, %s398
    %p407 = scmp.eq.s32.totalorder %s28, 1
    %p408 = por %p406, %p407
    %p409 = scmp.ne.s32.totalorder %s398, %s399
    %p410 = scmp.eq.s32.totalorder %s28, 0
    %p411 = por %p409, %p410
    %p412 = scmp.ne.s32.totalorder %s398, %s399
    %p413 = scmp.eq.s32.totalorder %s29, 1
    %p414 = por %p412, %p413
    %p416 = scmp.ne.s32.totalorder %s399, %s415
    %p417 = scmp.eq.s32.totalorder %s29, 0
    %p418 = por %p416, %p417
    %p419 = scmp.le.s32.totalorder 1, %s23
    %p420 = scmp.lt.s32.totalorder %s23, 3
    %p421 = pnand %p419, %p420
    %p422 = pneg %p421
    // Predicated region
    $region9: #{tpu_custom_call.1} parent=5 // pred_check
      _
    $region10: #{tpu_custom_call.1} parent=5 // pred_check_branch
      %424 = sbr.rel (%p421) target = $region12
    $region11: #{tpu_custom_call.1} parent=5 // pred_region
      %s425 = ssub.s32 %s23, 1
      // Predicated region
      $region13: #{tpu_custom_call.1} parent=11 // pred_check
        %p426 = pneg %p70
      $region14: #{tpu_custom_call.1} parent=11 // pred_check_branch
        %428 = sbr.rel (%p426) target = $region16
      $region15: #{tpu_custom_call.1} parent=11 // pred_region
        _
      $region16: #{tpu_custom_call.1} parent=11 // pred_fallthru
        _
      // Predicated region
      $region17: #{tpu_custom_call.1} parent=11 // pred_check
        %p429 = pneg %p91
      $region18: #{tpu_custom_call.1} parent=11 // pred_check_branch
        %431 = sbr.rel (%p429) target = $region20
      $region19: #{tpu_custom_call.1} parent=11 // pred_region
        _
      $region20: #{tpu_custom_call.1} parent=11 // pred_fallthru
        _
      // Predicated region
      $region21: #{tpu_custom_call.1} parent=11 // pred_check
        %p432 = pneg %p112
      $region22: #{tpu_custom_call.1} parent=11 // pred_check_branch
        %434 = sbr.rel (%p432) target = $region24
      $region23: #{tpu_custom_call.1} parent=11 // pred_region
        _
      $region24: #{tpu_custom_call.1} parent=11 // pred_fallthru
        _
      // Predicated region
      $region25: #{tpu_custom_call.1} parent=11 // pred_check
        %p435 = pneg %p133
      $region26: #{tpu_custom_call.1} parent=11 // pred_check_branch
        %437 = sbr.rel (%p435) target = $region28
      $region27: #{tpu_custom_call.1} parent=11 // pred_region
        _
      $region28: #{tpu_custom_call.1} parent=11 // pred_fallthru
        _
      // Predicated region
      $region29: #{tpu_custom_call.1} parent=11 // pred_check
        %p438 = pneg %p154
      $region30: #{tpu_custom_call.1} parent=11 // pred_check_branch
        %440 = sbr.rel (%p438) target = $region32
      $region31: #{tpu_custom_call.1} parent=11 // pred_region
        _
      $region32: #{tpu_custom_call.1} parent=11 // pred_fallthru
        _
      // Predicated region
      $region33: #{tpu_custom_call.1} parent=11 // pred_check
        %p441 = pneg %p175
      $region34: #{tpu_custom_call.1} parent=11 // pred_check_branch
        %443 = sbr.rel (%p441) target = $region36
      $region35: #{tpu_custom_call.1} parent=11 // pred_region
        _
      $region36: #{tpu_custom_call.1} parent=11 // pred_fallthru
        _
      // Predicated region
      $region37: #{tpu_custom_call.1} parent=11 // pred_check
        %p444 = pneg %p196
      $region38: #{tpu_custom_call.1} parent=11 // pred_check_branch
        %446 = sbr.rel (%p444) target = $region40
      $region39: #{tpu_custom_call.1} parent=11 // pred_region
        _
      $region40: #{tpu_custom_call.1} parent=11 // pred_fallthru
        _
      // Predicated region
      $region41: #{tpu_custom_call.1} parent=11 // pred_check
        %p447 = pneg %p217
      $region42: #{tpu_custom_call.1} parent=11 // pred_check_branch
        %449 = sbr.rel (%p447) target = $region44
      $region43: #{tpu_custom_call.1} parent=11 // pred_region
        _
      $region44: #{tpu_custom_call.1} parent=11 // pred_fallthru
        _
      // Predicated region
      $region45: #{tpu_custom_call.1} parent=11 // pred_check
        %p450 = pneg %p238
      $region46: #{tpu_custom_call.1} parent=11 // pred_check_branch
        %452 = sbr.rel (%p450) target = $region48
      $region47: #{tpu_custom_call.1} parent=11 // pred_region
        _
      $region48: #{tpu_custom_call.1} parent=11 // pred_fallthru
        _
      // Predicated region
      $region49: #{tpu_custom_call.1} parent=11 // pred_check
        %p453 = pneg %p259
      $region50: #{tpu_custom_call.1} parent=11 // pred_check_branch
        %455 = sbr.rel (%p453) target = $region52
      $region51: #{tpu_custom_call.1} parent=11 // pred_region
        _
      $region52: #{tpu_custom_call.1} parent=11 // pred_fallthru
        _
      // Predicated region
      $region53: #{tpu_custom_call.1} parent=11 // pred_check
        %p456 = pneg %p280
      $region54: #{tpu_custom_call.1} parent=11 // pred_check_branch
        %458 = sbr.rel (%p456) target = $region56
      $region55: #{tpu_custom_call.1} parent=11 // pred_region
        _
      $region56: #{tpu_custom_call.1} parent=11 // pred_fallthru
        _
      // Predicated region
      $region57: #{tpu_custom_call.1} parent=11 // pred_check
        %p459 = pneg %p301
      $region58: #{tpu_custom_call.1} parent=11 // pred_check_branch
        %461 = sbr.rel (%p459) target = $region60
      $region59: #{tpu_custom_call.1} parent=11 // pred_region
        _
      $region60: #{tpu_custom_call.1} parent=11 // pred_fallthru
        _
      // Predicated region
      $region61: #{tpu_custom_call.1} parent=11 // pred_check
        %p462 = pneg %p322
      $region62: #{tpu_custom_call.1} parent=11 // pred_check_branch
        %464 = sbr.rel (%p462) target = $region64
      $region63: #{tpu_custom_call.1} parent=11 // pred_region
        _
      $region64: #{tpu_custom_call.1} parent=11 // pred_fallthru
        _
      // Predicated region
      $region65: #{tpu_custom_call.1} parent=11 // pred_check
        %p465 = pneg %p343
      $region66: #{tpu_custom_call.1} parent=11 // pred_check_branch
        %467 = sbr.rel (%p465) target = $region68
      $region67: #{tpu_custom_call.1} parent=11 // pred_region
        _
      $region68: #{tpu_custom_call.1} parent=11 // pred_fallthru
        _
      // Predicated region
      $region69: #{tpu_custom_call.1} parent=11 // pred_check
        %p468 = pneg %p364
      $region70: #{tpu_custom_call.1} parent=11 // pred_check_branch
        %470 = sbr.rel (%p468) target = $region72
      $region71: #{tpu_custom_call.1} parent=11 // pred_region
        _
      $region72: #{tpu_custom_call.1} parent=11 // pred_fallthru
        _
      // Predicated region
      $region73: #{tpu_custom_call.1} parent=11 // pred_check
        %p471 = pneg %p385
      $region74: #{tpu_custom_call.1} parent=11 // pred_check_branch
        %473 = sbr.rel (%p471) target = $region76
      $region75: #{tpu_custom_call.1} parent=11 // pred_region
        _
      $region76: #{tpu_custom_call.1} parent=11 // pred_fallthru
        _
    $region12: #{tpu_custom_call.1} parent=5 // pred_fallthru
      _
    %p474 = scmp.lt.s32.totalorder %s23, 2
    // Predicated region
    $region77: #{tpu_custom_call.1} parent=5 // pred_check
      %p475 = pneg %p474
    $region78: #{tpu_custom_call.1} parent=5 // pred_check_branch
      %477 = sbr.rel (%p475) target = $region80
    $region79: #{tpu_custom_call.1} parent=5 // pred_region
      // Predicated region
      $region81: #{tpu_custom_call.1} parent=79 // pred_check
        %p478 = pneg %p43
      $region82: #{tpu_custom_call.1} parent=79 // pred_check_branch
        %480 = sbr.rel (%p478) target = $region84
      $region83: #{tpu_custom_call.1} parent=79 // pred_region
        %p481 = scmp.lt.s32.totalorder %s23, 1
        %s482 = scalar_select %p481, %s23, 1
        %s483 = smul.addr %s482, 32
        %s484 = smul.addr %s483, 4
        %s485 = scalar_lea.vmem %s0, %s484
      $region84: #{tpu_custom_call.1} parent=79 // pred_fallthru
        _
    $region80: #{tpu_custom_call.1} parent=5 // pred_fallthru
      _
    %p486 = scmp.le.s32.totalorder 1, %s23
    %p487 = scmp.lt.s32.totalorder %s23, 3
    %p488 = pnand %p486, %p487
    %p489 = pneg %p488
    // Predicated region
    $region85: #{tpu_custom_call.1} parent=5 // pred_check
      _
    $region86: #{tpu_custom_call.1} parent=5 // pred_check_branch
      %491 = sbr.rel (%p488) target = $region88
    $region87: #{tpu_custom_call.1} parent=5 // pred_region
      %s492 = ssub.s32 %s23, 1
      %p493 = scmp.lt.s32.totalorder %s28, 1
      %s494 = scalar_select %p493, %s28, 1
      %s495 = smul.addr %s494, 32
      %s496 = smul.addr %s495, 4
      %s497 = scalar_lea.vmem %s0, %s496
      %p498 = pneg %p49
      %p499 = pneg %p46
      %p500 = pneg %p70
      %p501 = pneg %p67
      %p502 = pneg %p91
      %p503 = pneg %p88
      %p504 = pneg %p112
      %p505 = pneg %p109
      %p506 = pneg %p133
      %p507 = pneg %p130
      %p508 = pneg %p154
      %p509 = pneg %p151
      %p510 = pneg %p175
      %p511 = pneg %p172
      %p512 = pneg %p196
      %p513 = pneg %p193
      %p514 = pneg %p217
      %p515 = pneg %p214
      %p516 = pneg %p238
      %p517 = pneg %p235
      %p518 = pneg %p259
      %p519 = pneg %p256
      %p520 = pneg %p280
      %p521 = pneg %p277
      %p522 = pneg %p301
      %p523 = pneg %p298
      %p524 = pneg %p322
      %p525 = pneg %p319
      %p526 = pneg %p343
      %p527 = pneg %p340
      %p528 = pneg %p364
      %p529 = pneg %p361
      %p530 = pneg %p385
      %p531 = pneg %p382
      %p532 = pneg %p411
      %p533 = pneg %p408
      %p534 = scmp.lt.s32.totalorder %s28, 1
      %s535 = scalar_select %p534, %s28, 1
      %s536 = smul.addr %s535, 8
      %s537 = smul.addr %s536, 8
      %s538 = scalar_lea.vmem %s17, %s537
      %p539 = scmp.lt.s32.totalorder %s28, 1
      %s540 = scalar_select %p539, %s28, 1
      %s541 = smul.addr %s540, 32
      %s542 = smul.addr %s541, 4
      %s543 = scalar_lea.vmem %s0, %s542
      %p544 = scmp.lt.s32.totalorder %s28, 1
      %s545 = scalar_select %p544, %s28, 1
      %s546 = smul.addr %s545, 8
      %s547 = smul.addr %s546, 8
      %s548 = scalar_lea.vmem %s17, %s547
      %v550 = vld [vmem:[%s543] sm:$0xf]
      %v551 = vld [vmem:[%s543 + $0x4] sm:$0xf]
      %v552 = vld [vmem:[%s543 + $0x8] sm:$0xf]
      %v553 = vld [vmem:[%s543 + $0xc] sm:$0xf]
      %v554 = vld [vmem:[%s543 + $0x10] sm:$0xf]
      %v555 = vld [vmem:[%s543 + $0x14] sm:$0xf]
      %v556 = vld [vmem:[%s543 + $0x18] sm:$0xf]
      %v557 = vld [vmem:[%s543 + $0x1c] sm:$0xf]
      %v558 = vld [vmem:[%s543 + $0x20] sm:$0xf]
      %v559 = vld [vmem:[%s543 + $0x24] sm:$0xf]
      %v560 = vld [vmem:[%s543 + $0x28] sm:$0xf]
      %v561 = vld [vmem:[%s543 + $0x2c] sm:$0xf]
      %v562 = vld [vmem:[%s543 + $0x30] sm:$0xf]
      %v563 = vld [vmem:[%s543 + $0x34] sm:$0xf]
      %v564 = vld [vmem:[%s543 + $0x38] sm:$0xf]
      %v565 = vld [vmem:[%s543 + $0x3c] sm:$0xf]
      %v566 = vld [vmem:[%s543 + $0x40] sm:$0xf]
      %v567 = vld [vmem:[%s543 + $0x44] sm:$0xf]
      %v568 = vld [vmem:[%s543 + $0x48] sm:$0xf]
      %v569 = vld [vmem:[%s543 + $0x4c] sm:$0xf]
      %v570 = vld [vmem:[%s543 + $0x50] sm:$0xf]
      %v571 = vld [vmem:[%s543 + $0x54] sm:$0xf]
      %v572 = vld [vmem:[%s543 + $0x58] sm:$0xf]
      %v573 = vld [vmem:[%s543 + $0x5c] sm:$0xf]
      %v574 = vld [vmem:[%s543 + $0x60] sm:$0xf]
      %v575 = vld [vmem:[%s543 + $0x64] sm:$0xf]
      %v576 = vld [vmem:[%s543 + $0x68] sm:$0xf]
      %v577 = vld [vmem:[%s543 + $0x6c] sm:$0xf]
      %v578 = vld [vmem:[%s543 + $0x70] sm:$0xf]
      %v579 = vld [vmem:[%s543 + $0x74] sm:$0xf]
      %v580 = vld [vmem:[%s543 + $0x78] sm:$0xf]
      %v581 = vld [vmem:[%s543 + $0x7c] sm:$0xf]
      %v582 = vld [vmem:[%s1] sm:$0xf]
      %v583 = vld [vmem:[%s1 + $0x4] sm:$0xf]
      %v616 = vunpack.c.l.b16 %v550
      %v617 = vunpack.c.l.b16 %v551
      %v618 = vunpack.c.l.b16 %v552
      %v619 = vunpack.c.l.b16 %v553
      %v620 = vunpack.c.l.b16 %v554
      %v621 = vunpack.c.l.b16 %v555
      %v622 = vunpack.c.l.b16 %v556
      %v623 = vunpack.c.l.b16 %v557
      %v624 = vunpack.c.l.b16 %v558
      %v625 = vunpack.c.l.b16 %v559
      %v626 = vunpack.c.l.b16 %v560
      %v627 = vunpack.c.l.b16 %v561
      %v628 = vunpack.c.l.b16 %v562
      %v629 = vunpack.c.l.b16 %v563
      %v630 = vunpack.c.l.b16 %v564
      %v631 = vunpack.c.l.b16 %v565
      %v632 = vunpack.c.l.b16 %v566
      %v633 = vunpack.c.l.b16 %v567
      %v634 = vunpack.c.l.b16 %v568
      %v635 = vunpack.c.l.b16 %v569
      %v636 = vunpack.c.l.b16 %v570
      %v637 = vunpack.c.l.b16 %v571
      %v638 = vunpack.c.l.b16 %v572
      %v639 = vunpack.c.l.b16 %v573
      %v640 = vunpack.c.l.b16 %v574
      %v641 = vunpack.c.l.b16 %v575
      %v642 = vunpack.c.l.b16 %v576
      %v643 = vunpack.c.l.b16 %v577
      %v644 = vunpack.c.l.b16 %v578
      %v645 = vunpack.c.l.b16 %v579
      %v646 = vunpack.c.l.b16 %v580
      %v647 = vunpack.c.l.b16 %v581
      %v648 = vpack.c.b16 %v617, %v616
      %v649 = vpack.c.b16 %v619, %v618
      %v650 = vpack.c.b16 %v621, %v620
      %v651 = vpack.c.b16 %v623, %v622
      %v652 = vpack.c.b16 %v625, %v624
      %v653 = vpack.c.b16 %v627, %v626
      %v654 = vpack.c.b16 %v629, %v628
      %v655 = vpack.c.b16 %v631, %v630
      %v656 = vpack.c.b16 %v633, %v632
      %v657 = vpack.c.b16 %v635, %v634
      %v658 = vpack.c.b16 %v637, %v636
      %v659 = vpack.c.b16 %v639, %v638
      %v660 = vpack.c.b16 %v641, %v640
      %v661 = vpack.c.b16 %v643, %v642
      %v662 = vpack.c.b16 %v645, %v644
      %v663 = vpack.c.b16 %v647, %v646
      %v666 = vunpack.c.l.b16 %v582
      %v667 = vunpack.c.l.b16 %v583
      %v668 = vpack.c.b16 %v667, %v666
      %vm670 = vcmask 130048
      %v672 = vsel %vm670, %v648, 0
      %v675 = vsel %vm670, %v649, 0
      %v678 = vsel %vm670, %v650, 0
      %v681 = vsel %vm670, %v651, 0
      %v684 = vsel %vm670, %v652, 0
      %v687 = vsel %vm670, %v653, 0
      %v690 = vsel %vm670, %v654, 0
      %v693 = vsel %vm670, %v655, 0
      %v696 = vsel %vm670, %v656, 0
      %v699 = vsel %vm670, %v657, 0
      %v702 = vsel %vm670, %v658, 0
      %v705 = vsel %vm670, %v659, 0
      %v708 = vsel %vm670, %v660, 0
      %v711 = vsel %vm670, %v661, 0
      %v714 = vsel %vm670, %v662, 0
      %v717 = vsel %vm670, %v663, 0
      %719 = vmatprep.subr.bf16.mxu0 0
      %720 = vmatpush1.bf16.msra.mxu0 0
      %721 = vmatprep.subr.bf16.mxu0 0
      %722 = vmatpush1.bf16.msra.mxu0 0
      %723 = vmatprep.subr.bf16.mxu0 0
      %724 = vmatpush1.bf16.msra.mxu0 0
      %725 = vmatprep.subr.bf16.mxu0 0
      %726 = vmatpush1.bf16.msra.mxu0 0
      %727 = vmatprep.subr.bf16.mxu0 0
      %728 = vmatpush1.bf16.msra.mxu0 0
      %729 = vmatprep.subr.bf16.mxu0 0
      %730 = vmatpush1.bf16.msra.mxu0 0
      %731 = vmatprep.subr.bf16.mxu0 0
      %732 = vmatpush1.bf16.msra.mxu0 0
      %733 = vmatprep.subr.bf16.mxu0 0
      %734 = vmatpush1.bf16.msra.mxu0 %v668
      %735 = vmatprep.subr.bf16.mxu0 0
      %736 = vmatpush2.bf16.msra.mxu0 0
      %737 = vmatprep.subr.bf16.mxu0 0
      %738 = vmatpush2.bf16.msra.mxu0 0
      %739 = vmatprep.subr.bf16.mxu0 0
      %740 = vmatpush2.bf16.msra.mxu0 0
      %741 = vmatprep.subr.bf16.mxu0 0
      %742 = vmatpush2.bf16.msra.mxu0 0
      %743 = vmatprep.subr.bf16.mxu0 0
      %744 = vmatpush2.bf16.msra.mxu0 0
      %745 = vmatprep.subr.bf16.mxu0 0
      %746 = vmatpush2.bf16.msra.mxu0 0
      %747 = vmatprep.subr.bf16.mxu0 0
      %748 = vmatpush2.bf16.msra.mxu0 0
      %749 = vmatprep.subr.bf16.mxu0 0
      %750 = vmatpush2.bf16.msra.mxu0 0
      %751 = vmatprep.mubr.bf16.mxu0 0
      %752 = vmatmul.mubr.bf16.gmra.mxu0 %v672
      %v753 = vpop.f32.mrf.mxu0
      %v754 = vadd.f32 0.0, %v753
      %v755 = vpop.f32.mrf.mxu0
      %v756 = vpop.f32.mrf.mxu0
      %v757 = vadd.f32 0.0, %v756
      %v758 = vpop.f32.mrf.mxu0
      %759 = vmatprep.mubr.bf16.mxu0 0
      %760 = vmatmul.mubr.bf16.gmra.mxu0 %v675
      %v761 = vpop.f32.mrf.mxu0
      %v762 = vadd.f32 0.0, %v761
      %v763 = vpop.f32.mrf.mxu0
      %v764 = vpop.f32.mrf.mxu0
      %v765 = vadd.f32 0.0, %v764
      %v766 = vpop.f32.mrf.mxu0
      %767 = vmatprep.mubr.bf16.mxu0 0
      %768 = vmatmul.mubr.bf16.gmra.mxu0 %v678
      %v769 = vpop.f32.mrf.mxu0
      %v770 = vadd.f32 0.0, %v769
      %v771 = vpop.f32.mrf.mxu0
      %v772 = vpop.f32.mrf.mxu0
      %v773 = vadd.f32 0.0, %v772
      %v774 = vpop.f32.mrf.mxu0
      %775 = vmatprep.mubr.bf16.mxu0 0
      %776 = vmatmul.mubr.bf16.gmra.mxu0 %v681
      %v777 = vpop.f32.mrf.mxu0
      %v778 = vadd.f32 0.0, %v777
      %v779 = vpop.f32.mrf.mxu0
      %v780 = vpop.f32.mrf.mxu0
      %v781 = vadd.f32 0.0, %v780
      %v782 = vpop.f32.mrf.mxu0
      %783 = vmatprep.mubr.bf16.mxu0 0
      %784 = vmatmul.mubr.bf16.gmra.mxu0 %v684
      %v785 = vpop.f32.mrf.mxu0
      %v786 = vadd.f32 0.0, %v785
      %v787 = vpop.f32.mrf.mxu0
      %v788 = vpop.f32.mrf.mxu0
      %v789 = vadd.f32 0.0, %v788
      %v790 = vpop.f32.mrf.mxu0
      %791 = vmatprep.mubr.bf16.mxu0 0
      %792 = vmatmul.mubr.bf16.gmra.mxu0 %v687
      %v793 = vpop.f32.mrf.mxu0
      %v794 = vadd.f32 0.0, %v793
      %v795 = vpop.f32.mrf.mxu0
      %v796 = vpop.f32.mrf.mxu0
      %v797 = vadd.f32 0.0, %v796
      %v798 = vpop.f32.mrf.mxu0
      %799 = vmatprep.mubr.bf16.mxu0 0
      %800 = vmatmul.mubr.bf16.gmra.mxu0 %v690
      %v801 = vpop.f32.mrf.mxu0
      %v802 = vadd.f32 0.0, %v801
      %v803 = vpop.f32.mrf.mxu0
      %v804 = vpop.f32.mrf.mxu0
      %v805 = vadd.f32 0.0, %v804
      %v806 = vpop.f32.mrf.mxu0
      %807 = vmatprep.mubr.bf16.mxu0 0
      %808 = vmatmul.mubr.bf16.gmra.mxu0 %v693
      %v809 = vpop.f32.mrf.mxu0
      %v810 = vadd.f32 0.0, %v809
      %v811 = vpop.f32.mrf.mxu0
      %v812 = vpop.f32.mrf.mxu0
      %v813 = vadd.f32 0.0, %v812
      %v814 = vpop.f32.mrf.mxu0
      %815 = vmatprep.mubr.bf16.mxu0 0
      %816 = vmatmul.mubr.bf16.gmra.mxu0 %v696
      %v817 = vpop.f32.mrf.mxu0
      %v818 = vadd.f32 0.0, %v817
      %v819 = vpop.f32.mrf.mxu0
      %v820 = vpop.f32.mrf.mxu0
      %v821 = vadd.f32 0.0, %v820
      %v822 = vpop.f32.mrf.mxu0
      %823 = vmatprep.mubr.bf16.mxu0 0
      %824 = vmatmul.mubr.bf16.gmra.mxu0 %v699
      %v825 = vpop.f32.mrf.mxu0
      %v826 = vadd.f32 0.0, %v825
      %v827 = vpop.f32.mrf.mxu0
      %v828 = vpop.f32.mrf.mxu0
      %v829 = vadd.f32 0.0, %v828
      %v830 = vpop.f32.mrf.mxu0
      %831 = vmatprep.mubr.bf16.mxu0 0
      %832 = vmatmul.mubr.bf16.gmra.mxu0 %v702
      %v833 = vpop.f32.mrf.mxu0
      %v834 = vadd.f32 0.0, %v833
      %v835 = vpop.f32.mrf.mxu0
      %v836 = vpop.f32.mrf.mxu0
      %v837 = vadd.f32 0.0, %v836
      %v838 = vpop.f32.mrf.mxu0
      %839 = vmatprep.mubr.bf16.mxu0 0
      %840 = vmatmul.mubr.bf16.gmra.mxu0 %v705
      %v841 = vpop.f32.mrf.mxu0
      %v842 = vadd.f32 0.0, %v841
      %v843 = vpop.f32.mrf.mxu0
      %v844 = vpop.f32.mrf.mxu0
      %v845 = vadd.f32 0.0, %v844
      %v846 = vpop.f32.mrf.mxu0
      %847 = vmatprep.mubr.bf16.mxu0 0
      %848 = vmatmul.mubr.bf16.gmra.mxu0 %v708
      %v849 = vpop.f32.mrf.mxu0
      %v850 = vadd.f32 0.0, %v849
      %v851 = vpop.f32.mrf.mxu0
      %v852 = vpop.f32.mrf.mxu0
      %v853 = vadd.f32 0.0, %v852
      %v854 = vpop.f32.mrf.mxu0
      %855 = vmatprep.mubr.bf16.mxu0 0
      %856 = vmatmul.mubr.bf16.gmra.mxu0 %v711
      %v857 = vpop.f32.mrf.mxu0
      %v858 = vadd.f32 0.0, %v857
      %v859 = vpop.f32.mrf.mxu0
      %v860 = vpop.f32.mrf.mxu0
      %v861 = vadd.f32 0.0, %v860
      %v862 = vpop.f32.mrf.mxu0
      %863 = vmatprep.mubr.bf16.mxu0 0
      %864 = vmatmul.mubr.bf16.gmra.mxu0 %v714
      %v865 = vpop.f32.mrf.mxu0
      %v866 = vadd.f32 0.0, %v865
      %v867 = vpop.f32.mrf.mxu0
      %v868 = vpop.f32.mrf.mxu0
      %v869 = vadd.f32 0.0, %v868
      %v870 = vpop.f32.mrf.mxu0
      %871 = vmatprep.mubr.bf16.mxu0 0
      %872 = vmatmul.mubr.bf16.gmra.mxu0 %v717
      %v873 = vpop.f32.mrf.mxu0
      %v874 = vadd.f32 0.0, %v873
      %v875 = vpop.f32.mrf.mxu0
      %v876 = vpop.f32.mrf.mxu0
      %v877 = vadd.f32 0.0, %v876
      %v878 = vpop.f32.mrf.mxu0
      %879 = vdwg.mxu0
      %v880 = vld [vmem:[%s2] sm:$0x1]
      %v882 = vlaneseq
      %v883 = vshrl.u32 %v882, 7
      %v884 = vsub.s32 0, %v883
      %v885 = vrot.slane %v880, %v884
      %v887 = vmul.f32 %v754, %v885
      %v888 = vmul.f32 %v757, %v885
      %v889 = vmul.f32 %v762, %v885
      %v890 = vmul.f32 %v765, %v885
      %v891 = vmul.f32 %v770, %v885
      %v892 = vmul.f32 %v773, %v885
      %v893 = vmul.f32 %v778, %v885
      %v894 = vmul.f32 %v781, %v885
      %v895 = vmul.f32 %v786, %v885
      %v896 = vmul.f32 %v789, %v885
      %v897 = vmul.f32 %v794, %v885
      %v898 = vmul.f32 %v797, %v885
      %v899 = vmul.f32 %v802, %v885
      %v900 = vmul.f32 %v805, %v885
      %v901 = vmul.f32 %v810, %v885
      %v902 = vmul.f32 %v813, %v885
      %v903 = vmul.f32 %v818, %v885
      %v904 = vmul.f32 %v821, %v885
      %v905 = vmul.f32 %v826, %v885
      %v906 = vmul.f32 %v829, %v885
      %v907 = vmul.f32 %v834, %v885
      %v908 = vmul.f32 %v837, %v885
      %v909 = vmul.f32 %v842, %v885
      %v910 = vmul.f32 %v845, %v885
      %v911 = vmul.f32 %v850, %v885
      %v912 = vmul.f32 %v853, %v885
      %v913 = vmul.f32 %v858, %v885
      %v914 = vmul.f32 %v861, %v885
      %v915 = vmul.f32 %v866, %v885
      %v916 = vmul.f32 %v869, %v885
      %v917 = vmul.f32 %v874, %v885
      %v918 = vmul.f32 %v877, %v885
      %v919 = vld [vmem:[%s3] sm:$0x1]
      %v921 = vlaneseq
      %v922 = vshrl.u32 %v921, 7
      %v923 = vsub.s32 0, %v922
      %v924 = vrot.slane %v919, %v923
      %v926 = vadd.f32 %v887, %v924
      %v927 = vadd.f32 %v888, %v924
      %v928 = vadd.f32 %v889, %v924
      %v929 = vadd.f32 %v890, %v924
      %v930 = vadd.f32 %v891, %v924
      %v931 = vadd.f32 %v892, %v924
      %v932 = vadd.f32 %v893, %v924
      %v933 = vadd.f32 %v894, %v924
      %v934 = vadd.f32 %v895, %v924
      %v935 = vadd.f32 %v896, %v924
      %v936 = vadd.f32 %v897, %v924
      %v937 = vadd.f32 %v898, %v924
      %v938 = vadd.f32 %v899, %v924
      %v939 = vadd.f32 %v900, %v924
      %v940 = vadd.f32 %v901, %v924
      %v941 = vadd.f32 %v902, %v924
      %v942 = vadd.f32 %v903, %v924
      %v943 = vadd.f32 %v904, %v924
      %v944 = vadd.f32 %v905, %v924
      %v945 = vadd.f32 %v906, %v924
      %v946 = vadd.f32 %v907, %v924
      %v947 = vadd.f32 %v908, %v924
      %v948 = vadd.f32 %v909, %v924
      %v949 = vadd.f32 %v910, %v924
      %v950 = vadd.f32 %v911, %v924
      %v951 = vadd.f32 %v912, %v924
      %v952 = vadd.f32 %v913, %v924
      %v953 = vadd.f32 %v914, %v924
      %v954 = vadd.f32 %v915, %v924
      %v955 = vadd.f32 %v916, %v924
      %v956 = vadd.f32 %v917, %v924
      %v957 = vadd.f32 %v918, %v924
      %v958 = vmax.f32 %v926, 0.0
      %v959 = vmax.f32 %v927, 0.0
      %v960 = vmax.f32 %v928, 0.0
      %v961 = vmax.f32 %v929, 0.0
      %v962 = vmax.f32 %v930, 0.0
      %v963 = vmax.f32 %v931, 0.0
      %v964 = vmax.f32 %v932, 0.0
      %v965 = vmax.f32 %v933, 0.0
      %v966 = vmax.f32 %v934, 0.0
      %v967 = vmax.f32 %v935, 0.0
      %v968 = vmax.f32 %v936, 0.0
      %v969 = vmax.f32 %v937, 0.0
      %v970 = vmax.f32 %v938, 0.0
      %v971 = vmax.f32 %v939, 0.0
      %v972 = vmax.f32 %v940, 0.0
      %v973 = vmax.f32 %v941, 0.0
      %v974 = vmax.f32 %v942, 0.0
      %v975 = vmax.f32 %v943, 0.0
      %v976 = vmax.f32 %v944, 0.0
      %v977 = vmax.f32 %v945, 0.0
      %v978 = vmax.f32 %v946, 0.0
      %v979 = vmax.f32 %v947, 0.0
      %v980 = vmax.f32 %v948, 0.0
      %v981 = vmax.f32 %v949, 0.0
      %v982 = vmax.f32 %v950, 0.0
      %v983 = vmax.f32 %v951, 0.0
      %v984 = vmax.f32 %v952, 0.0
      %v985 = vmax.f32 %v953, 0.0
      %v986 = vmax.f32 %v954, 0.0
      %v987 = vmax.f32 %v955, 0.0
      %v988 = vmax.f32 %v956, 0.0
      %v989 = vmax.f32 %v957, 0.0
      %990 = vst.msk [vmem:[#allocation2] sm:$0xff] %vm670, 0.0
      %vm991 = vcmask 122880
      %992 = vst.msk [vmem:[#allocation2 + $0x8] sm:$0x1] %vm991, 0.0
      %993 = vst.msk [vmem:[#allocation2 + $0x10] sm:$0xff] %vm670, 0.0
      %994 = vst.msk [vmem:[#allocation2 + $0x18] sm:$0x1] %vm991, 0.0
      %995 = vst.msk [vmem:[#allocation2 + $0x20] sm:$0xff] %vm670, 0.0
      %996 = vst.msk [vmem:[#allocation2 + $0x28] sm:$0x1] %vm991, 0.0
      %997 = vst.msk [vmem:[#allocation2 + $0x30] sm:$0xff] %vm670, 0.0
      %998 = vst.msk [vmem:[#allocation2 + $0x38] sm:$0x1] %vm991, 0.0
      %999 = vst.msk [vmem:[#allocation2 + $0x40] sm:$0xff] %vm670, 0.0
      %1000 = vst.msk [vmem:[#allocation2 + $0x48] sm:$0x1] %vm991, 0.0
      %1001 = vst.msk [vmem:[#allocation2 + $0x50] sm:$0xff] %vm670, 0.0
      %1002 = vst.msk [vmem:[#allocation2 + $0x58] sm:$0x1] %vm991, 0.0
      %1003 = vst.msk [vmem:[#allocation2 + $0x60] sm:$0xff] %vm670, 0.0
      %1004 = vst.msk [vmem:[#allocation2 + $0x68] sm:$0x1] %vm991, 0.0
      %1005 = vst.msk [vmem:[#allocation2 + $0x70] sm:$0xff] %vm670, 0.0
      %1006 = vst.msk [vmem:[#allocation2 + $0x78] sm:$0x1] %vm991, 0.0
      %1007 = vst.msk [vmem:[#allocation2 + $0x80] sm:$0xff] %vm670, 0.0
      %1008 = vst.msk [vmem:[#allocation2 + $0x88] sm:$0x1] %vm991, 0.0
      %1009 = vst.msk [vmem:[#allocation2 + $0x90] sm:$0xff] %vm670, 0.0
      %1010 = vst.msk [vmem:[#allocation2 + $0x98] sm:$0x1] %vm991, 0.0
      %1011 = vst.msk [vmem:[#allocation2 + $0xa0] sm:$0xff] %vm670, 0.0
      %1012 = vst.msk [vmem:[#allocation2 + $0xa8] sm:$0x1] %vm991, 0.0
      %1013 = vst.msk [vmem:[#allocation2 + $0xb0] sm:$0xff] %vm670, 0.0
      %1014 = vst.msk [vmem:[#allocation2 + $0xb8] sm:$0x1] %vm991, 0.0
      %1015 = vst.msk [vmem:[#allocation2 + $0xc0] sm:$0xff] %vm670, 0.0
      %1016 = vst.msk [vmem:[#allocation2 + $0xc8] sm:$0x1] %vm991, 0.0
      %1017 = vst.msk [vmem:[#allocation2 + $0xd0] sm:$0xff] %vm670, 0.0
      %1018 = vst.msk [vmem:[#allocation2 + $0xd8] sm:$0x1] %vm991, 0.0
      %1019 = vst.msk [vmem:[#allocation2 + $0xe0] sm:$0xff] %vm670, 0.0
      %1020 = vst.msk [vmem:[#allocation2 + $0xe8] sm:$0x1] %vm991, 0.0
      %1021 = vst.msk [vmem:[#allocation2 + $0xf0] sm:$0xff] %vm670, 0.0
      %1022 = vst.msk [vmem:[#allocation2 + $0xf8] sm:$0x1] %vm991, 0.0
      %1023 = vst.msk [vmem:[#allocation2 + $0x100] sm:$0xff] %vm670, 0.0
      %1024 = vst.msk [vmem:[#allocation2 + $0x108] sm:$0x1] %vm991, 0.0
      %1025 = vst.msk [vmem:[#allocation2 + $0x110] sm:$0xff] %vm670, 0.0
      %1026 = vst.msk [vmem:[#allocation2 + $0x118] sm:$0x1] %vm991, 0.0
      %1027 = vst.msk [vmem:[#allocation2 + $0x120] sm:$0xff] %vm670, 0.0
      %1028 = vst.msk [vmem:[#allocation2 + $0x128] sm:$0x1] %vm991, 0.0
      %1029 = vst.msk [vmem:[#allocation2 + $0x130] sm:$0xff] %vm670, 0.0
      %1030 = vst.msk [vmem:[#allocation2 + $0x138] sm:$0x1] %vm991, 0.0
      %1031 = vst.msk [vmem:[#allocation2 + $0x140] sm:$0xff] %vm670, 0.0
      %1032 = vst.msk [vmem:[#allocation2 + $0x148] sm:$0x1] %vm991, 0.0
      %1033 = vst.msk [vmem:[#allocation2 + $0x150] sm:$0xff] %vm670, 0.0
      %1034 = vst.msk [vmem:[#allocation2 + $0x158] sm:$0x1] %vm991, 0.0
      %1035 = vst.msk [vmem:[#allocation2 + $0x160] sm:$0xff] %vm670, 0.0
      %1036 = vst.msk [vmem:[#allocation2 + $0x168] sm:$0x1] %vm991, 0.0
      %1037 = vst.msk [vmem:[#allocation2 + $0x170] sm:$0xff] %vm670, 0.0
      %1038 = vst.msk [vmem:[#allocation2 + $0x178] sm:$0x1] %vm991, 0.0
      %1039 = vst.msk [vmem:[#allocation2 + $0x180] sm:$0xff] %vm670, 0.0
      %1040 = vst.msk [vmem:[#allocation2 + $0x188] sm:$0x1] %vm991, 0.0
      %1041 = vst.msk [vmem:[#allocation2 + $0x190] sm:$0xff] %vm670, 0.0
      %1042 = vst.msk [vmem:[#allocation2 + $0x198] sm:$0x1] %vm991, 0.0
      %1043 = vst.msk [vmem:[#allocation2 + $0x1a0] sm:$0xff] %vm670, 0.0
      %1044 = vst.msk [vmem:[#allocation2 + $0x1a8] sm:$0x1] %vm991, 0.0
      %1045 = vst.msk [vmem:[#allocation2 + $0x1b0] sm:$0xff] %vm670, 0.0
      %1046 = vst.msk [vmem:[#allocation2 + $0x1b8] sm:$0x1] %vm991, 0.0
      %1047 = vst.msk [vmem:[#allocation2 + $0x1c0] sm:$0xff] %vm670, 0.0
      %1048 = vst.msk [vmem:[#allocation2 + $0x1c8] sm:$0x1] %vm991, 0.0
      %1049 = vst.msk [vmem:[#allocation2 + $0x1d0] sm:$0xff] %vm670, 0.0
      %1050 = vst.msk [vmem:[#allocation2 + $0x1d8] sm:$0x1] %vm991, 0.0
      %1051 = vst.msk [vmem:[#allocation2 + $0x1e0] sm:$0xff] %vm670, 0.0
      %1052 = vst.msk [vmem:[#allocation2 + $0x1e8] sm:$0x1] %vm991, 0.0
      %1053 = vst.msk [vmem:[#allocation2 + $0x1f0] sm:$0xff] %vm670, 0.0
      %1054 = vst.msk [vmem:[#allocation2 + $0x1f8] sm:$0x1] %vm991, 0.0
      %1055 = vst.msk [vmem:[#allocation2 + $0x200] sm:$0xff] %vm670, 0.0
      %1056 = vst.msk [vmem:[#allocation2 + $0x208] sm:$0x1] %vm991, 0.0
      %1057 = vst.msk [vmem:[#allocation2 + $0x210] sm:$0xff] %vm670, 0.0
      %1058 = vst.msk [vmem:[#allocation2 + $0x218] sm:$0x1] %vm991, 0.0
      %1059 = vst.msk [vmem:[#allocation2 + $0x220] sm:$0xff] %vm670, 0.0
      %1060 = vst.msk [vmem:[#allocation2 + $0x228] sm:$0x1] %vm991, 0.0
      %1061 = vst.msk [vmem:[#allocation2 + $0x230] sm:$0xff] %vm670, 0.0
      %1062 = vst.msk [vmem:[#allocation2 + $0x238] sm:$0x1] %vm991, 0.0
      %s1063 = scalar_lea.vmem [#allocation2], 432
      %1064 = vst.msk [vmem:[%s1063] sm:$0xff] %vm670, %v958
      %1065 = vst.msk [vmem:[%s1063 + $0x10] sm:$0xff] %vm670, %v959
      %1066 = vst.msk [vmem:[%s1063 + $0x20] sm:$0xff] %vm670, %v960
      %1067 = vst.msk [vmem:[%s1063 + $0x30] sm:$0xff] %vm670, %v961
      %1068 = vst.msk [vmem:[%s1063 + $0x40] sm:$0xff] %vm670, %v962
      %1069 = vst.msk [vmem:[%s1063 + $0x50] sm:$0xff] %vm670, %v963
      %1070 = vst.msk [vmem:[%s1063 + $0x60] sm:$0xff] %vm670, %v964
      %1071 = vst.msk [vmem:[%s1063 + $0x70] sm:$0xff] %vm670, %v965
      %s1072 = scalar_lea.vmem [#allocation2], 288
      %1073 = vst.msk [vmem:[%s1072 + $0x1] sm:$0xff] %vm670, %v966
      %1074 = vst.msk [vmem:[%s1072 + $0x11] sm:$0xff] %vm670, %v967
      %1075 = vst.msk [vmem:[%s1072 + $0x21] sm:$0xff] %vm670, %v968
      %1076 = vst.msk [vmem:[%s1072 + $0x31] sm:$0xff] %vm670, %v969
      %1077 = vst.msk [vmem:[%s1072 + $0x41] sm:$0xff] %vm670, %v970
      %1078 = vst.msk [vmem:[%s1072 + $0x51] sm:$0xff] %vm670, %v971
      %1079 = vst.msk [vmem:[%s1072 + $0x61] sm:$0xff] %vm670, %v972
      %1080 = vst.msk [vmem:[%s1072 + $0x71] sm:$0xff] %vm670, %v973
      %s1081 = scalar_lea.vmem [#allocation2], 160
      %1082 = vst.msk [vmem:[%s1081] sm:$0xff] %vm670, %v974
      %1083 = vst.msk [vmem:[%s1081 + $0x10] sm:$0xff] %vm670, %v975
      %1084 = vst.msk [vmem:[%s1081 + $0x20] sm:$0xff] %vm670, %v976
      %1085 = vst.msk [vmem:[%s1081 + $0x30] sm:$0xff] %vm670, %v977
      %1086 = vst.msk [vmem:[%s1081 + $0x40] sm:$0xff] %vm670, %v978
      %1087 = vst.msk [vmem:[%s1081 + $0x50] sm:$0xff] %vm670, %v979
      %1088 = vst.msk [vmem:[%s1081 + $0x60] sm:$0xff] %vm670, %v980
      %1089 = vst.msk [vmem:[%s1081 + $0x70] sm:$0xff] %vm670, %v981
      %s1090 = scalar_lea.vmem [#allocation2], 16
      %1091 = vst.msk [vmem:[%s1090 + $0x1] sm:$0xff] %vm670, %v982
      %1092 = vst.msk [vmem:[%s1090 + $0x11] sm:$0xff] %vm670, %v983
      %1093 = vst.msk [vmem:[%s1090 + $0x21] sm:$0xff] %vm670, %v984
      %1094 = vst.msk [vmem:[%s1090 + $0x31] sm:$0xff] %vm670, %v985
      %1095 = vst.msk [vmem:[%s1090 + $0x41] sm:$0xff] %vm670, %v986
      %1096 = vst.msk [vmem:[%s1090 + $0x51] sm:$0xff] %vm670, %v987
      %1097 = vst.msk [vmem:[%s1090 + $0x61] sm:$0xff] %vm670, %v988
      %1098 = vst.msk [vmem:[%s1090 + $0x71] sm:$0xff] %vm670, %v989
      %v1099 = vld [vmem:[#allocation2] sm:$0xff]
      %v1100 = vld [vmem:[#allocation2 + $0x10] sm:$0xff]
      %v1101 = vld [vmem:[#allocation2 + $0x20] sm:$0xff]
      %v1102 = vld [vmem:[#allocation2 + $0x30] sm:$0xff]
      %v1103 = vld [vmem:[#allocation2 + $0x40] sm:$0xff]
      %v1104 = vld [vmem:[#allocation2 + $0x50] sm:$0xff]
      %v1105 = vld [vmem:[#allocation2 + $0x60] sm:$0xff]
      %v1106 = vld [vmem:[#allocation2 + $0x70] sm:$0xff]
      %v1107 = vpack.c.bf16 %v1100, %v1099
      %v1108 = vpack.c.bf16 %v1102, %v1101
      %v1109 = vpack.c.bf16 %v1104, %v1103
      %v1110 = vpack.c.bf16 %v1106, %v1105
      %s1111 = scalar_lea.vmem [#allocation2], 144
      %v1112 = vld [vmem:[%s1111] sm:$0xff]
      %v1113 = vld [vmem:[%s1111 + $0x10] sm:$0xff]
      %v1114 = vld [vmem:[%s1111 + $0x20] sm:$0xff]
      %v1115 = vld [vmem:[%s1111 + $0x30] sm:$0xff]
      %v1116 = vld [vmem:[%s1111 + $0x40] sm:$0xff]
      %v1117 = vld [vmem:[%s1111 + $0x50] sm:$0xff]
      %v1118 = vld [vmem:[%s1111 + $0x60] sm:$0xff]
      %v1119 = vld [vmem:[%s1111 + $0x70] sm:$0xff]
      %v1120 = vpack.c.bf16 %v1113, %v1112
      %v1121 = vpack.c.bf16 %v1115, %v1114
      %v1122 = vpack.c.bf16 %v1117, %v1116
      %v1123 = vpack.c.bf16 %v1119, %v1118
      %v1124 = vld [vmem:[#allocation2 + $0x1] sm:$0xff]
      %v1125 = vld [vmem:[#allocation2 + $0x11] sm:$0xff]
      %v1126 = vld [vmem:[#allocation2 + $0x21] sm:$0xff]
      %v1127 = vld [vmem:[#allocation2 + $0x31] sm:$0xff]
      %v1128 = vld [vmem:[#allocation2 + $0x41] sm:$0xff]
      %v1129 = vld [vmem:[#allocation2 + $0x51] sm:$0xff]
      %v1130 = vld [vmem:[#allocation2 + $0x61] sm:$0xff]
      %v1131 = vld [vmem:[#allocation2 + $0x71] sm:$0xff]
      %v1132 = vpack.c.bf16 %v1125, %v1124
      %v1133 = vpack.c.bf16 %v1127, %v1126
      %v1134 = vpack.c.bf16 %v1129, %v1128
      %v1135 = vpack.c.bf16 %v1131, %v1130
      %v1136 = vld [vmem:[%s1072] sm:$0xff]
      %v1137 = vld [vmem:[%s1072 + $0x10] sm:$0xff]
      %v1138 = vld [vmem:[%s1072 + $0x20] sm:$0xff]
      %v1139 = vld [vmem:[%s1072 + $0x30] sm:$0xff]
      %v1140 = vld [vmem:[%s1072 + $0x40] sm:$0xff]
      %v1141 = vld [vmem:[%s1072 + $0x50] sm:$0xff]
      %v1142 = vld [vmem:[%s1072 + $0x60] sm:$0xff]
      %v1143 = vld [vmem:[%s1072 + $0x70] sm:$0xff]
      %v1144 = vpack.c.bf16 %v1137, %v1136
      %v1145 = vpack.c.bf16 %v1139, %v1138
      %v1146 = vpack.c.bf16 %v1141, %v1140
      %v1147 = vpack.c.bf16 %v1143, %v1142
      %v1148 = vld [vmem:[%s1063] sm:$0xff]
      %v1149 = vld [vmem:[%s1063 + $0x10] sm:$0xff]
      %v1150 = vld [vmem:[%s1063 + $0x20] sm:$0xff]
      %v1151 = vld [vmem:[%s1063 + $0x30] sm:$0xff]
      %v1152 = vld [vmem:[%s1063 + $0x40] sm:$0xff]
      %v1153 = vld [vmem:[%s1063 + $0x50] sm:$0xff]
      %v1154 = vld [vmem:[%s1063 + $0x60] sm:$0xff]
      %v1155 = vld [vmem:[%s1063 + $0x70] sm:$0xff]
      %v1156 = vpack.c.bf16 %v1149, %v1148
      %v1157 = vpack.c.bf16 %v1151, %v1150
      %v1158 = vpack.c.bf16 %v1153, %v1152
      %v1159 = vpack.c.bf16 %v1155, %v1154
      %v1160 = vld [vmem:[%s1072 + $0x1] sm:$0xff]
      %v1161 = vld [vmem:[%s1072 + $0x11] sm:$0xff]
      %v1162 = vld [vmem:[%s1072 + $0x21] sm:$0xff]
      %v1163 = vld [vmem:[%s1072 + $0x31] sm:$0xff]
      %v1164 = vld [vmem:[%s1072 + $0x41] sm:$0xff]
      %v1165 = vld [vmem:[%s1072 + $0x51] sm:$0xff]
      %v1166 = vld [vmem:[%s1072 + $0x61] sm:$0xff]
      %v1167 = vld [vmem:[%s1072 + $0x71] sm:$0xff]
      %v1168 = vpack.c.bf16 %v1161, %v1160
      %v1169 = vpack.c.bf16 %v1163, %v1162
      %v1170 = vpack.c.bf16 %v1165, %v1164
      %v1171 = vpack.c.bf16 %v1167, %v1166
      %v1172 = vld [vmem:[%s1090] sm:$0xff]
      %v1173 = vld [vmem:[%s1090 + $0x10] sm:$0xff]
      %v1174 = vld [vmem:[%s1090 + $0x20] sm:$0xff]
      %v1175 = vld [vmem:[%s1090 + $0x30] sm:$0xff]
      %v1176 = vld [vmem:[%s1090 + $0x40] sm:$0xff]
      %v1177 = vld [vmem:[%s1090 + $0x50] sm:$0xff]
      %v1178 = vld [vmem:[%s1090 + $0x60] sm:$0xff]
      %v1179 = vld [vmem:[%s1090 + $0x70] sm:$0xff]
      %v1180 = vpack.c.bf16 %v1173, %v1172
      %v1181 = vpack.c.bf16 %v1175, %v1174
      %v1182 = vpack.c.bf16 %v1177, %v1176
      %v1183 = vpack.c.bf16 %v1179, %v1178
      %v1184 = vld [vmem:[%s1081] sm:$0xff]
      %v1185 = vld [vmem:[%s1081 + $0x10] sm:$0xff]
      %v1186 = vld [vmem:[%s1081 + $0x20] sm:$0xff]
      %v1187 = vld [vmem:[%s1081 + $0x30] sm:$0xff]
      %v1188 = vld [vmem:[%s1081 + $0x40] sm:$0xff]
      %v1189 = vld [vmem:[%s1081 + $0x50] sm:$0xff]
      %v1190 = vld [vmem:[%s1081 + $0x60] sm:$0xff]
      %v1191 = vld [vmem:[%s1081 + $0x70] sm:$0xff]
      %v1192 = vpack.c.bf16 %v1185, %v1184
      %v1193 = vpack.c.bf16 %v1187, %v1186
      %v1194 = vpack.c.bf16 %v1189, %v1188
      %v1195 = vpack.c.bf16 %v1191, %v1190
      %v1196 = vld [vmem:[%s1090 + $0x1] sm:$0xff]
      %v1197 = vld [vmem:[%s1090 + $0x11] sm:$0xff]
      %v1198 = vld [vmem:[%s1090 + $0x21] sm:$0xff]
      %v1199 = vld [vmem:[%s1090 + $0x31] sm:$0xff]
      %v1200 = vld [vmem:[%s1090 + $0x41] sm:$0xff]
      %v1201 = vld [vmem:[%s1090 + $0x51] sm:$0xff]
      %v1202 = vld [vmem:[%s1090 + $0x61] sm:$0xff]
      %v1203 = vld [vmem:[%s1090 + $0x71] sm:$0xff]
      %v1204 = vpack.c.bf16 %v1197, %v1196
      %v1205 = vpack.c.bf16 %v1199, %v1198
      %v1206 = vpack.c.bf16 %v1201, %v1200
      %v1207 = vpack.c.bf16 %v1203, %v1202
      %v1208 = vld [vmem:[%s4] sm:$0xf]
      %s1209 = scalar_lea.vmem %s4, 4
      %v1210 = vld [vmem:[%s1209] sm:$0xf]
      %vm1211 = vcmask 64512
      %v1213 = vsel %vm1211, %v1120, 0
      %v1216 = vsel %vm1211, %v1121, 0
      %v1219 = vsel %vm1211, %v1122, 0
      %v1222 = vsel %vm1211, %v1123, 0
      %vm1224 = vcmask 1043456
      %v1226 = vsel %vm1224, %v1210, 0
      %1228 = vmatprep.subr.bf16.mxu0 0
      %1229 = vmatpush1.bf16.msra.mxu0 0
      %1230 = vmatprep.subr.bf16.mxu0 0
      %1231 = vmatpush1.bf16.msra.mxu0 0
      %1232 = vmatprep.subr.bf16.mxu0 0
      %1233 = vmatpush1.bf16.msra.mxu0 0
      %1234 = vmatprep.subr.bf16.mxu0 0
      %1235 = vmatpush1.bf16.msra.mxu0 0
      %1236 = vmatprep.subr.bf16.mxu0 0
      %1237 = vmatpush1.bf16.msra.mxu0 0
      %1238 = vmatprep.subr.bf16.mxu0 0
      %1239 = vmatpush1.bf16.msra.mxu0 0
      %1240 = vmatprep.subr.bf16.mxu0 0
      %1241 = vmatpush1.bf16.msra.mxu0 0
      %1242 = vmatprep.subr.bf16.mxu0 0
      %1243 = vmatpush1.bf16.msra.mxu0 %v1226
      %1244 = vmatprep.subr.bf16.mxu0 0
      %1245 = vmatpush2.bf16.msra.mxu0 0
      %1246 = vmatprep.subr.bf16.mxu0 0
      %1247 = vmatpush2.bf16.msra.mxu0 0
      %1248 = vmatprep.subr.bf16.mxu0 0
      %1249 = vmatpush2.bf16.msra.mxu0 0
      %1250 = vmatprep.subr.bf16.mxu0 0
      %1251 = vmatpush2.bf16.msra.mxu0 0
      %1252 = vmatprep.subr.bf16.mxu0 0
      %1253 = vmatpush2.bf16.msra.mxu0 0
      %1254 = vmatprep.subr.bf16.mxu0 0
      %1255 = vmatpush2.bf16.msra.mxu0 0
      %1256 = vmatprep.subr.bf16.mxu0 0
      %1257 = vmatpush2.bf16.msra.mxu0 0
      %1258 = vmatprep.subr.bf16.mxu0 0
      %1259 = vmatpush2.bf16.msra.mxu0 0
      %1260 = vmatprep.mubr.bf16.mxu0 0
      %1261 = vmatmul.mubr.bf16.gmra.mxu0 %v1213
      %v1262 = vpop.f32.mrf.mxu0
      %v1263 = vadd.f32 0.0, %v1262
      %v1264 = vpop.f32.mrf.mxu0
      %v1265 = vpop.f32.mrf.mxu0
      %v1266 = vadd.f32 0.0, %v1265
      %v1267 = vpop.f32.mrf.mxu0
      %1268 = vmatprep.mubr.bf16.mxu0 0
      %1269 = vmatmul.mubr.bf16.gmra.mxu0 %v1216
      %v1270 = vpop.f32.mrf.mxu0
      %v1271 = vadd.f32 0.0, %v1270
      %v1272 = vpop.f32.mrf.mxu0
      %v1273 = vpop.f32.mrf.mxu0
      %v1274 = vadd.f32 0.0, %v1273
      %v1275 = vpop.f32.mrf.mxu0
      %1276 = vmatprep.mubr.bf16.mxu0 0
      %1277 = vmatmul.mubr.bf16.gmra.mxu0 %v1219
      %v1278 = vpop.f32.mrf.mxu0
      %v1279 = vadd.f32 0.0, %v1278
      %v1280 = vpop.f32.mrf.mxu0
      %v1281 = vpop.f32.mrf.mxu0
      %v1282 = vadd.f32 0.0, %v1281
      %v1283 = vpop.f32.mrf.mxu0
      %1284 = vmatprep.mubr.bf16.mxu0 0
      %1285 = vmatmul.mubr.bf16.gmra.mxu0 %v1222
      %v1286 = vpop.f32.mrf.mxu0
      %v1287 = vadd.f32 0.0, %v1286
      %v1288 = vpop.f32.mrf.mxu0
      %v1289 = vpop.f32.mrf.mxu0
      %v1290 = vadd.f32 0.0, %v1289
      %v1291 = vpop.f32.mrf.mxu0
      %1292 = vdwg.mxu0
      %v1294 = vsel %vm1211, %v1107, 0
      %v1297 = vsel %vm1211, %v1108, 0
      %v1300 = vsel %vm1211, %v1109, 0
      %v1303 = vsel %vm1211, %v1110, 0
      %v1306 = vsel %vm1224, %v1208, 0
      %1308 = vmatprep.subr.bf16.mxu0 0
      %1309 = vmatpush1.bf16.msra.mxu0 0
      %1310 = vmatprep.subr.bf16.mxu0 0
      %1311 = vmatpush1.bf16.msra.mxu0 0
      %1312 = vmatprep.subr.bf16.mxu0 0
      %1313 = vmatpush1.bf16.msra.mxu0 0
      %1314 = vmatprep.subr.bf16.mxu0 0
      %1315 = vmatpush1.bf16.msra.mxu0 0
      %1316 = vmatprep.subr.bf16.mxu0 0
      %1317 = vmatpush1.bf16.msra.mxu0 0
      %1318 = vmatprep.subr.bf16.mxu0 0
      %1319 = vmatpush1.bf16.msra.mxu0 0
      %1320 = vmatprep.subr.bf16.mxu0 0
      %1321 = vmatpush1.bf16.msra.mxu0 0
      %1322 = vmatprep.subr.bf16.mxu0 0
      %1323 = vmatpush1.bf16.msra.mxu0 %v1306
      %1324 = vmatprep.subr.bf16.mxu0 0
      %1325 = vmatpush2.bf16.msra.mxu0 0
      %1326 = vmatprep.subr.bf16.mxu0 0
      %1327 = vmatpush2.bf16.msra.mxu0 0
      %1328 = vmatprep.subr.bf16.mxu0 0
      %1329 = vmatpush2.bf16.msra.mxu0 0
      %1330 = vmatprep.subr.bf16.mxu0 0
      %1331 = vmatpush2.bf16.msra.mxu0 0
      %1332 = vmatprep.subr.bf16.mxu0 0
      %1333 = vmatpush2.bf16.msra.mxu0 0
      %1334 = vmatprep.subr.bf16.mxu0 0
      %1335 = vmatpush2.bf16.msra.mxu0 0
      %1336 = vmatprep.subr.bf16.mxu0 0
      %1337 = vmatpush2.bf16.msra.mxu0 0
      %1338 = vmatprep.subr.bf16.mxu0 0
      %1339 = vmatpush2.bf16.msra.mxu0 0
      %1340 = vmatprep.mubr.bf16.mxu0 0
      %1341 = vmatmul.mubr.bf16.gmra.mxu0 %v1294
      %v1342 = vpop.f32.mrf.mxu0
      %v1343 = vadd.f32 %v1263, %v1342
      %v1344 = vpop.f32.mrf.mxu0
      %v1345 = vpop.f32.mrf.mxu0
      %v1346 = vadd.f32 %v1266, %v1345
      %v1347 = vpop.f32.mrf.mxu0
      %1348 = vmatprep.mubr.bf16.mxu0 0
      %1349 = vmatmul.mubr.bf16.gmra.mxu0 %v1297
      %v1350 = vpop.f32.mrf.mxu0
      %v1351 = vadd.f32 %v1271, %v1350
      %v1352 = vpop.f32.mrf.mxu0
      %v1353 = vpop.f32.mrf.mxu0
      %v1354 = vadd.f32 %v1274, %v1353
      %v1355 = vpop.f32.mrf.mxu0
      %1356 = vmatprep.mubr.bf16.mxu0 0
      %1357 = vmatmul.mubr.bf16.gmra.mxu0 %v1300
      %v1358 = vpop.f32.mrf.mxu0
      %v1359 = vadd.f32 %v1279, %v1358
      %v1360 = vpop.f32.mrf.mxu0
      %v1361 = vpop.f32.mrf.mxu0
      %v1362 = vadd.f32 %v1282, %v1361
      %v1363 = vpop.f32.mrf.mxu0
      %1364 = vmatprep.mubr.bf16.mxu0 0
      %1365 = vmatmul.mubr.bf16.gmra.mxu0 %v1303
      %v1366 = vpop.f32.mrf.mxu0
      %v1367 = vadd.f32 %v1287, %v1366
      %v1368 = vpop.f32.mrf.mxu0
      %v1369 = vpop.f32.mrf.mxu0
      %v1370 = vadd.f32 %v1290, %v1369
      %v1371 = vpop.f32.mrf.mxu0
      %1372 = vdwg.mxu0
      %s1373 = scalar_lea.vmem %s4, 8
      %v1374 = vld [vmem:[%s1373] sm:$0xf]
      %v1376 = vsel %vm1211, %v1132, 0
      %v1379 = vsel %vm1211, %v1133, 0
      %v1382 = vsel %vm1211, %v1134, 0
      %v1385 = vsel %vm1211, %v1135, 0
      %v1388 = vsel %vm1224, %v1374, 0
      %1390 = vmatprep.subr.bf16.mxu0 0
      %1391 = vmatpush1.bf16.msra.mxu0 0
      %1392 = vmatprep.subr.bf16.mxu0 0
      %1393 = vmatpush1.bf16.msra.mxu0 0
      %1394 = vmatprep.subr.bf16.mxu0 0
      %1395 = vmatpush1.bf16.msra.mxu0 0
      %1396 = vmatprep.subr.bf16.mxu0 0
      %1397 = vmatpush1.bf16.msra.mxu0 0
      %1398 = vmatprep.subr.bf16.mxu0 0
      %1399 = vmatpush1.bf16.msra.mxu0 0
      %1400 = vmatprep.subr.bf16.mxu0 0
      %1401 = vmatpush1.bf16.msra.mxu0 0
      %1402 = vmatprep.subr.bf16.mxu0 0
      %1403 = vmatpush1.bf16.msra.mxu0 0
      %1404 = vmatprep.subr.bf16.mxu0 0
      %1405 = vmatpush1.bf16.msra.mxu0 %v1388
      %1406 = vmatprep.subr.bf16.mxu0 0
      %1407 = vmatpush2.bf16.msra.mxu0 0
      %1408 = vmatprep.subr.bf16.mxu0 0
      %1409 = vmatpush2.bf16.msra.mxu0 0
      %1410 = vmatprep.subr.bf16.mxu0 0
      %1411 = vmatpush2.bf16.msra.mxu0 0
      %1412 = vmatprep.subr.bf16.mxu0 0
      %1413 = vmatpush2.bf16.msra.mxu0 0
      %1414 = vmatprep.subr.bf16.mxu0 0
      %1415 = vmatpush2.bf16.msra.mxu0 0
      %1416 = vmatprep.subr.bf16.mxu0 0
      %1417 = vmatpush2.bf16.msra.mxu0 0
      %1418 = vmatprep.subr.bf16.mxu0 0
      %1419 = vmatpush2.bf16.msra.mxu0 0
      %1420 = vmatprep.subr.bf16.mxu0 0
      %1421 = vmatpush2.bf16.msra.mxu0 0
      %1422 = vmatprep.mubr.bf16.mxu0 0
      %1423 = vmatmul.mubr.bf16.gmra.mxu0 %v1376
      %v1424 = vpop.f32.mrf.mxu0
      %v1425 = vadd.f32 0.0, %v1424
      %v1426 = vpop.f32.mrf.mxu0
      %v1427 = vpop.f32.mrf.mxu0
      %v1428 = vadd.f32 0.0, %v1427
      %v1429 = vpop.f32.mrf.mxu0
      %1430 = vmatprep.mubr.bf16.mxu0 0
      %1431 = vmatmul.mubr.bf16.gmra.mxu0 %v1379
      %v1432 = vpop.f32.mrf.mxu0
      %v1433 = vadd.f32 0.0, %v1432
      %v1434 = vpop.f32.mrf.mxu0
      %v1435 = vpop.f32.mrf.mxu0
      %v1436 = vadd.f32 0.0, %v1435
      %v1437 = vpop.f32.mrf.mxu0
      %1438 = vmatprep.mubr.bf16.mxu0 0
      %1439 = vmatmul.mubr.bf16.gmra.mxu0 %v1382
      %v1440 = vpop.f32.mrf.mxu0
      %v1441 = vadd.f32 0.0, %v1440
      %v1442 = vpop.f32.mrf.mxu0
      %v1443 = vpop.f32.mrf.mxu0
      %v1444 = vadd.f32 0.0, %v1443
      %v1445 = vpop.f32.mrf.mxu0
      %1446 = vmatprep.mubr.bf16.mxu0 0
      %1447 = vmatmul.mubr.bf16.gmra.mxu0 %v1385
      %v1448 = vpop.f32.mrf.mxu0
      %v1449 = vadd.f32 0.0, %v1448
      %v1450 = vpop.f32.mrf.mxu0
      %v1451 = vpop.f32.mrf.mxu0
      %v1452 = vadd.f32 0.0, %v1451
      %v1453 = vpop.f32.mrf.mxu0
      %1454 = vdwg.mxu0
      %v1455 = vadd.f32 %v1343, %v1425
      %v1456 = vadd.f32 %v1346, %v1428
      %v1457 = vadd.f32 %v1351, %v1433
      %v1458 = vadd.f32 %v1354, %v1436
      %v1459 = vadd.f32 %v1359, %v1441
      %v1460 = vadd.f32 %v1362, %v1444
      %v1461 = vadd.f32 %v1367, %v1449
      %v1462 = vadd.f32 %v1370, %v1452
      %s1463 = scalar_lea.vmem %s4, 12
      %v1464 = vld [vmem:[%s1463] sm:$0xf]
      %v1466 = vsel %vm1211, %v1144, 0
      %v1469 = vsel %vm1211, %v1145, 0
      %v1472 = vsel %vm1211, %v1146, 0
      %v1475 = vsel %vm1211, %v1147, 0
      %v1478 = vsel %vm1224, %v1464, 0
      %1480 = vmatprep.subr.bf16.mxu0 0
      %1481 = vmatpush1.bf16.msra.mxu0 0
      %1482 = vmatprep.subr.bf16.mxu0 0
      %1483 = vmatpush1.bf16.msra.mxu0 0
      %1484 = vmatprep.subr.bf16.mxu0 0
      %1485 = vmatpush1.bf16.msra.mxu0 0
      %1486 = vmatprep.subr.bf16.mxu0 0
      %1487 = vmatpush1.bf16.msra.mxu0 0
      %1488 = vmatprep.subr.bf16.mxu0 0
      %1489 = vmatpush1.bf16.msra.mxu0 0
      %1490 = vmatprep.subr.bf16.mxu0 0
      %1491 = vmatpush1.bf16.msra.mxu0 0
      %1492 = vmatprep.subr.bf16.mxu0 0
      %1493 = vmatpush1.bf16.msra.mxu0 0
      %1494 = vmatprep.subr.bf16.mxu0 0
      %1495 = vmatpush1.bf16.msra.mxu0 %v1478
      %1496 = vmatprep.subr.bf16.mxu0 0
      %1497 = vmatpush2.bf16.msra.mxu0 0
      %1498 = vmatprep.subr.bf16.mxu0 0
      %1499 = vmatpush2.bf16.msra.mxu0 0
      %1500 = vmatprep.subr.bf16.mxu0 0
      %1501 = vmatpush2.bf16.msra.mxu0 0
      %1502 = vmatprep.subr.bf16.mxu0 0
      %1503 = vmatpush2.bf16.msra.mxu0 0
      %1504 = vmatprep.subr.bf16.mxu0 0
      %1505 = vmatpush2.bf16.msra.mxu0 0
      %1506 = vmatprep.subr.bf16.mxu0 0
      %1507 = vmatpush2.bf16.msra.mxu0 0
      %1508 = vmatprep.subr.bf16.mxu0 0
      %1509 = vmatpush2.bf16.msra.mxu0 0
      %1510 = vmatprep.subr.bf16.mxu0 0
      %1511 = vmatpush2.bf16.msra.mxu0 0
      %1512 = vmatprep.mubr.bf16.mxu0 0
      %1513 = vmatmul.mubr.bf16.gmra.mxu0 %v1466
      %v1514 = vpop.f32.mrf.mxu0
      %v1515 = vadd.f32 0.0, %v1514
      %v1516 = vpop.f32.mrf.mxu0
      %v1517 = vpop.f32.mrf.mxu0
      %v1518 = vadd.f32 0.0, %v1517
      %v1519 = vpop.f32.mrf.mxu0
      %1520 = vmatprep.mubr.bf16.mxu0 0
      %1521 = vmatmul.mubr.bf16.gmra.mxu0 %v1469
      %v1522 = vpop.f32.mrf.mxu0
      %v1523 = vadd.f32 0.0, %v1522
      %v1524 = vpop.f32.mrf.mxu0
      %v1525 = vpop.f32.mrf.mxu0
      %v1526 = vadd.f32 0.0, %v1525
      %v1527 = vpop.f32.mrf.mxu0
      %1528 = vmatprep.mubr.bf16.mxu0 0
      %1529 = vmatmul.mubr.bf16.gmra.mxu0 %v1472
      %v1530 = vpop.f32.mrf.mxu0
      %v1531 = vadd.f32 0.0, %v1530
      %v1532 = vpop.f32.mrf.mxu0
      %v1533 = vpop.f32.mrf.mxu0
      %v1534 = vadd.f32 0.0, %v1533
      %v1535 = vpop.f32.mrf.mxu0
      %1536 = vmatprep.mubr.bf16.mxu0 0
      %1537 = vmatmul.mubr.bf16.gmra.mxu0 %v1475
      %v1538 = vpop.f32.mrf.mxu0
      %v1539 = vadd.f32 0.0, %v1538
      %v1540 = vpop.f32.mrf.mxu0
      %v1541 = vpop.f32.mrf.mxu0
      %v1542 = vadd.f32 0.0, %v1541
      %v1543 = vpop.f32.mrf.mxu0
      %1544 = vdwg.mxu0
      %v1545 = vadd.f32 %v1455, %v1515
      %v1546 = vadd.f32 %v1456, %v1518
      %v1547 = vadd.f32 %v1457, %v1523
      %v1548 = vadd.f32 %v1458, %v1526
      %v1549 = vadd.f32 %v1459, %v1531
      %v1550 = vadd.f32 %v1460, %v1534
      %v1551 = vadd.f32 %v1461, %v1539
      %v1552 = vadd.f32 %v1462, %v1542
      %s1553 = scalar_lea.vmem %s4, 16
      %v1554 = vld [vmem:[%s1553] sm:$0xf]
      %v1556 = vsel %vm1211, %v1156, 0
      %v1559 = vsel %vm1211, %v1157, 0
      %v1562 = vsel %vm1211, %v1158, 0
      %v1565 = vsel %vm1211, %v1159, 0
      %v1568 = vsel %vm1224, %v1554, 0
      %1570 = vmatprep.subr.bf16.mxu0 0
      %1571 = vmatpush1.bf16.msra.mxu0 0
      %1572 = vmatprep.subr.bf16.mxu0 0
      %1573 = vmatpush1.bf16.msra.mxu0 0
      %1574 = vmatprep.subr.bf16.mxu0 0
      %1575 = vmatpush1.bf16.msra.mxu0 0
      %1576 = vmatprep.subr.bf16.mxu0 0
      %1577 = vmatpush1.bf16.msra.mxu0 0
      %1578 = vmatprep.subr.bf16.mxu0 0
      %1579 = vmatpush1.bf16.msra.mxu0 0
      %1580 = vmatprep.subr.bf16.mxu0 0
      %1581 = vmatpush1.bf16.msra.mxu0 0
      %1582 = vmatprep.subr.bf16.mxu0 0
      %1583 = vmatpush1.bf16.msra.mxu0 0
      %1584 = vmatprep.subr.bf16.mxu0 0
      %1585 = vmatpush1.bf16.msra.mxu0 %v1568
      %1586 = vmatprep.subr.bf16.mxu0 0
      %1587 = vmatpush2.bf16.msra.mxu0 0
      %1588 = vmatprep.subr.bf16.mxu0 0
      %1589 = vmatpush2.bf16.msra.mxu0 0
      %1590 = vmatprep.subr.bf16.mxu0 0
      %1591 = vmatpush2.bf16.msra.mxu0 0
      %1592 = vmatprep.subr.bf16.mxu0 0
      %1593 = vmatpush2.bf16.msra.mxu0 0
      %1594 = vmatprep.subr.bf16.mxu0 0
      %1595 = vmatpush2.bf16.msra.mxu0 0
      %1596 = vmatprep.subr.bf16.mxu0 0
      %1597 = vmatpush2.bf16.msra.mxu0 0
      %1598 = vmatprep.subr.bf16.mxu0 0
      %1599 = vmatpush2.bf16.msra.mxu0 0
      %1600 = vmatprep.subr.bf16.mxu0 0
      %1601 = vmatpush2.bf16.msra.mxu0 0
      %1602 = vmatprep.mubr.bf16.mxu0 0
      %1603 = vmatmul.mubr.bf16.gmra.mxu0 %v1556
      %v1604 = vpop.f32.mrf.mxu0
      %v1605 = vadd.f32 0.0, %v1604
      %v1606 = vpop.f32.mrf.mxu0
      %v1607 = vpop.f32.mrf.mxu0
      %v1608 = vadd.f32 0.0, %v1607
      %v1609 = vpop.f32.mrf.mxu0
      %1610 = vmatprep.mubr.bf16.mxu0 0
      %1611 = vmatmul.mubr.bf16.gmra.mxu0 %v1559
      %v1612 = vpop.f32.mrf.mxu0
      %v1613 = vadd.f32 0.0, %v1612
      %v1614 = vpop.f32.mrf.mxu0
      %v1615 = vpop.f32.mrf.mxu0
      %v1616 = vadd.f32 0.0, %v1615
      %v1617 = vpop.f32.mrf.mxu0
      %1618 = vmatprep.mubr.bf16.mxu0 0
      %1619 = vmatmul.mubr.bf16.gmra.mxu0 %v1562
      %v1620 = vpop.f32.mrf.mxu0
      %v1621 = vadd.f32 0.0, %v1620
      %v1622 = vpop.f32.mrf.mxu0
      %v1623 = vpop.f32.mrf.mxu0
      %v1624 = vadd.f32 0.0, %v1623
      %v1625 = vpop.f32.mrf.mxu0
      %1626 = vmatprep.mubr.bf16.mxu0 0
      %1627 = vmatmul.mubr.bf16.gmra.mxu0 %v1565
      %v1628 = vpop.f32.mrf.mxu0
      %v1629 = vadd.f32 0.0, %v1628
      %v1630 = vpop.f32.mrf.mxu0
      %v1631 = vpop.f32.mrf.mxu0
      %v1632 = vadd.f32 0.0, %v1631
      %v1633 = vpop.f32.mrf.mxu0
      %1634 = vdwg.mxu0
      %v1635 = vadd.f32 %v1545, %v1605
      %v1636 = vadd.f32 %v1546, %v1608
      %v1637 = vadd.f32 %v1547, %v1613
      %v1638 = vadd.f32 %v1548, %v1616
      %v1639 = vadd.f32 %v1549, %v1621
      %v1640 = vadd.f32 %v1550, %v1624
      %v1641 = vadd.f32 %v1551, %v1629
      %v1642 = vadd.f32 %v1552, %v1632
      %s1643 = scalar_lea.vmem %s4, 20
      %v1644 = vld [vmem:[%s1643] sm:$0xf]
      %v1646 = vsel %vm1211, %v1168, 0
      %v1649 = vsel %vm1211, %v1169, 0
      %v1652 = vsel %vm1211, %v1170, 0
      %v1655 = vsel %vm1211, %v1171, 0
      %v1658 = vsel %vm1224, %v1644, 0
      %1660 = vmatprep.subr.bf16.mxu0 0
      %1661 = vmatpush1.bf16.msra.mxu0 0
      %1662 = vmatprep.subr.bf16.mxu0 0
      %1663 = vmatpush1.bf16.msra.mxu0 0
      %1664 = vmatprep.subr.bf16.mxu0 0
      %1665 = vmatpush1.bf16.msra.mxu0 0
      %1666 = vmatprep.subr.bf16.mxu0 0
      %1667 = vmatpush1.bf16.msra.mxu0 0
      %1668 = vmatprep.subr.bf16.mxu0 0
      %1669 = vmatpush1.bf16.msra.mxu0 0
      %1670 = vmatprep.subr.bf16.mxu0 0
      %1671 = vmatpush1.bf16.msra.mxu0 0
      %1672 = vmatprep.subr.bf16.mxu0 0
      %1673 = vmatpush1.bf16.msra.mxu0 0
      %1674 = vmatprep.subr.bf16.mxu0 0
      %1675 = vmatpush1.bf16.msra.mxu0 %v1658
      %1676 = vmatprep.subr.bf16.mxu0 0
      %1677 = vmatpush2.bf16.msra.mxu0 0
      %1678 = vmatprep.subr.bf16.mxu0 0
      %1679 = vmatpush2.bf16.msra.mxu0 0
      %1680 = vmatprep.subr.bf16.mxu0 0
      %1681 = vmatpush2.bf16.msra.mxu0 0
      %1682 = vmatprep.subr.bf16.mxu0 0
      %1683 = vmatpush2.bf16.msra.mxu0 0
      %1684 = vmatprep.subr.bf16.mxu0 0
      %1685 = vmatpush2.bf16.msra.mxu0 0
      %1686 = vmatprep.subr.bf16.mxu0 0
      %1687 = vmatpush2.bf16.msra.mxu0 0
      %1688 = vmatprep.subr.bf16.mxu0 0
      %1689 = vmatpush2.bf16.msra.mxu0 0
      %1690 = vmatprep.subr.bf16.mxu0 0
      %1691 = vmatpush2.bf16.msra.mxu0 0
      %1692 = vmatprep.mubr.bf16.mxu0 0
      %1693 = vmatmul.mubr.bf16.gmra.mxu0 %v1646
      %v1694 = vpop.f32.mrf.mxu0
      %v1695 = vadd.f32 0.0, %v1694
      %v1696 = vpop.f32.mrf.mxu0
      %v1697 = vpop.f32.mrf.mxu0
      %v1698 = vadd.f32 0.0, %v1697
      %v1699 = vpop.f32.mrf.mxu0
      %1700 = vmatprep.mubr.bf16.mxu0 0
      %1701 = vmatmul.mubr.bf16.gmra.mxu0 %v1649
      %v1702 = vpop.f32.mrf.mxu0
      %v1703 = vadd.f32 0.0, %v1702
      %v1704 = vpop.f32.mrf.mxu0
      %v1705 = vpop.f32.mrf.mxu0
      %v1706 = vadd.f32 0.0, %v1705
      %v1707 = vpop.f32.mrf.mxu0
      %1708 = vmatprep.mubr.bf16.mxu0 0
      %1709 = vmatmul.mubr.bf16.gmra.mxu0 %v1652
      %v1710 = vpop.f32.mrf.mxu0
      %v1711 = vadd.f32 0.0, %v1710
      %v1712 = vpop.f32.mrf.mxu0
      %v1713 = vpop.f32.mrf.mxu0
      %v1714 = vadd.f32 0.0, %v1713
      %v1715 = vpop.f32.mrf.mxu0
      %1716 = vmatprep.mubr.bf16.mxu0 0
      %1717 = vmatmul.mubr.bf16.gmra.mxu0 %v1655
      %v1718 = vpop.f32.mrf.mxu0
      %v1719 = vadd.f32 0.0, %v1718
      %v1720 = vpop.f32.mrf.mxu0
      %v1721 = vpop.f32.mrf.mxu0
      %v1722 = vadd.f32 0.0, %v1721
      %v1723 = vpop.f32.mrf.mxu0
      %1724 = vdwg.mxu0
      %v1725 = vadd.f32 %v1635, %v1695
      %v1726 = vadd.f32 %v1636, %v1698
      %v1727 = vadd.f32 %v1637, %v1703
      %v1728 = vadd.f32 %v1638, %v1706
      %v1729 = vadd.f32 %v1639, %v1711
      %v1730 = vadd.f32 %v1640, %v1714
      %v1731 = vadd.f32 %v1641, %v1719
      %v1732 = vadd.f32 %v1642, %v1722
      %s1733 = scalar_lea.vmem %s4, 24
      %v1734 = vld [vmem:[%s1733] sm:$0xf]
      %v1736 = vsel %vm1211, %v1180, 0
      %v1739 = vsel %vm1211, %v1181, 0
      %v1742 = vsel %vm1211, %v1182, 0
      %v1745 = vsel %vm1211, %v1183, 0
      %v1748 = vsel %vm1224, %v1734, 0
      %1750 = vmatprep.subr.bf16.mxu0 0
      %1751 = vmatpush1.bf16.msra.mxu0 0
      %1752 = vmatprep.subr.bf16.mxu0 0
      %1753 = vmatpush1.bf16.msra.mxu0 0
      %1754 = vmatprep.subr.bf16.mxu0 0
      %1755 = vmatpush1.bf16.msra.mxu0 0
      %1756 = vmatprep.subr.bf16.mxu0 0
      %1757 = vmatpush1.bf16.msra.mxu0 0
      %1758 = vmatprep.subr.bf16.mxu0 0
      %1759 = vmatpush1.bf16.msra.mxu0 0
      %1760 = vmatprep.subr.bf16.mxu0 0
      %1761 = vmatpush1.bf16.msra.mxu0 0
      %1762 = vmatprep.subr.bf16.mxu0 0
      %1763 = vmatpush1.bf16.msra.mxu0 0
      %1764 = vmatprep.subr.bf16.mxu0 0
      %1765 = vmatpush1.bf16.msra.mxu0 %v1748
      %1766 = vmatprep.subr.bf16.mxu0 0
      %1767 = vmatpush2.bf16.msra.mxu0 0
      %1768 = vmatprep.subr.bf16.mxu0 0
      %1769 = vmatpush2.bf16.msra.mxu0 0
      %1770 = vmatprep.subr.bf16.mxu0 0
      %1771 = vmatpush2.bf16.msra.mxu0 0
      %1772 = vmatprep.subr.bf16.mxu0 0
      %1773 = vmatpush2.bf16.msra.mxu0 0
      %1774 = vmatprep.subr.bf16.mxu0 0
      %1775 = vmatpush2.bf16.msra.mxu0 0
      %1776 = vmatprep.subr.bf16.mxu0 0
      %1777 = vmatpush2.bf16.msra.mxu0 0
      %1778 = vmatprep.subr.bf16.mxu0 0
      %1779 = vmatpush2.bf16.msra.mxu0 0
      %1780 = vmatprep.subr.bf16.mxu0 0
      %1781 = vmatpush2.bf16.msra.mxu0 0
      %1782 = vmatprep.mubr.bf16.mxu0 0
      %1783 = vmatmul.mubr.bf16.gmra.mxu0 %v1736
      %v1784 = vpop.f32.mrf.mxu0
      %v1785 = vadd.f32 0.0, %v1784
      %v1786 = vpop.f32.mrf.mxu0
      %v1787 = vpop.f32.mrf.mxu0
      %v1788 = vadd.f32 0.0, %v1787
      %v1789 = vpop.f32.mrf.mxu0
      %1790 = vmatprep.mubr.bf16.mxu0 0
      %1791 = vmatmul.mubr.bf16.gmra.mxu0 %v1739
      %v1792 = vpop.f32.mrf.mxu0
      %v1793 = vadd.f32 0.0, %v1792
      %v1794 = vpop.f32.mrf.mxu0
      %v1795 = vpop.f32.mrf.mxu0
      %v1796 = vadd.f32 0.0, %v1795
      %v1797 = vpop.f32.mrf.mxu0
      %1798 = vmatprep.mubr.bf16.mxu0 0
      %1799 = vmatmul.mubr.bf16.gmra.mxu0 %v1742
      %v1800 = vpop.f32.mrf.mxu0
      %v1801 = vadd.f32 0.0, %v1800
      %v1802 = vpop.f32.mrf.mxu0
      %v1803 = vpop.f32.mrf.mxu0
      %v1804 = vadd.f32 0.0, %v1803
      %v1805 = vpop.f32.mrf.mxu0
      %1806 = vmatprep.mubr.bf16.mxu0 0
      %1807 = vmatmul.mubr.bf16.gmra.mxu0 %v1745
      %v1808 = vpop.f32.mrf.mxu0
      %v1809 = vadd.f32 0.0, %v1808
      %v1810 = vpop.f32.mrf.mxu0
      %v1811 = vpop.f32.mrf.mxu0
      %v1812 = vadd.f32 0.0, %v1811
      %v1813 = vpop.f32.mrf.mxu0
      %1814 = vdwg.mxu0
      %v1815 = vadd.f32 %v1725, %v1785
      %v1816 = vadd.f32 %v1726, %v1788
      %v1817 = vadd.f32 %v1727, %v1793
      %v1818 = vadd.f32 %v1728, %v1796
      %v1819 = vadd.f32 %v1729, %v1801
      %v1820 = vadd.f32 %v1730, %v1804
      %v1821 = vadd.f32 %v1731, %v1809
      %v1822 = vadd.f32 %v1732, %v1812
      %s1823 = scalar_lea.vmem %s4, 28
      %v1824 = vld [vmem:[%s1823] sm:$0xf]
      %v1826 = vsel %vm1211, %v1192, 0
      %v1829 = vsel %vm1211, %v1193, 0
      %v1832 = vsel %vm1211, %v1194, 0
      %v1835 = vsel %vm1211, %v1195, 0
      %v1838 = vsel %vm1224, %v1824, 0
      %1840 = vmatprep.subr.bf16.mxu0 0
      %1841 = vmatpush1.bf16.msra.mxu0 0
      %1842 = vmatprep.subr.bf16.mxu0 0
      %1843 = vmatpush1.bf16.msra.mxu0 0
      %1844 = vmatprep.subr.bf16.mxu0 0
      %1845 = vmatpush1.bf16.msra.mxu0 0
      %1846 = vmatprep.subr.bf16.mxu0 0
      %1847 = vmatpush1.bf16.msra.mxu0 0
      %1848 = vmatprep.subr.bf16.mxu0 0
      %1849 = vmatpush1.bf16.msra.mxu0 0
      %1850 = vmatprep.subr.bf16.mxu0 0
      %1851 = vmatpush1.bf16.msra.mxu0 0
      %1852 = vmatprep.subr.bf16.mxu0 0
      %1853 = vmatpush1.bf16.msra.mxu0 0
      %1854 = vmatprep.subr.bf16.mxu0 0
      %1855 = vmatpush1.bf16.msra.mxu0 %v1838
      %1856 = vmatprep.subr.bf16.mxu0 0
      %1857 = vmatpush2.bf16.msra.mxu0 0
      %1858 = vmatprep.subr.bf16.mxu0 0
      %1859 = vmatpush2.bf16.msra.mxu0 0
      %1860 = vmatprep.subr.bf16.mxu0 0
      %1861 = vmatpush2.bf16.msra.mxu0 0
      %1862 = vmatprep.subr.bf16.mxu0 0
      %1863 = vmatpush2.bf16.msra.mxu0 0
      %1864 = vmatprep.subr.bf16.mxu0 0
      %1865 = vmatpush2.bf16.msra.mxu0 0
      %1866 = vmatprep.subr.bf16.mxu0 0
      %1867 = vmatpush2.bf16.msra.mxu0 0
      %1868 = vmatprep.subr.bf16.mxu0 0
      %1869 = vmatpush2.bf16.msra.mxu0 0
      %1870 = vmatprep.subr.bf16.mxu0 0
      %1871 = vmatpush2.bf16.msra.mxu0 0
      %1872 = vmatprep.mubr.bf16.mxu0 0
      %1873 = vmatmul.mubr.bf16.gmra.mxu0 %v1826
      %v1874 = vpop.f32.mrf.mxu0
      %v1875 = vadd.f32 0.0, %v1874
      %v1876 = vpop.f32.mrf.mxu0
      %v1877 = vpop.f32.mrf.mxu0
      %v1878 = vadd.f32 0.0, %v1877
      %v1879 = vpop.f32.mrf.mxu0
      %1880 = vmatprep.mubr.bf16.mxu0 0
      %1881 = vmatmul.mubr.bf16.gmra.mxu0 %v1829
      %v1882 = vpop.f32.mrf.mxu0
      %v1883 = vadd.f32 0.0, %v1882
      %v1884 = vpop.f32.mrf.mxu0
      %v1885 = vpop.f32.mrf.mxu0
      %v1886 = vadd.f32 0.0, %v1885
      %v1887 = vpop.f32.mrf.mxu0
      %1888 = vmatprep.mubr.bf16.mxu0 0
      %1889 = vmatmul.mubr.bf16.gmra.mxu0 %v1832
      %v1890 = vpop.f32.mrf.mxu0
      %v1891 = vadd.f32 0.0, %v1890
      %v1892 = vpop.f32.mrf.mxu0
      %v1893 = vpop.f32.mrf.mxu0
      %v1894 = vadd.f32 0.0, %v1893
      %v1895 = vpop.f32.mrf.mxu0
      %1896 = vmatprep.mubr.bf16.mxu0 0
      %1897 = vmatmul.mubr.bf16.gmra.mxu0 %v1835
      %v1898 = vpop.f32.mrf.mxu0
      %v1899 = vadd.f32 0.0, %v1898
      %v1900 = vpop.f32.mrf.mxu0
      %v1901 = vpop.f32.mrf.mxu0
      %v1902 = vadd.f32 0.0, %v1901
      %v1903 = vpop.f32.mrf.mxu0
      %1904 = vdwg.mxu0
      %v1905 = vadd.f32 %v1815, %v1875
      %v1906 = vadd.f32 %v1816, %v1878
      %v1907 = vadd.f32 %v1817, %v1883
      %v1908 = vadd.f32 %v1818, %v1886
      %v1909 = vadd.f32 %v1819, %v1891
      %v1910 = vadd.f32 %v1820, %v1894
      %v1911 = vadd.f32 %v1821, %v1899
      %v1912 = vadd.f32 %v1822, %v1902
      %s1913 = scalar_lea.vmem %s4, 32
      %v1914 = vld [vmem:[%s1913] sm:$0xf]
      %v1916 = vsel %vm1211, %v1204, 0
      %v1919 = vsel %vm1211, %v1205, 0
      %v1922 = vsel %vm1211, %v1206, 0
      %v1925 = vsel %vm1211, %v1207, 0
      %v1928 = vsel %vm1224, %v1914, 0
      %1930 = vmatprep.subr.bf16.mxu0 0
      %1931 = vmatpush1.bf16.msra.mxu0 0
      %1932 = vmatprep.subr.bf16.mxu0 0
      %1933 = vmatpush1.bf16.msra.mxu0 0
      %1934 = vmatprep.subr.bf16.mxu0 0
      %1935 = vmatpush1.bf16.msra.mxu0 0
      %1936 = vmatprep.subr.bf16.mxu0 0
      %1937 = vmatpush1.bf16.msra.mxu0 0
      %1938 = vmatprep.subr.bf16.mxu0 0
      %1939 = vmatpush1.bf16.msra.mxu0 0
      %1940 = vmatprep.subr.bf16.mxu0 0
      %1941 = vmatpush1.bf16.msra.mxu0 0
      %1942 = vmatprep.subr.bf16.mxu0 0
      %1943 = vmatpush1.bf16.msra.mxu0 0
      %1944 = vmatprep.subr.bf16.mxu0 0
      %1945 = vmatpush1.bf16.msra.mxu0 %v1928
      %1946 = vmatprep.subr.bf16.mxu0 0
      %1947 = vmatpush2.bf16.msra.mxu0 0
      %1948 = vmatprep.subr.bf16.mxu0 0
      %1949 = vmatpush2.bf16.msra.mxu0 0
      %1950 = vmatprep.subr.bf16.mxu0 0
      %1951 = vmatpush2.bf16.msra.mxu0 0
      %1952 = vmatprep.subr.bf16.mxu0 0
      %1953 = vmatpush2.bf16.msra.mxu0 0
      %1954 = vmatprep.subr.bf16.mxu0 0
      %1955 = vmatpush2.bf16.msra.mxu0 0
      %1956 = vmatprep.subr.bf16.mxu0 0
      %1957 = vmatpush2.bf16.msra.mxu0 0
      %1958 = vmatprep.subr.bf16.mxu0 0
      %1959 = vmatpush2.bf16.msra.mxu0 0
      %1960 = vmatprep.subr.bf16.mxu0 0
      %1961 = vmatpush2.bf16.msra.mxu0 0
      %1962 = vmatprep.mubr.bf16.mxu0 0
      %1963 = vmatmul.mubr.bf16.gmra.mxu0 %v1916
      %v1964 = vpop.f32.mrf.mxu0
      %v1965 = vadd.f32 0.0, %v1964
      %v1966 = vpop.f32.mrf.mxu0
      %v1967 = vpop.f32.mrf.mxu0
      %v1968 = vadd.f32 0.0, %v1967
      %v1969 = vpop.f32.mrf.mxu0
      %1970 = vmatprep.mubr.bf16.mxu0 0
      %1971 = vmatmul.mubr.bf16.gmra.mxu0 %v1919
      %v1972 = vpop.f32.mrf.mxu0
      %v1973 = vadd.f32 0.0, %v1972
      %v1974 = vpop.f32.mrf.mxu0
      %v1975 = vpop.f32.mrf.mxu0
      %v1976 = vadd.f32 0.0, %v1975
      %v1977 = vpop.f32.mrf.mxu0
      %1978 = vmatprep.mubr.bf16.mxu0 0
      %1979 = vmatmul.mubr.bf16.gmra.mxu0 %v1922
      %v1980 = vpop.f32.mrf.mxu0
      %v1981 = vadd.f32 0.0, %v1980
      %v1982 = vpop.f32.mrf.mxu0
      %v1983 = vpop.f32.mrf.mxu0
      %v1984 = vadd.f32 0.0, %v1983
      %v1985 = vpop.f32.mrf.mxu0
      %1986 = vmatprep.mubr.bf16.mxu0 0
      %1987 = vmatmul.mubr.bf16.gmra.mxu0 %v1925
      %v1988 = vpop.f32.mrf.mxu0
      %v1989 = vadd.f32 0.0, %v1988
      %v1990 = vpop.f32.mrf.mxu0
      %v1991 = vpop.f32.mrf.mxu0
      %v1992 = vadd.f32 0.0, %v1991
      %v1993 = vpop.f32.mrf.mxu0
      %1994 = vdwg.mxu0
      %v1995 = vadd.f32 %v1905, %v1965
      %v1996 = vadd.f32 %v1906, %v1968
      %v1997 = vadd.f32 %v1907, %v1973
      %v1998 = vadd.f32 %v1908, %v1976
      %v1999 = vadd.f32 %v1909, %v1981
      %v2000 = vadd.f32 %v1910, %v1984
      %v2001 = vadd.f32 %v1911, %v1989
      %v2002 = vadd.f32 %v1912, %v1992
      %v2003 = vld [vmem:[%s5] sm:$0x1]
      %v2005 = vlaneseq
      %v2006 = vshrl.u32 %v2005, 7
      %v2007 = vsub.s32 0, %v2006
      %v2008 = vrot.slane %v2003, %v2007
      %v2010 = vmul.f32 %v1995, %v2008
      %v2011 = vmul.f32 %v1996, %v2008
      %v2012 = vmul.f32 %v1997, %v2008
      %v2013 = vmul.f32 %v1998, %v2008
      %v2014 = vmul.f32 %v1999, %v2008
      %v2015 = vmul.f32 %v2000, %v2008
      %v2016 = vmul.f32 %v2001, %v2008
      %v2017 = vmul.f32 %v2002, %v2008
      %v2018 = vld [vmem:[%s6] sm:$0x1]
      %v2020 = vlaneseq
      %v2021 = vshrl.u32 %v2020, 7
      %v2022 = vsub.s32 0, %v2021
      %v2023 = vrot.slane %v2018, %v2022
      %v2025 = vadd.f32 %v2010, %v2023
      %v2026 = vadd.f32 %v2011, %v2023
      %v2027 = vadd.f32 %v2012, %v2023
      %v2028 = vadd.f32 %v2013, %v2023
      %v2029 = vadd.f32 %v2014, %v2023
      %v2030 = vadd.f32 %v2015, %v2023
      %v2031 = vadd.f32 %v2016, %v2023
      %v2032 = vadd.f32 %v2017, %v2023
      %v2033 = vmax.f32 %v2025, 0.0
      %v2034 = vmax.f32 %v2026, 0.0
      %v2035 = vmax.f32 %v2027, 0.0
      %v2036 = vmax.f32 %v2028, 0.0
      %v2037 = vmax.f32 %v2029, 0.0
      %v2038 = vmax.f32 %v2030, 0.0
      %v2039 = vmax.f32 %v2031, 0.0
      %v2040 = vmax.f32 %v2032, 0.0
      %s2041 = scalar_lea.vmem %s4, 36
      %v2042 = vld [vmem:[%s2041] sm:$0xf]
      %s2043 = scalar_lea.vmem %s4, 40
      %v2044 = vld [vmem:[%s2043] sm:$0xf]
      %2049 = vrot.lane.b32.xlu0 %v1120, 120
      %v2050 = vpop.permute.xlu0 %2049
      %2051 = vrot.lane.b32.xlu0 %v1121, 120
      %v2052 = vpop.permute.xlu0 %2051
      %2053 = vrot.lane.b32.xlu0 %v1122, 120
      %v2054 = vpop.permute.xlu0 %2053
      %2055 = vrot.lane.b32.xlu0 %v1123, 120
      %v2056 = vpop.permute.xlu0 %2055
      %v2058 = vsel %vm1211, %v2050, 0
      %v2061 = vsel %vm1211, %v2052, 0
      %v2064 = vsel %vm1211, %v2054, 0
      %v2067 = vsel %vm1211, %v2056, 0
      %v2070 = vsel %vm1224, %v2044, 0
      %2072 = vmatprep.subr.bf16.mxu0 0
      %2073 = vmatpush1.bf16.msra.mxu0 0
      %2074 = vmatprep.subr.bf16.mxu0 0
      %2075 = vmatpush1.bf16.msra.mxu0 0
      %2076 = vmatprep.subr.bf16.mxu0 0
      %2077 = vmatpush1.bf16.msra.mxu0 0
      %2078 = vmatprep.subr.bf16.mxu0 0
      %2079 = vmatpush1.bf16.msra.mxu0 0
      %2080 = vmatprep.subr.bf16.mxu0 0
      %2081 = vmatpush1.bf16.msra.mxu0 0
      %2082 = vmatprep.subr.bf16.mxu0 0
      %2083 = vmatpush1.bf16.msra.mxu0 0
      %2084 = vmatprep.subr.bf16.mxu0 0
      %2085 = vmatpush1.bf16.msra.mxu0 0
      %2086 = vmatprep.subr.bf16.mxu0 0
      %2087 = vmatpush1.bf16.msra.mxu0 %v2070
      %2088 = vmatprep.subr.bf16.mxu0 0
      %2089 = vmatpush2.bf16.msra.mxu0 0
      %2090 = vmatprep.subr.bf16.mxu0 0
      %2091 = vmatpush2.bf16.msra.mxu0 0
      %2092 = vmatprep.subr.bf16.mxu0 0
      %2093 = vmatpush2.bf16.msra.mxu0 0
      %2094 = vmatprep.subr.bf16.mxu0 0
      %2095 = vmatpush2.bf16.msra.mxu0 0
      %2096 = vmatprep.subr.bf16.mxu0 0
      %2097 = vmatpush2.bf16.msra.mxu0 0
      %2098 = vmatprep.subr.bf16.mxu0 0
      %2099 = vmatpush2.bf16.msra.mxu0 0
      %2100 = vmatprep.subr.bf16.mxu0 0
      %2101 = vmatpush2.bf16.msra.mxu0 0
      %2102 = vmatprep.subr.bf16.mxu0 0
      %2103 = vmatpush2.bf16.msra.mxu0 0
      %2104 = vmatprep.mubr.bf16.mxu0 0
      %2105 = vmatmul.mubr.bf16.gmra.mxu0 %v2058
      %v2106 = vpop.f32.mrf.mxu0
      %v2107 = vadd.f32 0.0, %v2106
      %v2108 = vpop.f32.mrf.mxu0
      %v2109 = vpop.f32.mrf.mxu0
      %v2110 = vadd.f32 0.0, %v2109
      %v2111 = vpop.f32.mrf.mxu0
      %2112 = vmatprep.mubr.bf16.mxu0 0
      %2113 = vmatmul.mubr.bf16.gmra.mxu0 %v2061
      %v2114 = vpop.f32.mrf.mxu0
      %v2115 = vadd.f32 0.0, %v2114
      %v2116 = vpop.f32.mrf.mxu0
      %v2117 = vpop.f32.mrf.mxu0
      %v2118 = vadd.f32 0.0, %v2117
      %v2119 = vpop.f32.mrf.mxu0
      %2120 = vmatprep.mubr.bf16.mxu0 0
      %2121 = vmatmul.mubr.bf16.gmra.mxu0 %v2064
      %v2122 = vpop.f32.mrf.mxu0
      %v2123 = vadd.f32 0.0, %v2122
      %v2124 = vpop.f32.mrf.mxu0
      %v2125 = vpop.f32.mrf.mxu0
      %v2126 = vadd.f32 0.0, %v2125
      %v2127 = vpop.f32.mrf.mxu0
      %2128 = vmatprep.mubr.bf16.mxu0 0
      %2129 = vmatmul.mubr.bf16.gmra.mxu0 %v2067
      %v2130 = vpop.f32.mrf.mxu0
      %v2131 = vadd.f32 0.0, %v2130
      %v2132 = vpop.f32.mrf.mxu0
      %v2133 = vpop.f32.mrf.mxu0
      %v2134 = vadd.f32 0.0, %v2133
      %v2135 = vpop.f32.mrf.mxu0
      %2136 = vdwg.mxu0
      %2141 = vrot.lane.b32.xlu0 %v1107, 120
      %v2142 = vpop.permute.xlu0 %2141
      %2143 = vrot.lane.b32.xlu0 %v1108, 120
      %v2144 = vpop.permute.xlu0 %2143
      %2145 = vrot.lane.b32.xlu0 %v1109, 120
      %v2146 = vpop.permute.xlu0 %2145
      %2147 = vrot.lane.b32.xlu0 %v1110, 120
      %v2148 = vpop.permute.xlu0 %2147
      %v2150 = vsel %vm1211, %v2142, 0
      %v2153 = vsel %vm1211, %v2144, 0
      %v2156 = vsel %vm1211, %v2146, 0
      %v2159 = vsel %vm1211, %v2148, 0
      %v2162 = vsel %vm1224, %v2042, 0
      %2164 = vmatprep.subr.bf16.mxu0 0
      %2165 = vmatpush1.bf16.msra.mxu0 0
      %2166 = vmatprep.subr.bf16.mxu0 0
      %2167 = vmatpush1.bf16.msra.mxu0 0
      %2168 = vmatprep.subr.bf16.mxu0 0
      %2169 = vmatpush1.bf16.msra.mxu0 0
      %2170 = vmatprep.subr.bf16.mxu0 0
      %2171 = vmatpush1.bf16.msra.mxu0 0
      %2172 = vmatprep.subr.bf16.mxu0 0
      %2173 = vmatpush1.bf16.msra.mxu0 0
      %2174 = vmatprep.subr.bf16.mxu0 0
      %2175 = vmatpush1.bf16.msra.mxu0 0
      %2176 = vmatprep.subr.bf16.mxu0 0
      %2177 = vmatpush1.bf16.msra.mxu0 0
      %2178 = vmatprep.subr.bf16.mxu0 0
      %2179 = vmatpush1.bf16.msra.mxu0 %v2162
      %2180 = vmatprep.subr.bf16.mxu0 0
      %2181 = vmatpush2.bf16.msra.mxu0 0
      %2182 = vmatprep.subr.bf16.mxu0 0
      %2183 = vmatpush2.bf16.msra.mxu0 0
      %2184 = vmatprep.subr.bf16.mxu0 0
      %2185 = vmatpush2.bf16.msra.mxu0 0
      %2186 = vmatprep.subr.bf16.mxu0 0
      %2187 = vmatpush2.bf16.msra.mxu0 0
      %2188 = vmatprep.subr.bf16.mxu0 0
      %2189 = vmatpush2.bf16.msra.mxu0 0
      %2190 = vmatprep.subr.bf16.mxu0 0
      %2191 = vmatpush2.bf16.msra.mxu0 0
      %2192 = vmatprep.subr.bf16.mxu0 0
      %2193 = vmatpush2.bf16.msra.mxu0 0
      %2194 = vmatprep.subr.bf16.mxu0 0
      %2195 = vmatpush2.bf16.msra.mxu0 0
      %2196 = vmatprep.mubr.bf16.mxu0 0
      %2197 = vmatmul.mubr.bf16.gmra.mxu0 %v2150
      %v2198 = vpop.f32.mrf.mxu0
      %v2199 = vadd.f32 %v2107, %v2198
      %v2200 = vpop.f32.mrf.mxu0
      %v2201 = vpop.f32.mrf.mxu0
      %v2202 = vadd.f32 %v2110, %v2201
      %v2203 = vpop.f32.mrf.mxu0
      %2204 = vmatprep.mubr.bf16.mxu0 0
      %2205 = vmatmul.mubr.bf16.gmra.mxu0 %v2153
      %v2206 = vpop.f32.mrf.mxu0
      %v2207 = vadd.f32 %v2115, %v2206
      %v2208 = vpop.f32.mrf.mxu0
      %v2209 = vpop.f32.mrf.mxu0
      %v2210 = vadd.f32 %v2118, %v2209
      %v2211 = vpop.f32.mrf.mxu0
      %2212 = vmatprep.mubr.bf16.mxu0 0
      %2213 = vmatmul.mubr.bf16.gmra.mxu0 %v2156
      %v2214 = vpop.f32.mrf.mxu0
      %v2215 = vadd.f32 %v2123, %v2214
      %v2216 = vpop.f32.mrf.mxu0
      %v2217 = vpop.f32.mrf.mxu0
      %v2218 = vadd.f32 %v2126, %v2217
      %v2219 = vpop.f32.mrf.mxu0
      %2220 = vmatprep.mubr.bf16.mxu0 0
      %2221 = vmatmul.mubr.bf16.gmra.mxu0 %v2159
      %v2222 = vpop.f32.mrf.mxu0
      %v2223 = vadd.f32 %v2131, %v2222
      %v2224 = vpop.f32.mrf.mxu0
      %v2225 = vpop.f32.mrf.mxu0
      %v2226 = vadd.f32 %v2134, %v2225
      %v2227 = vpop.f32.mrf.mxu0
      %2228 = vdwg.mxu0
      %s2229 = scalar_lea.vmem %s4, 44
      %v2230 = vld [vmem:[%s2229] sm:$0xf]
      %2235 = vrot.lane.b32.xlu0 %v1132, 120
      %v2236 = vpop.permute.xlu0 %2235
      %2237 = vrot.lane.b32.xlu0 %v1133, 120
      %v2238 = vpop.permute.xlu0 %2237
      %2239 = vrot.lane.b32.xlu0 %v1134, 120
      %v2240 = vpop.permute.xlu0 %2239
      %2241 = vrot.lane.b32.xlu0 %v1135, 120
      %v2242 = vpop.permute.xlu0 %2241
      %v2244 = vsel %vm1211, %v2236, 0
      %v2247 = vsel %vm1211, %v2238, 0
      %v2250 = vsel %vm1211, %v2240, 0
      %v2253 = vsel %vm1211, %v2242, 0
      %v2256 = vsel %vm1224, %v2230, 0
      %2258 = vmatprep.subr.bf16.mxu0 0
      %2259 = vmatpush1.bf16.msra.mxu0 0
      %2260 = vmatprep.subr.bf16.mxu0 0
      %2261 = vmatpush1.bf16.msra.mxu0 0
      %2262 = vmatprep.subr.bf16.mxu0 0
      %2263 = vmatpush1.bf16.msra.mxu0 0
      %2264 = vmatprep.subr.bf16.mxu0 0
      %2265 = vmatpush1.bf16.msra.mxu0 0
      %2266 = vmatprep.subr.bf16.mxu0 0
      %2267 = vmatpush1.bf16.msra.mxu0 0
      %2268 = vmatprep.subr.bf16.mxu0 0
      %2269 = vmatpush1.bf16.msra.mxu0 0
      %2270 = vmatprep.subr.bf16.mxu0 0
      %2271 = vmatpush1.bf16.msra.mxu0 0
      %2272 = vmatprep.subr.bf16.mxu0 0
      %2273 = vmatpush1.bf16.msra.mxu0 %v2256
      %2274 = vmatprep.subr.bf16.mxu0 0
      %2275 = vmatpush2.bf16.msra.mxu0 0
      %2276 = vmatprep.subr.bf16.mxu0 0
      %2277 = vmatpush2.bf16.msra.mxu0 0
      %2278 = vmatprep.subr.bf16.mxu0 0
      %2279 = vmatpush2.bf16.msra.mxu0 0
      %2280 = vmatprep.subr.bf16.mxu0 0
      %2281 = vmatpush2.bf16.msra.mxu0 0
      %2282 = vmatprep.subr.bf16.mxu0 0
      %2283 = vmatpush2.bf16.msra.mxu0 0
      %2284 = vmatprep.subr.bf16.mxu0 0
      %2285 = vmatpush2.bf16.msra.mxu0 0
      %2286 = vmatprep.subr.bf16.mxu0 0
      %2287 = vmatpush2.bf16.msra.mxu0 0
      %2288 = vmatprep.subr.bf16.mxu0 0
      %2289 = vmatpush2.bf16.msra.mxu0 0
      %2290 = vmatprep.mubr.bf16.mxu0 0
      %2291 = vmatmul.mubr.bf16.gmra.mxu0 %v2244
      %v2292 = vpop.f32.mrf.mxu0
      %v2293 = vadd.f32 0.0, %v2292
      %v2294 = vpop.f32.mrf.mxu0
      %v2295 = vpop.f32.mrf.mxu0
      %v2296 = vadd.f32 0.0, %v2295
      %v2297 = vpop.f32.mrf.mxu0
      %2298 = vmatprep.mubr.bf16.mxu0 0
      %2299 = vmatmul.mubr.bf16.gmra.mxu0 %v2247
      %v2300 = vpop.f32.mrf.mxu0
      %v2301 = vadd.f32 0.0, %v2300
      %v2302 = vpop.f32.mrf.mxu0
      %v2303 = vpop.f32.mrf.mxu0
      %v2304 = vadd.f32 0.0, %v2303
      %v2305 = vpop.f32.mrf.mxu0
      %2306 = vmatprep.mubr.bf16.mxu0 0
      %2307 = vmatmul.mubr.bf16.gmra.mxu0 %v2250
      %v2308 = vpop.f32.mrf.mxu0
      %v2309 = vadd.f32 0.0, %v2308
      %v2310 = vpop.f32.mrf.mxu0
      %v2311 = vpop.f32.mrf.mxu0
      %v2312 = vadd.f32 0.0, %v2311
      %v2313 = vpop.f32.mrf.mxu0
      %2314 = vmatprep.mubr.bf16.mxu0 0
      %2315 = vmatmul.mubr.bf16.gmra.mxu0 %v2253
      %v2316 = vpop.f32.mrf.mxu0
      %v2317 = vadd.f32 0.0, %v2316
      %v2318 = vpop.f32.mrf.mxu0
      %v2319 = vpop.f32.mrf.mxu0
      %v2320 = vadd.f32 0.0, %v2319
      %v2321 = vpop.f32.mrf.mxu0
      %2322 = vdwg.mxu0
      %v2323 = vadd.f32 %v2199, %v2293
      %v2324 = vadd.f32 %v2202, %v2296
      %v2325 = vadd.f32 %v2207, %v2301
      %v2326 = vadd.f32 %v2210, %v2304
      %v2327 = vadd.f32 %v2215, %v2309
      %v2328 = vadd.f32 %v2218, %v2312
      %v2329 = vadd.f32 %v2223, %v2317
      %v2330 = vadd.f32 %v2226, %v2320
      %s2331 = scalar_lea.vmem %s4, 48
      %v2332 = vld [vmem:[%s2331] sm:$0xf]
      %2337 = vrot.lane.b32.xlu0 %v1144, 120
      %v2338 = vpop.permute.xlu0 %2337
      %2339 = vrot.lane.b32.xlu0 %v1145, 120
      %v2340 = vpop.permute.xlu0 %2339
      %2341 = vrot.lane.b32.xlu0 %v1146, 120
      %v2342 = vpop.permute.xlu0 %2341
      %2343 = vrot.lane.b32.xlu0 %v1147, 120
      %v2344 = vpop.permute.xlu0 %2343
      %v2346 = vsel %vm1211, %v2338, 0
      %v2349 = vsel %vm1211, %v2340, 0
      %v2352 = vsel %vm1211, %v2342, 0
      %v2355 = vsel %vm1211, %v2344, 0
      %v2358 = vsel %vm1224, %v2332, 0
      %2360 = vmatprep.subr.bf16.mxu0 0
      %2361 = vmatpush1.bf16.msra.mxu0 0
      %2362 = vmatprep.subr.bf16.mxu0 0
      %2363 = vmatpush1.bf16.msra.mxu0 0
      %2364 = vmatprep.subr.bf16.mxu0 0
      %2365 = vmatpush1.bf16.msra.mxu0 0
      %2366 = vmatprep.subr.bf16.mxu0 0
      %2367 = vmatpush1.bf16.msra.mxu0 0
      %2368 = vmatprep.subr.bf16.mxu0 0
      %2369 = vmatpush1.bf16.msra.mxu0 0
      %2370 = vmatprep.subr.bf16.mxu0 0
      %2371 = vmatpush1.bf16.msra.mxu0 0
      %2372 = vmatprep.subr.bf16.mxu0 0
      %2373 = vmatpush1.bf16.msra.mxu0 0
      %2374 = vmatprep.subr.bf16.mxu0 0
      %2375 = vmatpush1.bf16.msra.mxu0 %v2358
      %2376 = vmatprep.subr.bf16.mxu0 0
      %2377 = vmatpush2.bf16.msra.mxu0 0
      %2378 = vmatprep.subr.bf16.mxu0 0
      %2379 = vmatpush2.bf16.msra.mxu0 0
      %2380 = vmatprep.subr.bf16.mxu0 0
      %2381 = vmatpush2.bf16.msra.mxu0 0
      %2382 = vmatprep.subr.bf16.mxu0 0
      %2383 = vmatpush2.bf16.msra.mxu0 0
      %2384 = vmatprep.subr.bf16.mxu0 0
      %2385 = vmatpush2.bf16.msra.mxu0 0
      %2386 = vmatprep.subr.bf16.mxu0 0
      %2387 = vmatpush2.bf16.msra.mxu0 0
      %2388 = vmatprep.subr.bf16.mxu0 0
      %2389 = vmatpush2.bf16.msra.mxu0 0
      %2390 = vmatprep.subr.bf16.mxu0 0
      %2391 = vmatpush2.bf16.msra.mxu0 0
      %2392 = vmatprep.mubr.bf16.mxu0 0
      %2393 = vmatmul.mubr.bf16.gmra.mxu0 %v2346
      %v2394 = vpop.f32.mrf.mxu0
      %v2395 = vadd.f32 0.0, %v2394
      %v2396 = vpop.f32.mrf.mxu0
      %v2397 = vpop.f32.mrf.mxu0
      %v2398 = vadd.f32 0.0, %v2397
      %v2399 = vpop.f32.mrf.mxu0
      %2400 = vmatprep.mubr.bf16.mxu0 0
      %2401 = vmatmul.mubr.bf16.gmra.mxu0 %v2349
      %v2402 = vpop.f32.mrf.mxu0
      %v2403 = vadd.f32 0.0, %v2402
      %v2404 = vpop.f32.mrf.mxu0
      %v2405 = vpop.f32.mrf.mxu0
      %v2406 = vadd.f32 0.0, %v2405
      %v2407 = vpop.f32.mrf.mxu0
      %2408 = vmatprep.mubr.bf16.mxu0 0
      %2409 = vmatmul.mubr.bf16.gmra.mxu0 %v2352
      %v2410 = vpop.f32.mrf.mxu0
      %v2411 = vadd.f32 0.0, %v2410
      %v2412 = vpop.f32.mrf.mxu0
      %v2413 = vpop.f32.mrf.mxu0
      %v2414 = vadd.f32 0.0, %v2413
      %v2415 = vpop.f32.mrf.mxu0
      %2416 = vmatprep.mubr.bf16.mxu0 0
      %2417 = vmatmul.mubr.bf16.gmra.mxu0 %v2355
      %v2418 = vpop.f32.mrf.mxu0
      %v2419 = vadd.f32 0.0, %v2418
      %v2420 = vpop.f32.mrf.mxu0
      %v2421 = vpop.f32.mrf.mxu0
      %v2422 = vadd.f32 0.0, %v2421
      %v2423 = vpop.f32.mrf.mxu0
      %2424 = vdwg.mxu0
      %v2425 = vadd.f32 %v2323, %v2395
      %v2426 = vadd.f32 %v2324, %v2398
      %v2427 = vadd.f32 %v2325, %v2403
      %v2428 = vadd.f32 %v2326, %v2406
      %v2429 = vadd.f32 %v2327, %v2411
      %v2430 = vadd.f32 %v2328, %v2414
      %v2431 = vadd.f32 %v2329, %v2419
      %v2432 = vadd.f32 %v2330, %v2422
      %s2433 = scalar_lea.vmem %s4, 52
      %v2434 = vld [vmem:[%s2433] sm:$0xf]
      %2439 = vrot.lane.b32.xlu0 %v1156, 120
      %v2440 = vpop.permute.xlu0 %2439
      %2441 = vrot.lane.b32.xlu0 %v1157, 120
      %v2442 = vpop.permute.xlu0 %2441
      %2443 = vrot.lane.b32.xlu0 %v1158, 120
      %v2444 = vpop.permute.xlu0 %2443
      %2445 = vrot.lane.b32.xlu0 %v1159, 120
      %v2446 = vpop.permute.xlu0 %2445
      %v2448 = vsel %vm1211, %v2440, 0
      %v2451 = vsel %vm1211, %v2442, 0
      %v2454 = vsel %vm1211, %v2444, 0
      %v2457 = vsel %vm1211, %v2446, 0
      %v2460 = vsel %vm1224, %v2434, 0
      %2462 = vmatprep.subr.bf16.mxu0 0
      %2463 = vmatpush1.bf16.msra.mxu0 0
      %2464 = vmatprep.subr.bf16.mxu0 0
      %2465 = vmatpush1.bf16.msra.mxu0 0
      %2466 = vmatprep.subr.bf16.mxu0 0
      %2467 = vmatpush1.bf16.msra.mxu0 0
      %2468 = vmatprep.subr.bf16.mxu0 0
      %2469 = vmatpush1.bf16.msra.mxu0 0
      %2470 = vmatprep.subr.bf16.mxu0 0
      %2471 = vmatpush1.bf16.msra.mxu0 0
      %2472 = vmatprep.subr.bf16.mxu0 0
      %2473 = vmatpush1.bf16.msra.mxu0 0
      %2474 = vmatprep.subr.bf16.mxu0 0
      %2475 = vmatpush1.bf16.msra.mxu0 0
      %2476 = vmatprep.subr.bf16.mxu0 0
      %2477 = vmatpush1.bf16.msra.mxu0 %v2460
      %2478 = vmatprep.subr.bf16.mxu0 0
      %2479 = vmatpush2.bf16.msra.mxu0 0
      %2480 = vmatprep.subr.bf16.mxu0 0
      %2481 = vmatpush2.bf16.msra.mxu0 0
      %2482 = vmatprep.subr.bf16.mxu0 0
      %2483 = vmatpush2.bf16.msra.mxu0 0
      %2484 = vmatprep.subr.bf16.mxu0 0
      %2485 = vmatpush2.bf16.msra.mxu0 0
      %2486 = vmatprep.subr.bf16.mxu0 0
      %2487 = vmatpush2.bf16.msra.mxu0 0
      %2488 = vmatprep.subr.bf16.mxu0 0
      %2489 = vmatpush2.bf16.msra.mxu0 0
      %2490 = vmatprep.subr.bf16.mxu0 0
      %2491 = vmatpush2.bf16.msra.mxu0 0
      %2492 = vmatprep.subr.bf16.mxu0 0
      %2493 = vmatpush2.bf16.msra.mxu0 0
      %2494 = vmatprep.mubr.bf16.mxu0 0
      %2495 = vmatmul.mubr.bf16.gmra.mxu0 %v2448
      %v2496 = vpop.f32.mrf.mxu0
      %v2497 = vadd.f32 0.0, %v2496
      %v2498 = vpop.f32.mrf.mxu0
      %v2499 = vpop.f32.mrf.mxu0
      %v2500 = vadd.f32 0.0, %v2499
      %v2501 = vpop.f32.mrf.mxu0
      %2502 = vmatprep.mubr.bf16.mxu0 0
      %2503 = vmatmul.mubr.bf16.gmra.mxu0 %v2451
      %v2504 = vpop.f32.mrf.mxu0
      %v2505 = vadd.f32 0.0, %v2504
      %v2506 = vpop.f32.mrf.mxu0
      %v2507 = vpop.f32.mrf.mxu0
      %v2508 = vadd.f32 0.0, %v2507
      %v2509 = vpop.f32.mrf.mxu0
      %2510 = vmatprep.mubr.bf16.mxu0 0
      %2511 = vmatmul.mubr.bf16.gmra.mxu0 %v2454
      %v2512 = vpop.f32.mrf.mxu0
      %v2513 = vadd.f32 0.0, %v2512
      %v2514 = vpop.f32.mrf.mxu0
      %v2515 = vpop.f32.mrf.mxu0
      %v2516 = vadd.f32 0.0, %v2515
      %v2517 = vpop.f32.mrf.mxu0
      %2518 = vmatprep.mubr.bf16.mxu0 0
      %2519 = vmatmul.mubr.bf16.gmra.mxu0 %v2457
      %v2520 = vpop.f32.mrf.mxu0
      %v2521 = vadd.f32 0.0, %v2520
      %v2522 = vpop.f32.mrf.mxu0
      %v2523 = vpop.f32.mrf.mxu0
      %v2524 = vadd.f32 0.0, %v2523
      %v2525 = vpop.f32.mrf.mxu0
      %2526 = vdwg.mxu0
      %v2527 = vadd.f32 %v2425, %v2497
      %v2528 = vadd.f32 %v2426, %v2500
      %v2529 = vadd.f32 %v2427, %v2505
      %v2530 = vadd.f32 %v2428, %v2508
      %v2531 = vadd.f32 %v2429, %v2513
      %v2532 = vadd.f32 %v2430, %v2516
      %v2533 = vadd.f32 %v2431, %v2521
      %v2534 = vadd.f32 %v2432, %v2524
      %s2535 = scalar_lea.vmem %s4, 56
      %v2536 = vld [vmem:[%s2535] sm:$0xf]
      %2541 = vrot.lane.b32.xlu0 %v1168, 120
      %v2542 = vpop.permute.xlu0 %2541
      %2543 = vrot.lane.b32.xlu0 %v1169, 120
      %v2544 = vpop.permute.xlu0 %2543
      %2545 = vrot.lane.b32.xlu0 %v1170, 120
      %v2546 = vpop.permute.xlu0 %2545
      %2547 = vrot.lane.b32.xlu0 %v1171, 120
      %v2548 = vpop.permute.xlu0 %2547
      %v2550 = vsel %vm1211, %v2542, 0
      %v2553 = vsel %vm1211, %v2544, 0
      %v2556 = vsel %vm1211, %v2546, 0
      %v2559 = vsel %vm1211, %v2548, 0
      %v2562 = vsel %vm1224, %v2536, 0
      %2564 = vmatprep.subr.bf16.mxu0 0
      %2565 = vmatpush1.bf16.msra.mxu0 0
      %2566 = vmatprep.subr.bf16.mxu0 0
      %2567 = vmatpush1.bf16.msra.mxu0 0
      %2568 = vmatprep.subr.bf16.mxu0 0
      %2569 = vmatpush1.bf16.msra.mxu0 0
      %2570 = vmatprep.subr.bf16.mxu0 0
      %2571 = vmatpush1.bf16.msra.mxu0 0
      %2572 = vmatprep.subr.bf16.mxu0 0
      %2573 = vmatpush1.bf16.msra.mxu0 0
      %2574 = vmatprep.subr.bf16.mxu0 0
      %2575 = vmatpush1.bf16.msra.mxu0 0
      %2576 = vmatprep.subr.bf16.mxu0 0
      %2577 = vmatpush1.bf16.msra.mxu0 0
      %2578 = vmatprep.subr.bf16.mxu0 0
      %2579 = vmatpush1.bf16.msra.mxu0 %v2562
      %2580 = vmatprep.subr.bf16.mxu0 0
      %2581 = vmatpush2.bf16.msra.mxu0 0
      %2582 = vmatprep.subr.bf16.mxu0 0
      %2583 = vmatpush2.bf16.msra.mxu0 0
      %2584 = vmatprep.subr.bf16.mxu0 0
      %2585 = vmatpush2.bf16.msra.mxu0 0
      %2586 = vmatprep.subr.bf16.mxu0 0
      %2587 = vmatpush2.bf16.msra.mxu0 0
      %2588 = vmatprep.subr.bf16.mxu0 0
      %2589 = vmatpush2.bf16.msra.mxu0 0
      %2590 = vmatprep.subr.bf16.mxu0 0
      %2591 = vmatpush2.bf16.msra.mxu0 0
      %2592 = vmatprep.subr.bf16.mxu0 0
      %2593 = vmatpush2.bf16.msra.mxu0 0
      %2594 = vmatprep.subr.bf16.mxu0 0
      %2595 = vmatpush2.bf16.msra.mxu0 0
      %2596 = vmatprep.mubr.bf16.mxu0 0
      %2597 = vmatmul.mubr.bf16.gmra.mxu0 %v2550
      %v2598 = vpop.f32.mrf.mxu0
      %v2599 = vadd.f32 0.0, %v2598
      %v2600 = vpop.f32.mrf.mxu0
      %v2601 = vpop.f32.mrf.mxu0
      %v2602 = vadd.f32 0.0, %v2601
      %v2603 = vpop.f32.mrf.mxu0
      %2604 = vmatprep.mubr.bf16.mxu0 0
      %2605 = vmatmul.mubr.bf16.gmra.mxu0 %v2553
      %v2606 = vpop.f32.mrf.mxu0
      %v2607 = vadd.f32 0.0, %v2606
      %v2608 = vpop.f32.mrf.mxu0
      %v2609 = vpop.f32.mrf.mxu0
      %v2610 = vadd.f32 0.0, %v2609
      %v2611 = vpop.f32.mrf.mxu0
      %2612 = vmatprep.mubr.bf16.mxu0 0
      %2613 = vmatmul.mubr.bf16.gmra.mxu0 %v2556
      %v2614 = vpop.f32.mrf.mxu0
      %v2615 = vadd.f32 0.0, %v2614
      %v2616 = vpop.f32.mrf.mxu0
      %v2617 = vpop.f32.mrf.mxu0
      %v2618 = vadd.f32 0.0, %v2617
      %v2619 = vpop.f32.mrf.mxu0
      %2620 = vmatprep.mubr.bf16.mxu0 0
      %2621 = vmatmul.mubr.bf16.gmra.mxu0 %v2559
      %v2622 = vpop.f32.mrf.mxu0
      %v2623 = vadd.f32 0.0, %v2622
      %v2624 = vpop.f32.mrf.mxu0
      %v2625 = vpop.f32.mrf.mxu0
      %v2626 = vadd.f32 0.0, %v2625
      %v2627 = vpop.f32.mrf.mxu0
      %2628 = vdwg.mxu0
      %v2629 = vadd.f32 %v2527, %v2599
      %v2630 = vadd.f32 %v2528, %v2602
      %v2631 = vadd.f32 %v2529, %v2607
      %v2632 = vadd.f32 %v2530, %v2610
      %v2633 = vadd.f32 %v2531, %v2615
      %v2634 = vadd.f32 %v2532, %v2618
      %v2635 = vadd.f32 %v2533, %v2623
      %v2636 = vadd.f32 %v2534, %v2626
      %s2637 = scalar_lea.vmem %s4, 60
      %v2638 = vld [vmem:[%s2637] sm:$0xf]
      %2643 = vrot.lane.b32.xlu0 %v1180, 120
      %v2644 = vpop.permute.xlu0 %2643
      %2645 = vrot.lane.b32.xlu0 %v1181, 120
      %v2646 = vpop.permute.xlu0 %2645
      %2647 = vrot.lane.b32.xlu0 %v1182, 120
      %v2648 = vpop.permute.xlu0 %2647
      %2649 = vrot.lane.b32.xlu0 %v1183, 120
      %v2650 = vpop.permute.xlu0 %2649
      %v2652 = vsel %vm1211, %v2644, 0
      %v2655 = vsel %vm1211, %v2646, 0
      %v2658 = vsel %vm1211, %v2648, 0
      %v2661 = vsel %vm1211, %v2650, 0
      %v2664 = vsel %vm1224, %v2638, 0
      %2666 = vmatprep.subr.bf16.mxu0 0
      %2667 = vmatpush1.bf16.msra.mxu0 0
      %2668 = vmatprep.subr.bf16.mxu0 0
      %2669 = vmatpush1.bf16.msra.mxu0 0
      %2670 = vmatprep.subr.bf16.mxu0 0
      %2671 = vmatpush1.bf16.msra.mxu0 0
      %2672 = vmatprep.subr.bf16.mxu0 0
      %2673 = vmatpush1.bf16.msra.mxu0 0
      %2674 = vmatprep.subr.bf16.mxu0 0
      %2675 = vmatpush1.bf16.msra.mxu0 0
      %2676 = vmatprep.subr.bf16.mxu0 0
      %2677 = vmatpush1.bf16.msra.mxu0 0
      %2678 = vmatprep.subr.bf16.mxu0 0
      %2679 = vmatpush1.bf16.msra.mxu0 0
      %2680 = vmatprep.subr.bf16.mxu0 0
      %2681 = vmatpush1.bf16.msra.mxu0 %v2664
      %2682 = vmatprep.subr.bf16.mxu0 0
      %2683 = vmatpush2.bf16.msra.mxu0 0
      %2684 = vmatprep.subr.bf16.mxu0 0
      %2685 = vmatpush2.bf16.msra.mxu0 0
      %2686 = vmatprep.subr.bf16.mxu0 0
      %2687 = vmatpush2.bf16.msra.mxu0 0
      %2688 = vmatprep.subr.bf16.mxu0 0
      %2689 = vmatpush2.bf16.msra.mxu0 0
      %2690 = vmatprep.subr.bf16.mxu0 0
      %2691 = vmatpush2.bf16.msra.mxu0 0
      %2692 = vmatprep.subr.bf16.mxu0 0
      %2693 = vmatpush2.bf16.msra.mxu0 0
      %2694 = vmatprep.subr.bf16.mxu0 0
      %2695 = vmatpush2.bf16.msra.mxu0 0
      %2696 = vmatprep.subr.bf16.mxu0 0
      %2697 = vmatpush2.bf16.msra.mxu0 0
      %2698 = vmatprep.mubr.bf16.mxu0 0
      %2699 = vmatmul.mubr.bf16.gmra.mxu0 %v2652
      %v2700 = vpop.f32.mrf.mxu0
      %v2701 = vadd.f32 0.0, %v2700
      %v2702 = vpop.f32.mrf.mxu0
      %v2703 = vpop.f32.mrf.mxu0
      %v2704 = vadd.f32 0.0, %v2703
      %v2705 = vpop.f32.mrf.mxu0
      %2706 = vmatprep.mubr.bf16.mxu0 0
      %2707 = vmatmul.mubr.bf16.gmra.mxu0 %v2655
      %v2708 = vpop.f32.mrf.mxu0
      %v2709 = vadd.f32 0.0, %v2708
      %v2710 = vpop.f32.mrf.mxu0
      %v2711 = vpop.f32.mrf.mxu0
      %v2712 = vadd.f32 0.0, %v2711
      %v2713 = vpop.f32.mrf.mxu0
      %2714 = vmatprep.mubr.bf16.mxu0 0
      %2715 = vmatmul.mubr.bf16.gmra.mxu0 %v2658
      %v2716 = vpop.f32.mrf.mxu0
      %v2717 = vadd.f32 0.0, %v2716
      %v2718 = vpop.f32.mrf.mxu0
      %v2719 = vpop.f32.mrf.mxu0
      %v2720 = vadd.f32 0.0, %v2719
      %v2721 = vpop.f32.mrf.mxu0
      %2722 = vmatprep.mubr.bf16.mxu0 0
      %2723 = vmatmul.mubr.bf16.gmra.mxu0 %v2661
      %v2724 = vpop.f32.mrf.mxu0
      %v2725 = vadd.f32 0.0, %v2724
      %v2726 = vpop.f32.mrf.mxu0
      %v2727 = vpop.f32.mrf.mxu0
      %v2728 = vadd.f32 0.0, %v2727
      %v2729 = vpop.f32.mrf.mxu0
      %2730 = vdwg.mxu0
      %v2731 = vadd.f32 %v2629, %v2701
      %v2732 = vadd.f32 %v2630, %v2704
      %v2733 = vadd.f32 %v2631, %v2709
      %v2734 = vadd.f32 %v2632, %v2712
      %v2735 = vadd.f32 %v2633, %v2717
      %v2736 = vadd.f32 %v2634, %v2720
      %v2737 = vadd.f32 %v2635, %v2725
      %v2738 = vadd.f32 %v2636, %v2728
      %s2739 = scalar_lea.vmem %s4, 64
      %v2740 = vld [vmem:[%s2739] sm:$0xf]
      %2745 = vrot.lane.b32.xlu0 %v1192, 120
      %v2746 = vpop.permute.xlu0 %2745
      %2747 = vrot.lane.b32.xlu0 %v1193, 120
      %v2748 = vpop.permute.xlu0 %2747
      %2749 = vrot.lane.b32.xlu0 %v1194, 120
      %v2750 = vpop.permute.xlu0 %2749
      %2751 = vrot.lane.b32.xlu0 %v1195, 120
      %v2752 = vpop.permute.xlu0 %2751
      %v2754 = vsel %vm1211, %v2746, 0
      %v2757 = vsel %vm1211, %v2748, 0
      %v2760 = vsel %vm1211, %v2750, 0
      %v2763 = vsel %vm1211, %v2752, 0
      %v2766 = vsel %vm1224, %v2740, 0
      %2768 = vmatprep.subr.bf16.mxu0 0
      %2769 = vmatpush1.bf16.msra.mxu0 0
      %2770 = vmatprep.subr.bf16.mxu0 0
      %2771 = vmatpush1.bf16.msra.mxu0 0
      %2772 = vmatprep.subr.bf16.mxu0 0
      %2773 = vmatpush1.bf16.msra.mxu0 0
      %2774 = vmatprep.subr.bf16.mxu0 0
      %2775 = vmatpush1.bf16.msra.mxu0 0
      %2776 = vmatprep.subr.bf16.mxu0 0
      %2777 = vmatpush1.bf16.msra.mxu0 0
      %2778 = vmatprep.subr.bf16.mxu0 0
      %2779 = vmatpush1.bf16.msra.mxu0 0
      %2780 = vmatprep.subr.bf16.mxu0 0
      %2781 = vmatpush1.bf16.msra.mxu0 0
      %2782 = vmatprep.subr.bf16.mxu0 0
      %2783 = vmatpush1.bf16.msra.mxu0 %v2766
      %2784 = vmatprep.subr.bf16.mxu0 0
      %2785 = vmatpush2.bf16.msra.mxu0 0
      %2786 = vmatprep.subr.bf16.mxu0 0
      %2787 = vmatpush2.bf16.msra.mxu0 0
      %2788 = vmatprep.subr.bf16.mxu0 0
      %2789 = vmatpush2.bf16.msra.mxu0 0
      %2790 = vmatprep.subr.bf16.mxu0 0
      %2791 = vmatpush2.bf16.msra.mxu0 0
      %2792 = vmatprep.subr.bf16.mxu0 0
      %2793 = vmatpush2.bf16.msra.mxu0 0
      %2794 = vmatprep.subr.bf16.mxu0 0
      %2795 = vmatpush2.bf16.msra.mxu0 0
      %2796 = vmatprep.subr.bf16.mxu0 0
      %2797 = vmatpush2.bf16.msra.mxu0 0
      %2798 = vmatprep.subr.bf16.mxu0 0
      %2799 = vmatpush2.bf16.msra.mxu0 0
      %2800 = vmatprep.mubr.bf16.mxu0 0
      %2801 = vmatmul.mubr.bf16.gmra.mxu0 %v2754
      %v2802 = vpop.f32.mrf.mxu0
      %v2803 = vadd.f32 0.0, %v2802
      %v2804 = vpop.f32.mrf.mxu0
      %v2805 = vpop.f32.mrf.mxu0
      %v2806 = vadd.f32 0.0, %v2805
      %v2807 = vpop.f32.mrf.mxu0
      %2808 = vmatprep.mubr.bf16.mxu0 0
      %2809 = vmatmul.mubr.bf16.gmra.mxu0 %v2757
      %v2810 = vpop.f32.mrf.mxu0
      %v2811 = vadd.f32 0.0, %v2810
      %v2812 = vpop.f32.mrf.mxu0
      %v2813 = vpop.f32.mrf.mxu0
      %v2814 = vadd.f32 0.0, %v2813
      %v2815 = vpop.f32.mrf.mxu0
      %2816 = vmatprep.mubr.bf16.mxu0 0
      %2817 = vmatmul.mubr.bf16.gmra.mxu0 %v2760
      %v2818 = vpop.f32.mrf.mxu0
      %v2819 = vadd.f32 0.0, %v2818
      %v2820 = vpop.f32.mrf.mxu0
      %v2821 = vpop.f32.mrf.mxu0
      %v2822 = vadd.f32 0.0, %v2821
      %v2823 = vpop.f32.mrf.mxu0
      %2824 = vmatprep.mubr.bf16.mxu0 0
      %2825 = vmatmul.mubr.bf16.gmra.mxu0 %v2763
      %v2826 = vpop.f32.mrf.mxu0
      %v2827 = vadd.f32 0.0, %v2826
      %v2828 = vpop.f32.mrf.mxu0
      %v2829 = vpop.f32.mrf.mxu0
      %v2830 = vadd.f32 0.0, %v2829
      %v2831 = vpop.f32.mrf.mxu0
      %2832 = vdwg.mxu0
      %v2833 = vadd.f32 %v2731, %v2803
      %v2834 = vadd.f32 %v2732, %v2806
      %v2835 = vadd.f32 %v2733, %v2811
      %v2836 = vadd.f32 %v2734, %v2814
      %v2837 = vadd.f32 %v2735, %v2819
      %v2838 = vadd.f32 %v2736, %v2822
      %v2839 = vadd.f32 %v2737, %v2827
      %v2840 = vadd.f32 %v2738, %v2830
      %s2841 = scalar_lea.vmem %s4, 68
      %v2842 = vld [vmem:[%s2841] sm:$0xf]
      %2847 = vrot.lane.b32.xlu0 %v1204, 120
      %v2848 = vpop.permute.xlu0 %2847
      %2849 = vrot.lane.b32.xlu0 %v1205, 120
      %v2850 = vpop.permute.xlu0 %2849
      %2851 = vrot.lane.b32.xlu0 %v1206, 120
      %v2852 = vpop.permute.xlu0 %2851
      %2853 = vrot.lane.b32.xlu0 %v1207, 120
      %v2854 = vpop.permute.xlu0 %2853
      %v2856 = vsel %vm1211, %v2848, 0
      %v2859 = vsel %vm1211, %v2850, 0
      %v2862 = vsel %vm1211, %v2852, 0
      %v2865 = vsel %vm1211, %v2854, 0
      %v2868 = vsel %vm1224, %v2842, 0
      %2870 = vmatprep.subr.bf16.mxu0 0
      %2871 = vmatpush1.bf16.msra.mxu0 0
      %2872 = vmatprep.subr.bf16.mxu0 0
      %2873 = vmatpush1.bf16.msra.mxu0 0
      %2874 = vmatprep.subr.bf16.mxu0 0
      %2875 = vmatpush1.bf16.msra.mxu0 0
      %2876 = vmatprep.subr.bf16.mxu0 0
      %2877 = vmatpush1.bf16.msra.mxu0 0
      %2878 = vmatprep.subr.bf16.mxu0 0
      %2879 = vmatpush1.bf16.msra.mxu0 0
      %2880 = vmatprep.subr.bf16.mxu0 0
      %2881 = vmatpush1.bf16.msra.mxu0 0
      %2882 = vmatprep.subr.bf16.mxu0 0
      %2883 = vmatpush1.bf16.msra.mxu0 0
      %2884 = vmatprep.subr.bf16.mxu0 0
      %2885 = vmatpush1.bf16.msra.mxu0 %v2868
      %2886 = vmatprep.subr.bf16.mxu0 0
      %2887 = vmatpush2.bf16.msra.mxu0 0
      %2888 = vmatprep.subr.bf16.mxu0 0
      %2889 = vmatpush2.bf16.msra.mxu0 0
      %2890 = vmatprep.subr.bf16.mxu0 0
      %2891 = vmatpush2.bf16.msra.mxu0 0
      %2892 = vmatprep.subr.bf16.mxu0 0
      %2893 = vmatpush2.bf16.msra.mxu0 0
      %2894 = vmatprep.subr.bf16.mxu0 0
      %2895 = vmatpush2.bf16.msra.mxu0 0
      %2896 = vmatprep.subr.bf16.mxu0 0
      %2897 = vmatpush2.bf16.msra.mxu0 0
      %2898 = vmatprep.subr.bf16.mxu0 0
      %2899 = vmatpush2.bf16.msra.mxu0 0
      %2900 = vmatprep.subr.bf16.mxu0 0
      %2901 = vmatpush2.bf16.msra.mxu0 0
      %2902 = vmatprep.mubr.bf16.mxu0 0
      %2903 = vmatmul.mubr.bf16.gmra.mxu0 %v2856
      %v2904 = vpop.f32.mrf.mxu0
      %v2905 = vadd.f32 0.0, %v2904
      %v2906 = vpop.f32.mrf.mxu0
      %v2907 = vpop.f32.mrf.mxu0
      %v2908 = vadd.f32 0.0, %v2907
      %v2909 = vpop.f32.mrf.mxu0
      %2910 = vmatprep.mubr.bf16.mxu0 0
      %2911 = vmatmul.mubr.bf16.gmra.mxu0 %v2859
      %v2912 = vpop.f32.mrf.mxu0
      %v2913 = vadd.f32 0.0, %v2912
      %v2914 = vpop.f32.mrf.mxu0
      %v2915 = vpop.f32.mrf.mxu0
      %v2916 = vadd.f32 0.0, %v2915
      %v2917 = vpop.f32.mrf.mxu0
      %2918 = vmatprep.mubr.bf16.mxu0 0
      %2919 = vmatmul.mubr.bf16.gmra.mxu0 %v2862
      %v2920 = vpop.f32.mrf.mxu0
      %v2921 = vadd.f32 0.0, %v2920
      %v2922 = vpop.f32.mrf.mxu0
      %v2923 = vpop.f32.mrf.mxu0
      %v2924 = vadd.f32 0.0, %v2923
      %v2925 = vpop.f32.mrf.mxu0
      %2926 = vmatprep.mubr.bf16.mxu0 0
      %2927 = vmatmul.mubr.bf16.gmra.mxu0 %v2865
      %v2928 = vpop.f32.mrf.mxu0
      %v2929 = vadd.f32 0.0, %v2928
      %v2930 = vpop.f32.mrf.mxu0
      %v2931 = vpop.f32.mrf.mxu0
      %v2932 = vadd.f32 0.0, %v2931
      %v2933 = vpop.f32.mrf.mxu0
      %2934 = vdwg.mxu0
      %v2935 = vadd.f32 %v2833, %v2905
      %v2936 = vadd.f32 %v2834, %v2908
      %v2937 = vadd.f32 %v2835, %v2913
      %v2938 = vadd.f32 %v2836, %v2916
      %v2939 = vadd.f32 %v2837, %v2921
      %v2940 = vadd.f32 %v2838, %v2924
      %v2941 = vadd.f32 %v2839, %v2929
      %v2942 = vadd.f32 %v2840, %v2932
      %2943 = vrot.lane.b32.xlu0 %v2008, 120
      %v2944 = vpop.permute.xlu0 %2943
      %v2946 = vmul.f32 %v2935, %v2944
      %v2947 = vmul.f32 %v2936, %v2944
      %v2948 = vmul.f32 %v2937, %v2944
      %v2949 = vmul.f32 %v2938, %v2944
      %v2950 = vmul.f32 %v2939, %v2944
      %v2951 = vmul.f32 %v2940, %v2944
      %v2952 = vmul.f32 %v2941, %v2944
      %v2953 = vmul.f32 %v2942, %v2944
      %2954 = vrot.lane.b32.xlu0 %v2023, 120
      %v2955 = vpop.permute.xlu0 %2954
      %v2957 = vadd.f32 %v2946, %v2955
      %v2958 = vadd.f32 %v2947, %v2955
      %v2959 = vadd.f32 %v2948, %v2955
      %v2960 = vadd.f32 %v2949, %v2955
      %v2961 = vadd.f32 %v2950, %v2955
      %v2962 = vadd.f32 %v2951, %v2955
      %v2963 = vadd.f32 %v2952, %v2955
      %v2964 = vadd.f32 %v2953, %v2955
      %v2965 = vmax.f32 %v2957, 0.0
      %v2966 = vmax.f32 %v2958, 0.0
      %v2967 = vmax.f32 %v2959, 0.0
      %v2968 = vmax.f32 %v2960, 0.0
      %v2969 = vmax.f32 %v2961, 0.0
      %v2970 = vmax.f32 %v2962, 0.0
      %v2971 = vmax.f32 %v2963, 0.0
      %v2972 = vmax.f32 %v2964, 0.0
      %v2973 = vld [vmem:[%s8] sm:$0x1]
      %v2974 = vsel %vm1211, %v2033, 0.0
      %v2975 = vsel %vm1211, %v2034, 0.0
      %v2976 = vadd.f32 %v2974, %v2975
      %v2977 = vsel %vm1211, %v2035, 0.0
      %v2978 = vadd.f32 %v2976, %v2977
      %v2979 = vsel %vm1211, %v2036, 0.0
      %v2980 = vadd.f32 %v2978, %v2979
      %v2981 = vsel %vm1211, %v2037, 0.0
      %v2982 = vadd.f32 %v2980, %v2981
      %v2983 = vsel %vm1211, %v2038, 0.0
      %v2984 = vadd.f32 %v2982, %v2983
      %v2985 = vsel %vm1211, %v2039, 0.0
      %v2986 = vadd.f32 %v2984, %v2985
      %v2987 = vsel %vm1211, %v2040, 0.0
      %v2988 = vadd.f32 %v2986, %v2987
      %v2989 = vrot.slane %v2988, 4
      %v2990 = vadd.f32 %v2988, %v2989
      %v2991 = vrot.slane %v2990, 2
      %v2992 = vadd.f32 %v2990, %v2991
      %v2993 = vrot.slane %v2992, 1
      %v2994 = vadd.f32 %v2992, %v2993
      %v2995 = vrcp.pop 64.0
      %v2996 = vmul.f32 %v2994, %v2995
      %v2997 = vpack.c.bf16 %v2996, %v2996
      %v2998 = vld [vmem:[%s7] sm:$0xf]
      %v3000 = vsel %vm1211, %v2997, 0
      %v3003 = vsel %vm1224, %v2998, 0
      %3005 = vmatprep.subr.bf16.mxu0 0
      %3006 = vmatpush1.bf16.msra.mxu0 0
      %3007 = vmatprep.subr.bf16.mxu0 0
      %3008 = vmatpush1.bf16.msra.mxu0 0
      %3009 = vmatprep.subr.bf16.mxu0 0
      %3010 = vmatpush1.bf16.msra.mxu0 0
      %3011 = vmatprep.subr.bf16.mxu0 0
      %3012 = vmatpush1.bf16.msra.mxu0 0
      %3013 = vmatprep.subr.bf16.mxu0 0
      %3014 = vmatpush1.bf16.msra.mxu0 0
      %3015 = vmatprep.subr.bf16.mxu0 0
      %3016 = vmatpush1.bf16.msra.mxu0 0
      %3017 = vmatprep.subr.bf16.mxu0 0
      %3018 = vmatpush1.bf16.msra.mxu0 0
      %3019 = vmatprep.subr.bf16.mxu0 0
      %3020 = vmatpush1.bf16.msra.mxu0 %v3003
      %3021 = vmatprep.subr.bf16.mxu0 0
      %3022 = vmatpush2.bf16.msra.mxu0 0
      %3023 = vmatprep.subr.bf16.mxu0 0
      %3024 = vmatpush2.bf16.msra.mxu0 0
      %3025 = vmatprep.subr.bf16.mxu0 0
      %3026 = vmatpush2.bf16.msra.mxu0 0
      %3027 = vmatprep.subr.bf16.mxu0 0
      %3028 = vmatpush2.bf16.msra.mxu0 0
      %3029 = vmatprep.subr.bf16.mxu0 0
      %3030 = vmatpush2.bf16.msra.mxu0 0
      %3031 = vmatprep.subr.bf16.mxu0 0
      %3032 = vmatpush2.bf16.msra.mxu0 0
      %3033 = vmatprep.subr.bf16.mxu0 0
      %3034 = vmatpush2.bf16.msra.mxu0 0
      %3035 = vmatprep.subr.bf16.mxu0 0
      %3036 = vmatpush2.bf16.msra.mxu0 0
      %3037 = vmatprep.mubr.bf16.mxu0 0
      %3038 = vmatmul.mubr.bf16.gmra.mxu0 %v3000
      %v3039 = vpop.f32.mrf.mxu0
      %v3040 = vadd.f32 0.0, %v3039
      %v3041 = vpop.f32.mrf.mxu0
      %v3042 = vpop.f32.mrf.mxu0
      %v3043 = vpop.f32.mrf.mxu0
      %3044 = vdwg.mxu0
      %v3045 = vadd.f32 %v2973, %v3040
      %v3046 = vsel %vm1211, %v2965, 0.0
      %v3047 = vsel %vm1211, %v2966, 0.0
      %v3048 = vadd.f32 %v3046, %v3047
      %v3049 = vsel %vm1211, %v2967, 0.0
      %v3050 = vadd.f32 %v3048, %v3049
      %v3051 = vsel %vm1211, %v2968, 0.0
      %v3052 = vadd.f32 %v3050, %v3051
      %v3053 = vsel %vm1211, %v2969, 0.0
      %v3054 = vadd.f32 %v3052, %v3053
      %v3055 = vsel %vm1211, %v2970, 0.0
      %v3056 = vadd.f32 %v3054, %v3055
      %v3057 = vsel %vm1211, %v2971, 0.0
      %v3058 = vadd.f32 %v3056, %v3057
      %v3059 = vsel %vm1211, %v2972, 0.0
      %v3060 = vadd.f32 %v3058, %v3059
      %v3061 = vrot.slane %v3060, 4
      %v3062 = vadd.f32 %v3060, %v3061
      %v3063 = vrot.slane %v3062, 2
      %v3064 = vadd.f32 %v3062, %v3063
      %v3065 = vrot.slane %v3064, 1
      %v3066 = vadd.f32 %v3064, %v3065
      %v3067 = vmul.f32 %v3066, %v2995
      %v3068 = vpack.c.bf16 %v3067, %v3067
      %s3069 = scalar_lea.vmem %s7, 4
      %v3070 = vld [vmem:[%s3069] sm:$0xf]
      %v3072 = vsel %vm1211, %v3068, 0
      %v3075 = vsel %vm1224, %v3070, 0
      %3077 = vmatprep.subr.bf16.mxu0 0
      %3078 = vmatpush1.bf16.msra.mxu0 0
      %3079 = vmatprep.subr.bf16.mxu0 0
      %3080 = vmatpush1.bf16.msra.mxu0 0
      %3081 = vmatprep.subr.bf16.mxu0 0
      %3082 = vmatpush1.bf16.msra.mxu0 0
      %3083 = vmatprep.subr.bf16.mxu0 0
      %3084 = vmatpush1.bf16.msra.mxu0 0
      %3085 = vmatprep.subr.bf16.mxu0 0
      %3086 = vmatpush1.bf16.msra.mxu0 0
      %3087 = vmatprep.subr.bf16.mxu0 0
      %3088 = vmatpush1.bf16.msra.mxu0 0
      %3089 = vmatprep.subr.bf16.mxu0 0
      %3090 = vmatpush1.bf16.msra.mxu0 0
      %3091 = vmatprep.subr.bf16.mxu0 0
      %3092 = vmatpush1.bf16.msra.mxu0 %v3075
      %3093 = vmatprep.subr.bf16.mxu0 0
      %3094 = vmatpush2.bf16.msra.mxu0 0
      %3095 = vmatprep.subr.bf16.mxu0 0
      %3096 = vmatpush2.bf16.msra.mxu0 0
      %3097 = vmatprep.subr.bf16.mxu0 0
      %3098 = vmatpush2.bf16.msra.mxu0 0
      %3099 = vmatprep.subr.bf16.mxu0 0
      %3100 = vmatpush2.bf16.msra.mxu0 0
      %3101 = vmatprep.subr.bf16.mxu0 0
      %3102 = vmatpush2.bf16.msra.mxu0 0
      %3103 = vmatprep.subr.bf16.mxu0 0
      %3104 = vmatpush2.bf16.msra.mxu0 0
      %3105 = vmatprep.subr.bf16.mxu0 0
      %3106 = vmatpush2.bf16.msra.mxu0 0
      %3107 = vmatprep.subr.bf16.mxu0 0
      %3108 = vmatpush2.bf16.msra.mxu0 0
      %3109 = vmatprep.mubr.bf16.mxu0 0
      %3110 = vmatmul.mubr.bf16.gmra.mxu0 %v3072
      %v3111 = vpop.f32.mrf.mxu0
      %v3112 = vadd.f32 0.0, %v3111
      %v3113 = vpop.f32.mrf.mxu0
      %v3114 = vpop.f32.mrf.mxu0
      %v3115 = vpop.f32.mrf.mxu0
      %3116 = vdwg.mxu0
      %v3117 = vadd.f32 %v3045, %v3112
      %v3118 = vmax.f32 %v3117, 0.0
      %v3119 = vpack.c.bf16 %v3118, %v3118
      %v3120 = vld [vmem:[%s9] sm:$0x3]
      %v3121 = vld [vmem:[%s10] sm:$0x1]
      %vm3122 = vcmask 31744
      %v3124 = vsel %vm3122, %v3119, 0
      %vm3126 = vcmask 1041408
      %v3128 = vsel %vm3126, %v3120, 0
      %3130 = vmatprep.subr.bf16.mxu0 0
      %3131 = vmatpush1.bf16.msra.mxu0 0
      %3132 = vmatprep.subr.bf16.mxu0 0
      %3133 = vmatpush1.bf16.msra.mxu0 0
      %3134 = vmatprep.subr.bf16.mxu0 0
      %3135 = vmatpush1.bf16.msra.mxu0 0
      %3136 = vmatprep.subr.bf16.mxu0 0
      %3137 = vmatpush1.bf16.msra.mxu0 0
      %3138 = vmatprep.subr.bf16.mxu0 0
      %3139 = vmatpush1.bf16.msra.mxu0 0
      %3140 = vmatprep.subr.bf16.mxu0 0
      %3141 = vmatpush1.bf16.msra.mxu0 0
      %3142 = vmatprep.subr.bf16.mxu0 0
      %3143 = vmatpush1.bf16.msra.mxu0 0
      %3144 = vmatprep.subr.bf16.mxu0 0
      %3145 = vmatpush1.bf16.msra.mxu0 %v3128
      %3146 = vmatprep.subr.bf16.mxu0 0
      %3147 = vmatpush2.bf16.msra.mxu0 0
      %3148 = vmatprep.subr.bf16.mxu0 0
      %3149 = vmatpush2.bf16.msra.mxu0 0
      %3150 = vmatprep.subr.bf16.mxu0 0
      %3151 = vmatpush2.bf16.msra.mxu0 0
      %3152 = vmatprep.subr.bf16.mxu0 0
      %3153 = vmatpush2.bf16.msra.mxu0 0
      %3154 = vmatprep.subr.bf16.mxu0 0
      %3155 = vmatpush2.bf16.msra.mxu0 0
      %3156 = vmatprep.subr.bf16.mxu0 0
      %3157 = vmatpush2.bf16.msra.mxu0 0
      %3158 = vmatprep.subr.bf16.mxu0 0
      %3159 = vmatpush2.bf16.msra.mxu0 0
      %3160 = vmatprep.subr.bf16.mxu0 0
      %3161 = vmatpush2.bf16.msra.mxu0 0
      %3162 = vmatprep.mubr.bf16.mxu0 0
      %3163 = vmatmul.mubr.bf16.gmra.mxu0 %v3124
      %v3164 = vpop.f32.mrf.mxu0
      %v3165 = vadd.f32 %v3121, %v3164
      %v3166 = vpop.f32.mrf.mxu0
      %v3167 = vpop.f32.mrf.mxu0
      %v3168 = vpop.f32.mrf.mxu0
      %3169 = vdwg.mxu0
      %v3170 = vsub.f32 0.0, %v3165
      %v3171 = vmul.f32 %v3170, 1.442695
      %v3172 = vpow.pop %v3171
      %v3173 = vadd.f32 %v3172, 1.0
      %v3174 = vrcp.pop %v3173
      %v3175 = vmul.f32 1.0, %v3174
      %v3176 = vlaneseq
      %v3177 = vshrl.u32 %v3176, 7
      %v3178 = vsub.s32 0, %v3177
      %v3179 = vrot.slane %v3175, %v3178
      %v3180 = vmul.f32 %v2033, %v3179
      %v3181 = vmul.f32 %v2034, %v3179
      %v3182 = vmul.f32 %v2035, %v3179
      %v3183 = vmul.f32 %v2036, %v3179
      %v3184 = vmul.f32 %v2037, %v3179
      %v3185 = vmul.f32 %v2038, %v3179
      %v3186 = vmul.f32 %v2039, %v3179
      %v3187 = vmul.f32 %v2040, %v3179
      %v3188 = vpack.c.bf16 %v3181, %v3180
      %v3189 = vpack.c.bf16 %v3183, %v3182
      %v3190 = vpack.c.bf16 %v3185, %v3184
      %v3191 = vpack.c.bf16 %v3187, %v3186
      %v3192 = vld [vmem:[%s11] sm:$0xf]
      %3194 = vrot.lane.b32.xlu0 %v3179, 120
      %v3195 = vpop.permute.xlu0 %3194
      %v3197 = vmul.f32 %v2965, %v3195
      %v3198 = vmul.f32 %v2966, %v3195
      %v3199 = vmul.f32 %v2967, %v3195
      %v3200 = vmul.f32 %v2968, %v3195
      %v3201 = vmul.f32 %v2969, %v3195
      %v3202 = vmul.f32 %v2970, %v3195
      %v3203 = vmul.f32 %v2971, %v3195
      %v3204 = vmul.f32 %v2972, %v3195
      %v3205 = vpack.c.bf16 %v3198, %v3197
      %v3206 = vpack.c.bf16 %v3200, %v3199
      %v3207 = vpack.c.bf16 %v3202, %v3201
      %v3208 = vpack.c.bf16 %v3204, %v3203
      %s3209 = scalar_lea.vmem %s11, 4
      %v3210 = vld [vmem:[%s3209] sm:$0xf]
      %v3212 = vsel %vm1211, %v3205, 0
      %v3215 = vsel %vm1211, %v3206, 0
      %v3218 = vsel %vm1211, %v3207, 0
      %v3221 = vsel %vm1211, %v3208, 0
      %v3224 = vsel %vm1224, %v3210, 0
      %3226 = vmatprep.subr.bf16.mxu0 0
      %3227 = vmatpush1.bf16.msra.mxu0 0
      %3228 = vmatprep.subr.bf16.mxu0 0
      %3229 = vmatpush1.bf16.msra.mxu0 0
      %3230 = vmatprep.subr.bf16.mxu0 0
      %3231 = vmatpush1.bf16.msra.mxu0 0
      %3232 = vmatprep.subr.bf16.mxu0 0
      %3233 = vmatpush1.bf16.msra.mxu0 0
      %3234 = vmatprep.subr.bf16.mxu0 0
      %3235 = vmatpush1.bf16.msra.mxu0 0
      %3236 = vmatprep.subr.bf16.mxu0 0
      %3237 = vmatpush1.bf16.msra.mxu0 0
      %3238 = vmatprep.subr.bf16.mxu0 0
      %3239 = vmatpush1.bf16.msra.mxu0 0
      %3240 = vmatprep.subr.bf16.mxu0 0
      %3241 = vmatpush1.bf16.msra.mxu0 %v3224
      %3242 = vmatprep.subr.bf16.mxu0 0
      %3243 = vmatpush2.bf16.msra.mxu0 0
      %3244 = vmatprep.subr.bf16.mxu0 0
      %3245 = vmatpush2.bf16.msra.mxu0 0
      %3246 = vmatprep.subr.bf16.mxu0 0
      %3247 = vmatpush2.bf16.msra.mxu0 0
      %3248 = vmatprep.subr.bf16.mxu0 0
      %3249 = vmatpush2.bf16.msra.mxu0 0
      %3250 = vmatprep.subr.bf16.mxu0 0
      %3251 = vmatpush2.bf16.msra.mxu0 0
      %3252 = vmatprep.subr.bf16.mxu0 0
      %3253 = vmatpush2.bf16.msra.mxu0 0
      %3254 = vmatprep.subr.bf16.mxu0 0
      %3255 = vmatpush2.bf16.msra.mxu0 0
      %3256 = vmatprep.subr.bf16.mxu0 0
      %3257 = vmatpush2.bf16.msra.mxu0 0
      %3258 = vmatprep.mubr.bf16.mxu0 0
      %3259 = vmatmul.mubr.bf16.gmra.mxu0 %v3212
      %v3260 = vpop.f32.mrf.mxu0
      %v3261 = vadd.f32 0.0, %v3260
      %v3262 = vpop.f32.mrf.mxu0
      %v3263 = vpop.f32.mrf.mxu0
      %v3264 = vadd.f32 0.0, %v3263
      %v3265 = vpop.f32.mrf.mxu0
      %3266 = vmatprep.mubr.bf16.mxu0 0
      %3267 = vmatmul.mubr.bf16.gmra.mxu0 %v3215
      %v3268 = vpop.f32.mrf.mxu0
      %v3269 = vadd.f32 0.0, %v3268
      %v3270 = vpop.f32.mrf.mxu0
      %v3271 = vpop.f32.mrf.mxu0
      %v3272 = vadd.f32 0.0, %v3271
      %v3273 = vpop.f32.mrf.mxu0
      %3274 = vmatprep.mubr.bf16.mxu0 0
      %3275 = vmatmul.mubr.bf16.gmra.mxu0 %v3218
      %v3276 = vpop.f32.mrf.mxu0
      %v3277 = vadd.f32 0.0, %v3276
      %v3278 = vpop.f32.mrf.mxu0
      %v3279 = vpop.f32.mrf.mxu0
      %v3280 = vadd.f32 0.0, %v3279
      %v3281 = vpop.f32.mrf.mxu0
      %3282 = vmatprep.mubr.bf16.mxu0 0
      %3283 = vmatmul.mubr.bf16.gmra.mxu0 %v3221
      %v3284 = vpop.f32.mrf.mxu0
      %v3285 = vadd.f32 0.0, %v3284
      %v3286 = vpop.f32.mrf.mxu0
      %v3287 = vpop.f32.mrf.mxu0
      %v3288 = vadd.f32 0.0, %v3287
      %v3289 = vpop.f32.mrf.mxu0
      %3290 = vdwg.mxu0
      %v3292 = vsel %vm1211, %v3188, 0
      %v3295 = vsel %vm1211, %v3189, 0
      %v3298 = vsel %vm1211, %v3190, 0
      %v3301 = vsel %vm1211, %v3191, 0
      %v3304 = vsel %vm1224, %v3192, 0
      %3306 = vmatprep.subr.bf16.mxu0 0
      %3307 = vmatpush1.bf16.msra.mxu0 0
      %3308 = vmatprep.subr.bf16.mxu0 0
      %3309 = vmatpush1.bf16.msra.mxu0 0
      %3310 = vmatprep.subr.bf16.mxu0 0
      %3311 = vmatpush1.bf16.msra.mxu0 0
      %3312 = vmatprep.subr.bf16.mxu0 0
      %3313 = vmatpush1.bf16.msra.mxu0 0
      %3314 = vmatprep.subr.bf16.mxu0 0
      %3315 = vmatpush1.bf16.msra.mxu0 0
      %3316 = vmatprep.subr.bf16.mxu0 0
      %3317 = vmatpush1.bf16.msra.mxu0 0
      %3318 = vmatprep.subr.bf16.mxu0 0
      %3319 = vmatpush1.bf16.msra.mxu0 0
      %3320 = vmatprep.subr.bf16.mxu0 0
      %3321 = vmatpush1.bf16.msra.mxu0 %v3304
      %3322 = vmatprep.subr.bf16.mxu0 0
      %3323 = vmatpush2.bf16.msra.mxu0 0
      %3324 = vmatprep.subr.bf16.mxu0 0
      %3325 = vmatpush2.bf16.msra.mxu0 0
      %3326 = vmatprep.subr.bf16.mxu0 0
      %3327 = vmatpush2.bf16.msra.mxu0 0
      %3328 = vmatprep.subr.bf16.mxu0 0
      %3329 = vmatpush2.bf16.msra.mxu0 0
      %3330 = vmatprep.subr.bf16.mxu0 0
      %3331 = vmatpush2.bf16.msra.mxu0 0
      %3332 = vmatprep.subr.bf16.mxu0 0
      %3333 = vmatpush2.bf16.msra.mxu0 0
      %3334 = vmatprep.subr.bf16.mxu0 0
      %3335 = vmatpush2.bf16.msra.mxu0 0
      %3336 = vmatprep.subr.bf16.mxu0 0
      %3337 = vmatpush2.bf16.msra.mxu0 0
      %3338 = vmatprep.mubr.bf16.mxu0 0
      %3339 = vmatmul.mubr.bf16.gmra.mxu0 %v3292
      %v3340 = vpop.f32.mrf.mxu0
      %v3341 = vadd.f32 %v3261, %v3340
      %v3342 = vpop.f32.mrf.mxu0
      %v3343 = vpop.f32.mrf.mxu0
      %v3344 = vadd.f32 %v3264, %v3343
      %v3345 = vpop.f32.mrf.mxu0
      %3346 = vmatprep.mubr.bf16.mxu0 0
      %3347 = vmatmul.mubr.bf16.gmra.mxu0 %v3295
      %v3348 = vpop.f32.mrf.mxu0
      %v3349 = vadd.f32 %v3269, %v3348
      %v3350 = vpop.f32.mrf.mxu0
      %v3351 = vpop.f32.mrf.mxu0
      %v3352 = vadd.f32 %v3272, %v3351
      %v3353 = vpop.f32.mrf.mxu0
      %3354 = vmatprep.mubr.bf16.mxu0 0
      %3355 = vmatmul.mubr.bf16.gmra.mxu0 %v3298
      %v3356 = vpop.f32.mrf.mxu0
      %v3357 = vadd.f32 %v3277, %v3356
      %v3358 = vpop.f32.mrf.mxu0
      %v3359 = vpop.f32.mrf.mxu0
      %v3360 = vadd.f32 %v3280, %v3359
      %v3361 = vpop.f32.mrf.mxu0
      %3362 = vmatprep.mubr.bf16.mxu0 0
      %3363 = vmatmul.mubr.bf16.gmra.mxu0 %v3301
      %v3364 = vpop.f32.mrf.mxu0
      %v3365 = vadd.f32 %v3285, %v3364
      %v3366 = vpop.f32.mrf.mxu0
      %v3367 = vpop.f32.mrf.mxu0
      %v3368 = vadd.f32 %v3288, %v3367
      %v3369 = vpop.f32.mrf.mxu0
      %3370 = vdwg.mxu0
      %v3371 = vld [vmem:[%s12] sm:$0x1]
      %v3373 = vlaneseq
      %v3374 = vshrl.u32 %v3373, 7
      %v3375 = vsub.s32 0, %v3374
      %v3376 = vrot.slane %v3371, %v3375
      %v3378 = vmul.f32 %v3341, %v3376
      %v3379 = vmul.f32 %v3344, %v3376
      %v3380 = vmul.f32 %v3349, %v3376
      %v3381 = vmul.f32 %v3352, %v3376
      %v3382 = vmul.f32 %v3357, %v3376
      %v3383 = vmul.f32 %v3360, %v3376
      %v3384 = vmul.f32 %v3365, %v3376
      %v3385 = vmul.f32 %v3368, %v3376
      %v3386 = vld [vmem:[%s13] sm:$0x1]
      %v3388 = vlaneseq
      %v3389 = vshrl.u32 %v3388, 7
      %v3390 = vsub.s32 0, %v3389
      %v3391 = vrot.slane %v3386, %v3390
      %v3393 = vadd.f32 %v3378, %v3391
      %v3394 = vadd.f32 %v3379, %v3391
      %v3395 = vadd.f32 %v3380, %v3391
      %v3396 = vadd.f32 %v3381, %v3391
      %v3397 = vadd.f32 %v3382, %v3391
      %v3398 = vadd.f32 %v3383, %v3391
      %v3399 = vadd.f32 %v3384, %v3391
      %v3400 = vadd.f32 %v3385, %v3391
      %v3401 = vmax.f32 %v3393, 0.0
      %v3402 = vmax.f32 %v3394, 0.0
      %v3403 = vmax.f32 %v3395, 0.0
      %v3404 = vmax.f32 %v3396, 0.0
      %v3405 = vmax.f32 %v3397, 0.0
      %v3406 = vmax.f32 %v3398, 0.0
      %v3407 = vmax.f32 %v3399, 0.0
      %v3408 = vmax.f32 %v3400, 0.0
      %v3409 = vld [vmem:[%s14] sm:$0xf]
      %v3410 = vld [vmem:[%s14 + $0x4] sm:$0xf]
      %v3413 = vunpack.c.l.b16 %v3409
      %v3414 = vunpack.c.l.b16 %v3410
      %v3415 = vpack.c.b16 %v3414, %v3413
      %3417 = vmatprep.subr.bf16.mxu0 0
      %3418 = vmatpush1.bf16.msra.mxu0 0
      %3419 = vmatprep.subr.bf16.mxu0 0
      %3420 = vmatpush1.bf16.msra.mxu0 0
      %3421 = vmatprep.subr.bf16.mxu0 0
      %3422 = vmatpush1.bf16.msra.mxu0 0
      %3423 = vmatprep.subr.bf16.mxu0 0
      %3424 = vmatpush1.bf16.msra.mxu0 0
      %3425 = vmatprep.subr.bf16.mxu0 0
      %3426 = vmatpush1.bf16.msra.mxu0 0
      %3427 = vmatprep.subr.bf16.mxu0 0
      %3428 = vmatpush1.bf16.msra.mxu0 0
      %3429 = vmatprep.subr.bf16.mxu0 0
      %3430 = vmatpush1.bf16.msra.mxu0 0
      %3431 = vmatprep.subr.bf16.mxu0 0
      %3432 = vmatpush1.bf16.msra.mxu0 %v3415
      %3433 = vmatprep.subr.bf16.mxu0 0
      %3434 = vmatpush2.bf16.msra.mxu0 0
      %3435 = vmatprep.subr.bf16.mxu0 0
      %3436 = vmatpush2.bf16.msra.mxu0 0
      %3437 = vmatprep.subr.bf16.mxu0 0
      %3438 = vmatpush2.bf16.msra.mxu0 0
      %3439 = vmatprep.subr.bf16.mxu0 0
      %3440 = vmatpush2.bf16.msra.mxu0 0
      %3441 = vmatprep.subr.bf16.mxu0 0
      %3442 = vmatpush2.bf16.msra.mxu0 0
      %3443 = vmatprep.subr.bf16.mxu0 0
      %3444 = vmatpush2.bf16.msra.mxu0 0
      %3445 = vmatprep.subr.bf16.mxu0 0
      %3446 = vmatpush2.bf16.msra.mxu0 0
      %3447 = vmatprep.subr.bf16.mxu0 0
      %3448 = vmatpush2.bf16.msra.mxu0 0
      %3449 = vmatprep.mubr.bf16.mxu0 0
      %3450 = vmatmul.mubr.bf16.gmra.mxu0 %v672
      %v3451 = vpop.f32.mrf.mxu0
      %v3452 = vadd.f32 0.0, %v3451
      %v3453 = vpop.f32.mrf.mxu0
      %v3454 = vpop.f32.mrf.mxu0
      %v3455 = vadd.f32 0.0, %v3454
      %v3456 = vpop.f32.mrf.mxu0
      %3457 = vmatprep.mubr.bf16.mxu0 0
      %3458 = vmatmul.mubr.bf16.gmra.mxu0 %v675
      %v3459 = vpop.f32.mrf.mxu0
      %v3460 = vadd.f32 0.0, %v3459
      %v3461 = vpop.f32.mrf.mxu0
      %v3462 = vpop.f32.mrf.mxu0
      %v3463 = vadd.f32 0.0, %v3462
      %v3464 = vpop.f32.mrf.mxu0
      %3465 = vmatprep.mubr.bf16.mxu0 0
      %3466 = vmatmul.mubr.bf16.gmra.mxu0 %v678
      %v3467 = vpop.f32.mrf.mxu0
      %v3468 = vadd.f32 0.0, %v3467
      %v3469 = vpop.f32.mrf.mxu0
      %v3470 = vpop.f32.mrf.mxu0
      %v3471 = vadd.f32 0.0, %v3470
      %v3472 = vpop.f32.mrf.mxu0
      %3473 = vmatprep.mubr.bf16.mxu0 0
      %3474 = vmatmul.mubr.bf16.gmra.mxu0 %v681
      %v3475 = vpop.f32.mrf.mxu0
      %v3476 = vadd.f32 0.0, %v3475
      %v3477 = vpop.f32.mrf.mxu0
      %v3478 = vpop.f32.mrf.mxu0
      %v3479 = vadd.f32 0.0, %v3478
      %v3480 = vpop.f32.mrf.mxu0
      %3481 = vdwg.mxu0
      %v3482 = vld [vmem:[%s15] sm:$0x1]
      %v3484 = vlaneseq
      %v3485 = vshrl.u32 %v3484, 7
      %v3486 = vsub.s32 0, %v3485
      %v3487 = vrot.slane %v3482, %v3486
      %v3489 = vmul.f32 %v3452, %v3487
      %v3490 = vmul.f32 %v3455, %v3487
      %v3491 = vmul.f32 %v3460, %v3487
      %v3492 = vmul.f32 %v3463, %v3487
      %v3493 = vmul.f32 %v3468, %v3487
      %v3494 = vmul.f32 %v3471, %v3487
      %v3495 = vmul.f32 %v3476, %v3487
      %v3496 = vmul.f32 %v3479, %v3487
      %v3497 = vld [vmem:[%s16] sm:$0x1]
      %v3499 = vlaneseq
      %v3500 = vshrl.u32 %v3499, 7
      %v3501 = vsub.s32 0, %v3500
      %v3502 = vrot.slane %v3497, %v3501
      %v3504 = vadd.f32 %v3489, %v3502
      %v3505 = vadd.f32 %v3490, %v3502
      %v3506 = vadd.f32 %v3491, %v3502
      %v3507 = vadd.f32 %v3492, %v3502
      %v3508 = vadd.f32 %v3493, %v3502
      %v3509 = vadd.f32 %v3494, %v3502
      %v3510 = vadd.f32 %v3495, %v3502
      %v3511 = vadd.f32 %v3496, %v3502
      %v3512 = vadd.f32 %v3401, %v3504
      %v3513 = vadd.f32 %v3402, %v3505
      %v3514 = vadd.f32 %v3403, %v3506
      %v3515 = vadd.f32 %v3404, %v3507
      %v3516 = vadd.f32 %v3405, %v3508
      %v3517 = vadd.f32 %v3406, %v3509
      %v3518 = vadd.f32 %v3407, %v3510
      %v3519 = vadd.f32 %v3408, %v3511
      %v3520 = vmax.f32 %v3512, 0.0
      %v3521 = vmax.f32 %v3513, 0.0
      %v3522 = vmax.f32 %v3514, 0.0
      %v3523 = vmax.f32 %v3515, 0.0
      %v3524 = vmax.f32 %v3516, 0.0
      %v3525 = vmax.f32 %v3517, 0.0
      %v3526 = vmax.f32 %v3518, 0.0
      %v3527 = vmax.f32 %v3519, 0.0
      %vm3528 = vcmask 261120
      %3529 = vst.msk [vmem:[%s548] sm:$0xff] %vm3528, %v3520
      %3530 = vst.msk [vmem:[%s548 + $0x8] sm:$0xff] %vm3528, %v3521
      %3531 = vst.msk [vmem:[%s548 + $0x10] sm:$0xff] %vm3528, %v3522
      %3532 = vst.msk [vmem:[%s548 + $0x18] sm:$0xff] %vm3528, %v3523
      %3533 = vst.msk [vmem:[%s548 + $0x20] sm:$0xff] %vm3528, %v3524
      %3534 = vst.msk [vmem:[%s548 + $0x28] sm:$0xff] %vm3528, %v3525
      %3535 = vst.msk [vmem:[%s548 + $0x30] sm:$0xff] %vm3528, %v3526
      %3536 = vst.msk [vmem:[%s548 + $0x38] sm:$0xff] %vm3528, %v3527
      %p3537 = scmp.lt.s32.totalorder %s28, 1
      %s3538 = scalar_select %p3537, %s28, 1
      %s3539 = smul.addr %s3538, 8
      %s3540 = smul.addr %s3539, 8
      %s3541 = scalar_lea.vmem %s17, %s3540
      // Predicated region
      $region89: #{tpu_custom_call.1} parent=87 // pred_check
        %p3542 = pneg %p408
      $region90: #{tpu_custom_call.1} parent=87 // pred_check_branch
        %3544 = sbr.rel (%p3542) target = $region92
      $region91: #{tpu_custom_call.1} parent=87 // pred_region
        _
      $region92: #{tpu_custom_call.1} parent=87 // pred_fallthru
        _
    $region88: #{tpu_custom_call.1} parent=5 // pred_fallthru
      _
    %p3545 = scmp.le.s32.totalorder 2, %s23
    // Predicated region
    $region93: #{tpu_custom_call.1} parent=5 // pred_check
      %p3546 = pneg %p3545
    $region94: #{tpu_custom_call.1} parent=5 // pred_check_branch
      %3548 = sbr.rel (%p3546) target = $region96
    $region95: #{tpu_custom_call.1} parent=5 // pred_region
      %s3549 = ssub.s32 %s23, 2
      // Predicated region
      $region97: #{tpu_custom_call.1} parent=95 // pred_check
        %p3550 = pneg %p414
      $region98: #{tpu_custom_call.1} parent=95 // pred_check_branch
        %3552 = sbr.rel (%p3550) target = $region100
      $region99: #{tpu_custom_call.1} parent=95 // pred_region
        %p3553 = scmp.lt.s32.totalorder %s29, 1
        %s3554 = scalar_select %p3553, %s29, 1
        %s3555 = smul.addr %s3554, 8
        %s3556 = smul.addr %s3555, 8
        %s3557 = scalar_lea.vmem %s17, %s3556
      $region100: #{tpu_custom_call.1} parent=95 // pred_fallthru
        _
    $region96: #{tpu_custom_call.1} parent=5 // pred_fallthru
      _
  $region6: #{tpu_custom_call.1} parent=0 // loop_footer
    %s27 = sadd.s32 1, %s23
  $region7: #{tpu_custom_call.1} parent=0 // loop_footer_branch
    %22 = sbr.rel target = $region3
  $region8: #{tpu_custom_call.1} parent=0 // loop_exit
    _

</llo_original>
